<compile_context>
chip_gen: v5e
topology: v5e:2x2
jax: 0.10.0
libtpu: 0.0.40
codegen_flags: <defaults>
</compile_context>

<pallas_src>
import numpy as np
import jax
import jax.numpy as jnp
from jax import lax
from jax.experimental import pallas as pl
from jax.experimental.pallas import tpu as pltpu


def _round_up(x, m):
    return ((x + m - 1) // m) * m


def _make_kernel(P_real, Dd, A, E):
    f32 = jnp.float32

    def kernel(mask_ref, emb_ref, enc_ref,
               w_init_ref, b_init_ref,          # (E, 2Dd), (1, 2Dd)   [init_h | init_c]
               wea_ref, bea_ref, wfa_ref,       # (E, A), (1, A), (1, A)  (full_att bias dropped: softmax-invariant)
               w_hf_ref, b_hf_ref,              # (Dd, A+E+4Dd), (1, A+E+4Dd)  [dec_att | f_beta | w_hh] (+ b_ih+b_hh)
               w_ie_ref, w_ia_ref,              # (De, 4Dd), (E, 4Dd)   split w_ih
               wfc_ref, bfc_ref,                # (Dd, Vp), (1, Vp)
               pred_ref, alpha_ref,             # out blocks (1, Bblk, Vp), (1, Bblk, Pp)
               h_ref, c_ref, att1_ref):         # scratch
        t = pl.program_id(1)
        Bblk, Pp, _E = enc_ref.shape
        cd = w_hf_ref.dtype                     # MXU operand dtype (f32 or bf16)

        # ---- once per batch block: h/c init + time-invariant encoder projection ----
        @pl.when(t == 0)
        def _init():
            enc0 = enc_ref[...]
            mean_enc = jnp.sum(enc0.astype(f32), axis=1) * (1.0 / P_real)     # (Bblk, E)
            hc = (jnp.dot(mean_enc.astype(cd), w_init_ref[...],
                          preferred_element_type=f32) + b_init_ref[...])      # (Bblk, 2Dd)
            h_ref[...] = hc[:, :Dd]
            c_ref[...] = hc[:, Dd:]
            a1 = (jnp.dot(enc0.reshape(Bblk * Pp, _E), wea_ref[...],
                          preferred_element_type=f32) + bea_ref[...])
            att1_ref[...] = a1.reshape(Bblk, Pp, A).astype(att1_ref.dtype)

        h = h_ref[...]                           # (Bblk, Dd) f32
        c = c_ref[...]
        m = mask_ref[0]                          # (Bblk, 1) 1.0 if row active this step
        enc = enc_ref[...]                       # (Bblk, Pp, E)
        att1 = att1_ref[...]                     # (Bblk, Pp, A)

        # ---- single fused projection of h: [decoder_att | f_beta | w_hh] ----
        hz = (jnp.dot(h.astype(cd), w_hf_ref[...],
                      preferred_element_type=f32) + b_hf_ref[...])            # (Bblk, A+E+4Dd)
        att2 = hz[:, :A]
        gate_pre = hz[:, A:A + E]
        hgates = hz[:, A + E:]

        # ---- attention: scores -> softmax over (real) pixels ----
        e = jnp.maximum(att1.astype(f32) + att2[:, None, :], 0.0)             # (Bblk, Pp, A)
        scores = jnp.sum(e * wfa_ref[...][None, :, :], axis=-1)               # (Bblk, Pp)
        if Pp != P_real:                                                      # mask padded pixels
            col = lax.broadcasted_iota(jnp.int32, (Bblk, Pp), 1)
            scores = jnp.where(col < P_real, scores, -1e30)
        s = scores - jnp.max(scores, axis=1, keepdims=True)
        ps = jnp.exp(s)
        alpha = ps * pl.reciprocal(jnp.sum(ps, axis=1, keepdims=True), approx=True)
        awe = jnp.sum(enc.astype(f32) * alpha[:, :, None], axis=1)            # (Bblk, E)

        # ---- gate ----
        gate = jax.nn.sigmoid(gate_pre)
        awe = gate * awe

        # ---- LSTMCell (concat removed: split input weight) ----
        emb_t = emb_ref[0]                                                    # (Bblk, De)
        gates = (jnp.dot(emb_t.astype(cd), w_ie_ref[...], preferred_element_type=f32)
                 + jnp.dot(awe.astype(cd), w_ia_ref[...], preferred_element_type=f32)
                 + hgates)                                                    # (Bblk, 4Dd)
        i_g = jax.nn.sigmoid(gates[:, 0 * Dd:1 * Dd])
        f_g = jax.nn.sigmoid(gates[:, 1 * Dd:2 * Dd])
        g_g = jnp.tanh(gates[:, 2 * Dd:3 * Dd])
        o_g = jax.nn.sigmoid(gates[:, 3 * Dd:4 * Dd])
        c_new = f_g * c + i_g * g_g
        h_new = o_g * jnp.tanh(c_new)

        # ---- output projection (dropout = identity, eval mode) ----
        preds = (jnp.dot(h_new.astype(cd), wfc_ref[...],
                         preferred_element_type=f32) + bfc_ref[...])          # (Bblk, Vp)

        # ---- masked state update & lane-dense per-step output stores ----
        h_ref[...] = m * h_new + (1.0 - m) * h
        c_ref[...] = m * c_new + (1.0 - m) * c
        pred_ref[0] = m * preds
        alpha_ref[0] = m * alpha

    return kernel


def decoder_forward(params, encoder_out, encoded_captions, caption_lengths,
                    *, compute_dtype=jnp.float32, batch_block=None,
                    vmem_limit_bytes=64 * 1024 * 1024):
    """Mirrors DecoderWithTripleAttention.forward(..., language_type='EN')."""
    f32 = jnp.float32
    B = encoder_out.shape[0]
    E = encoder_out.shape[-1]
    enc = jnp.asarray(encoder_out).reshape(B, -1, E)            # (B, P, E)
    P = enc.shape[1]

    cap_len = np.asarray(caption_lengths).reshape(-1)
    sort_ind = np.argsort(-cap_len, kind="stable")              # descending sort
    cap_len_s = cap_len[sort_ind]
    enc_s = enc[sort_ind]
    caps_s = jnp.asarray(encoded_captions)[sort_ind]
    decode_lengths = (cap_len_s - 1).tolist()
    Tdec = int(max(decode_lengths))

    De = params["embedding"].shape[1]
    Dd = params["w_init_h"].shape[1]
    A = params["w_enc_att"].shape[1]
    V = params["w_fc"].shape[1]

    Bp = _round_up(B, 8)                 # sublane tile
    Pp = _round_up(P, 128)               # lane-dense alpha stores
    Vp = _round_up(V, 128)               # lane-dense prediction stores
    if batch_block is None:
        batch_block = Bp                 # set smaller (multiple of 8) to split batch across cores
    assert Bp % batch_block == 0 and batch_block % 8 == 0
    nb = Bp // batch_block

    # ---------- host-side operand prep (glue: gather / sort / pad / fuse) ----------
    emb = params["embedding"][caps_s][:, :Tdec, :]              # (B, Tdec, De) embedding gather
    emb = jnp.transpose(emb, (1, 0, 2))                         # (Tdec, B, De)
    emb = jnp.pad(emb, ((0, 0), (0, Bp - B), (0, 0))).astype(compute_dtype)

    mask_np = (np.arange(Tdec)[:, None]
               < np.asarray(decode_lengths)[None, :]).astype(np.float32)   # (Tdec, B)
    mask_np = np.pad(mask_np, ((0, 0), (0, Bp - B)))[:, :, None]           # (Tdec, Bp, 1)
    mask = jnp.asarray(mask_np)

    enc_p = jnp.pad(enc_s, ((0, Bp - B), (0, Pp - P), (0, 0))).astype(compute_dtype)

    w_init = jnp.concatenate([params["w_init_h"], params["w_init_c"]], 1).astype(compute_dtype)
    b_init = jnp.concatenate([params["b_init_h"], params["b_init_c"]], 1).astype(f32)
    wea = params["w_enc_att"].astype(compute_dtype)
    bea = params["b_enc_att"].astype(f32)
    wfa = params["w_full"].T.astype(f32)                        # (1, A); b_full dropped (softmax-invariant)
    w_hf = jnp.concatenate([params["w_dec_att"], params["w_fbeta"], params["w_hh"]],
                           1).astype(compute_dtype)
    b_hf = jnp.concatenate([params["b_dec_att"], params["b_fbeta"],
                            params["b_ih"] + params["b_hh"]], 1).astype(f32)
    w_ie = params["w_ih"][:De].astype(compute_dtype)
    w_ia = params["w_ih"][De:].astype(compute_dtype)
    wfc = jnp.pad(params["w_fc"], ((0, 0), (0, Vp - V))).astype(compute_dtype)
    bfc = jnp.pad(params["b_fc"], ((0, 0), (0, Vp - V))).astype(f32)

    kernel = _make_kernel(P, Dd, A, E)

    step_map = lambda b, t: (t, b, 0)           # per-timestep blocks
    const2 = lambda b, t: (0, 0)                # resident 2-D weights
    resident = lambda arr: pl.BlockSpec(arr.shape, const2)

    in_specs = [
        pl.BlockSpec((1, batch_block, 1), step_map),                    # mask
        pl.BlockSpec((1, batch_block, De), step_map),                   # embeddings
        pl.BlockSpec((batch_block, Pp, E), lambda b, t: (b, 0, 0)),     # encoder_out (resident per batch block)
        resident(w_init), resident(b_init),
        resident(wea), resident(bea), resident(wfa),
        resident(w_hf), resident(b_hf),
        resident(w_ie), resident(w_ia),
        resident(wfc), resident(bfc),
    ]
    out_specs = (
        pl.BlockSpec((1, batch_block, Vp), step_map),                   # predictions (streamed per step)
        pl.BlockSpec((1, batch_block, Pp), step_map),                   # alphas (streamed per step)
    )

    preds_p, alphas_p = pl.pallas_call(
        kernel,
        grid=(nb, Tdec),
        out_shape=(jax.ShapeDtypeStruct((Tdec, Bp, Vp), f32),
                   jax.ShapeDtypeStruct((Tdec, Bp, Pp), f32)),
        in_specs=in_specs,
        out_specs=out_specs,
        scratch_shapes=[pltpu.VMEM((batch_block, Dd), f32),             # h
                        pltpu.VMEM((batch_block, Dd), f32),             # c
                        pltpu.VMEM((batch_block, Pp, A), compute_dtype)],  # hoisted att1
        compiler_params=pltpu.CompilerParams(
            dimension_semantics=("parallel", "arbitrary"),
            vmem_limit_bytes=vmem_limit_bytes),
    )(mask, emb, enc_p, w_init, b_init, wea, bea, wfa,
      w_hf, b_hf, w_ie, w_ia, wfc, bfc)

    preds = jnp.transpose(preds_p, (1, 0, 2))[:B, :, :V]
    alphas = jnp.transpose(alphas_p, (1, 0, 2))[:B, :, :P]
    return preds, caps_s, decode_lengths, alphas, sort_ind


def init_params(key, *, vocab, embed_dim, encoder_dim, decoder_dim, attention_dim):
    ks = jax.random.split(key, 20)
    u = lambda k, shape, s=0.1: jax.random.uniform(k, shape, jnp.float32, -s, s)
    return dict(
        embedding=u(ks[0], (vocab, embed_dim)),
        w_init_h=u(ks[1], (encoder_dim, decoder_dim)), b_init_h=u(ks[2], (1, decoder_dim)),
        w_init_c=u(ks[3], (encoder_dim, decoder_dim)), b_init_c=u(ks[4], (1, decoder_dim)),
        w_enc_att=u(ks[5], (encoder_dim, attention_dim)), b_enc_att=u(ks[6], (1, attention_dim)),
        w_dec_att=u(ks[7], (decoder_dim, attention_dim)), b_dec_att=u(ks[8], (1, attention_dim)),
        w_full=u(ks[9], (attention_dim, 1)), b_full=u(ks[10], (1, 1)),
        w_fbeta=u(ks[11], (decoder_dim, encoder_dim)), b_fbeta=u(ks[12], (1, encoder_dim)),
        w_ih=u(ks[13], (embed_dim + encoder_dim, 4 * decoder_dim)),
        w_hh=u(ks[14], (decoder_dim, 4 * decoder_dim)),
        b_ih=u(ks[15], (1, 4 * decoder_dim)), b_hh=u(ks[16], (1, 4 * decoder_dim)),
        w_fc=u(ks[17], (decoder_dim, vocab)),
        b_fc=jnp.zeros((1, vocab), jnp.float32),            # fc.bias.data.fill_(0)
    )


def ref_forward(params, enc_s, emb, decode_lengths):
    """Pure-JAX/numpy reference that exactly mimics the PyTorch batch-shrinking loop."""
    B, P, E = enc_s.shape
    Tdec = int(max(decode_lengths))
    Dd = params["w_init_h"].shape[1]
    V = params["w_fc"].shape[1]

    mean_enc = jnp.mean(enc_s, axis=1)
    h = mean_enc @ params["w_init_h"] + params["b_init_h"]
    c = mean_enc @ params["w_init_c"] + params["b_init_c"]
    preds_out = np.zeros((B, Tdec, V), np.float32)
    alphas_out = np.zeros((B, Tdec, P), np.float32)

    for t in range(Tdec):
        bt = sum(l > t for l in decode_lengths)
        enc_t = enc_s[:bt]
        h_t, c_t = h[:bt], c[:bt]
        att1 = enc_t @ params["w_enc_att"] + params["b_enc_att"]
        att2 = h_t @ params["w_dec_att"] + params["b_dec_att"]
        e = jax.nn.relu(att1 + att2[:, None, :])
        scores = (e @ params["w_full"])[..., 0] + params["b_full"][0, 0]
        alpha = jax.nn.softmax(scores, axis=1)
        awe = jnp.sum(enc_t * alpha[:, :, None], axis=1)
        gate = jax.nn.sigmoid(h_t @ params["w_fbeta"] + params["b_fbeta"])
        awe = gate * awe
        x = jnp.concatenate([emb[:bt, t, :], awe], axis=1)
        gates = (x @ params["w_ih"] + params["b_ih"]
                 + h_t @ params["w_hh"] + params["b_hh"])
        i_g = jax.nn.sigmoid(gates[:, :Dd])
        f_g = jax.nn.sigmoid(gates[:, Dd:2 * Dd])
        g_g = jnp.tanh(gates[:, 2 * Dd:3 * Dd])
        o_g = jax.nn.sigmoid(gates[:, 3 * Dd:])
        c = f_g * c_t + i_g * g_g
        h = o_g * jnp.tanh(c)
        p = h @ params["w_fc"] + params["b_fc"]
        preds_out[:bt, t, :] = np.asarray(p)
        alphas_out[:bt, t, :] = np.asarray(alpha)
    return preds_out, alphas_out


if __name__ == "__main__":
    # Small, forward-consistent shapes.
    B = 4                     # batch
    HW = 4                    # enc_image_size -> num_pixels = 16
    E = 32                    # encoder_dim
    Dd = 32                   # decoder_dim
    A = 32                    # attention_dim
    De = 32                   # embed_dim
    V1 = 40                   # len(vocabs['EN'])
    T = 8                     # max caption length

    key = jax.random.PRNGKey(0)
    kp, ke, kc = jax.random.split(key, 3)
    params = init_params(kp, vocab=V1, embed_dim=De, encoder_dim=E,
                         decoder_dim=Dd, attention_dim=A)

    encoder_out = jax.random.normal(ke, (B, HW, HW, E), jnp.float32)
    encoded_captions = jax.random.randint(kc, (B, T), 1, V1, dtype=jnp.int32)
    caption_lengths = np.array([[8], [5], [7], [6]], dtype=np.int32)   # (B, 1)

    # --- f32 run, validated against the pure-JAX reference of the PyTorch loop ---
    preds, caps_s, decode_lengths, alphas, sort_ind = decoder_forward(
        params, encoder_out, encoded_captions, caption_lengths)
    jax.block_until_ready((preds, alphas))

    enc_flat = encoder_out.reshape(B, -1, E)[sort_ind]
    emb_s = params["embedding"][encoded_captions[sort_ind]]
    preds_ref, alphas_ref = ref_forward(params, enc_flat, emb_s, decode_lengths)

    assert np.allclose(np.asarray(preds), preds_ref, rtol=1e-2, atol=1e-2), \
        "predictions mismatch"
    assert np.allclose(np.asarray(alphas), alphas_ref, rtol=1e-2, atol=1e-2), \
        "alphas mismatch"

    # --- bf16-residency path (MXU operands bf16, accumulation/state f32): smoke run ---
    preds_bf, _, _, alphas_bf, _ = decoder_forward(
        params, encoder_out, encoded_captions, caption_lengths,
        compute_dtype=jnp.bfloat16)
    jax.block_until_ready((preds_bf, alphas_bf))
    assert np.all(np.isfinite(np.asarray(preds_bf)))
    assert np.all(np.isfinite(np.asarray(alphas_bf)))

    print("KERNEL_OK")
</pallas_src>

<mosaic_0001>
module attributes {stable_mosaic.version = 11 : i64} {
  func.func @kernel(%arg0: i32, %arg1: i32, %arg2: memref<1x8x1xf32, #tpu.memory_space<vmem>>, %arg3: memref<1x8x32xf32, #tpu.memory_space<vmem>>, %arg4: memref<8x128x32xf32, #tpu.memory_space<vmem>>, %arg5: memref<32x64xf32, #tpu.memory_space<vmem>>, %arg6: memref<1x64xf32, #tpu.memory_space<vmem>>, %arg7: memref<32x32xf32, #tpu.memory_space<vmem>>, %arg8: memref<1x32xf32, #tpu.memory_space<vmem>>, %arg9: memref<1x32xf32, #tpu.memory_space<vmem>>, %arg10: memref<32x192xf32, #tpu.memory_space<vmem>>, %arg11: memref<1x192xf32, #tpu.memory_space<vmem>>, %arg12: memref<32x128xf32, #tpu.memory_space<vmem>>, %arg13: memref<32x128xf32, #tpu.memory_space<vmem>>, %arg14: memref<32x128xf32, #tpu.memory_space<vmem>>, %arg15: memref<1x128xf32, #tpu.memory_space<vmem>>, %arg16: memref<1x8x128xf32, #tpu.memory_space<vmem>>, %arg17: memref<1x8x128xf32, #tpu.memory_space<vmem>>, %arg18: memref<8x32xf32, #tpu.memory_space<vmem>>, %arg19: memref<8x32xf32, #tpu.memory_space<vmem>>, %arg20: memref<8x128x32xf32, #tpu.memory_space<vmem>>) attributes {dimension_semantics = [#tpu.dimension_semantics<parallel>, #tpu.dimension_semantics<arbitrary>], iteration_bounds = array<i64: 1, 7>, scalar_prefetch = 0 : i64, scratch_operands = 3 : i64, tpu.core_type = #tpu.core_type<tc>, window_params = [{transform_indices = @transform_0, window_bounds = array<i64: 1, 8, 1>}, {transform_indices = @transform_1, window_bounds = array<i64: 1, 8, 32>}, {transform_indices = @transform_2, window_bounds = array<i64: 8, 128, 32>}, {pipeline_mode = #tpu.pipeline_mode<synchronous>, transform_indices = @transform_3, window_bounds = array<i64: 32, 64>}, {pipeline_mode = #tpu.pipeline_mode<synchronous>, transform_indices = @transform_4, window_bounds = array<i64: 1, 64>}, {pipeline_mode = #tpu.pipeline_mode<synchronous>, transform_indices = @transform_5, window_bounds = array<i64: 32, 32>}, {pipeline_mode = #tpu.pipeline_mode<synchronous>, transform_indices = @transform_6, window_bounds = array<i64: 1, 32>}, {pipeline_mode = #tpu.pipeline_mode<synchronous>, transform_indices = @transform_7, window_bounds = array<i64: 1, 32>}, {pipeline_mode = #tpu.pipeline_mode<synchronous>, transform_indices = @transform_8, window_bounds = array<i64: 32, 192>}, {pipeline_mode = #tpu.pipeline_mode<synchronous>, transform_indices = @transform_9, window_bounds = array<i64: 1, 192>}, {pipeline_mode = #tpu.pipeline_mode<synchronous>, transform_indices = @transform_10, window_bounds = array<i64: 32, 128>}, {pipeline_mode = #tpu.pipeline_mode<synchronous>, transform_indices = @transform_11, window_bounds = array<i64: 32, 128>}, {pipeline_mode = #tpu.pipeline_mode<synchronous>, transform_indices = @transform_12, window_bounds = array<i64: 32, 128>}, {pipeline_mode = #tpu.pipeline_mode<synchronous>, transform_indices = @transform_13, window_bounds = array<i64: 1, 128>}, {transform_indices = @transform_14, window_bounds = array<i64: 1, 8, 128>}, {transform_indices = @transform_15, window_bounds = array<i64: 1, 8, 128>}]} {
    %c0_i32 = arith.constant 0 : i32
    %0 = arith.cmpi eq, %arg1, %c0_i32 : i32
    %1 = arith.extui %0 : i1 to i32
    %c0_i32_0 = arith.constant 0 : i32
    %2 = arith.cmpi ne, %1, %c0_i32_0 : i32
    scf.if %2 {
      %c0_55 = arith.constant 0 : index
      %c0_56 = arith.constant 0 : index
      %c0_57 = arith.constant 0 : index
      %116 = vector.load %arg4[%c0_55, %c0_56, %c0_57] : memref<8x128x32xf32, #tpu.memory_space<vmem>>, vector<8x128x32xf32>
      %cst_58 = arith.constant dense<0.000000e+00> : vector<8x32xf32>
      %117 = vector.multi_reduction <add>, %116, %cst_58 [1] : vector<8x128x32xf32> to vector<8x32xf32>
      %cst_59 = arith.constant 6.250000e-02 : f32
      %118 = vector.broadcast %cst_59 : f32 to vector<8x32xf32>
      %119 = arith.mulf %117, %118 : vector<8x32xf32>
      %c0_60 = arith.constant 0 : index
      %c0_61 = arith.constant 0 : index
      %120 = vector.load %arg5[%c0_60, %c0_61] : memref<32x64xf32, #tpu.memory_space<vmem>>, vector<32x64xf32>
      %cst_62 = arith.constant dense<0.000000e+00> : vector<8x64xf32>
      %121 = tpu.matmul %119, %120, %cst_62 {dimension_numbers = #tpu.dot_dimension_numbers<[1], [0], [0], [1], [0, 0, 1, 1], [], []>} : vector<8x32xf32>, vector<32x64xf32>, vector<8x64xf32> -> vector<8x64xf32>
      %c0_63 = arith.constant 0 : index
      %c0_64 = arith.constant 0 : index
      %122 = vector.load %arg6[%c0_63, %c0_64] : memref<1x64xf32, #tpu.memory_space<vmem>>, vector<1x64xf32>
      %123 = vector.broadcast %122 : vector<1x64xf32> to vector<8x64xf32>
      %124 = arith.addf %121, %123 : vector<8x64xf32>
      %125 = vector.extract_strided_slice %124 {offsets = [0, 0], sizes = [8, 32], strides = [1, 1]} : vector<8x64xf32> to vector<8x32xf32>
      %c0_65 = arith.constant 0 : index
      %c0_66 = arith.constant 0 : index
      %126 = vector.load %arg18[%c0_65, %c0_66] : memref<8x32xf32, #tpu.memory_space<vmem>>, vector<8x32xf32>
      tpu.vector_store %arg18[%c0_65, %c0_66], %125 {strides = array<i32>} : memref<8x32xf32, #tpu.memory_space<vmem>>, vector<8x32xf32>,
      %127 = vector.extract_strided_slice %124 {offsets = [0, 32], sizes = [8, 32], strides = [1, 1]} : vector<8x64xf32> to vector<8x32xf32>
      %c0_67 = arith.constant 0 : index
      %c0_68 = arith.constant 0 : index
      %128 = vector.load %arg19[%c0_67, %c0_68] : memref<8x32xf32, #tpu.memory_space<vmem>>, vector<8x32xf32>
      tpu.vector_store %arg19[%c0_67, %c0_68], %127 {strides = array<i32>} : memref<8x32xf32, #tpu.memory_space<vmem>>, vector<8x32xf32>,
      %129 = vector.shape_cast %116 : vector<8x128x32xf32> to vector<1024x32xf32>
      %c0_69 = arith.constant 0 : index
      %c0_70 = arith.constant 0 : index
      %130 = vector.load %arg7[%c0_69, %c0_70] : memref<32x32xf32, #tpu.memory_space<vmem>>, vector<32x32xf32>
      %cst_71 = arith.constant dense<0.000000e+00> : vector<1024x32xf32>
      %131 = tpu.matmul %129, %130, %cst_71 {dimension_numbers = #tpu.dot_dimension_numbers<[1], [0], [0], [1], [0, 0, 1, 1], [], []>} : vector<1024x32xf32>, vector<32x32xf32>, vector<1024x32xf32> -> vector<1024x32xf32>
      %c0_72 = arith.constant 0 : index
      %c0_73 = arith.constant 0 : index
      %132 = vector.load %arg8[%c0_72, %c0_73] : memref<1x32xf32, #tpu.memory_space<vmem>>, vector<1x32xf32>
      %133 = vector.broadcast %132 : vector<1x32xf32> to vector<1024x32xf32>
      %134 = arith.addf %131, %133 : vector<1024x32xf32>
      %135 = vector.shape_cast %134 : vector<1024x32xf32> to vector<8x128x32xf32>
      %c0_74 = arith.constant 0 : index
      %c0_75 = arith.constant 0 : index
      %c0_76 = arith.constant 0 : index
      %136 = vector.load %arg20[%c0_74, %c0_75, %c0_76] : memref<8x128x32xf32, #tpu.memory_space<vmem>>, vector<8x128x32xf32>
      tpu.vector_store %arg20[%c0_74, %c0_75, %c0_76], %135 {strides = array<i32>} : memref<8x128x32xf32, #tpu.memory_space<vmem>>, vector<8x128x32xf32>,
    } else {
    }
    %c0 = arith.constant 0 : index
    %c0_1 = arith.constant 0 : index
    %3 = vector.load %arg18[%c0, %c0_1] : memref<8x32xf32, #tpu.memory_space<vmem>>, vector<8x32xf32>
    %c0_2 = arith.constant 0 : index
    %c0_3 = arith.constant 0 : index
    %4 = vector.load %arg19[%c0_2, %c0_3] : memref<8x32xf32, #tpu.memory_space<vmem>>, vector<8x32xf32>
    %c0_4 = arith.constant 0 : index
    %c0_5 = arith.constant 0 : index
    %c0_6 = arith.constant 0 : index
    %5 = vector.load %arg2[%c0_4, %c0_5, %c0_6] : memref<1x8x1xf32, #tpu.memory_space<vmem>>, vector<1x8x1xf32>
    %6 = vector.shape_cast %5 : vector<1x8x1xf32> to vector<8x1xf32>
    %c0_7 = arith.constant 0 : index
    %c0_8 = arith.constant 0 : index
    %c0_9 = arith.constant 0 : index
    %7 = vector.load %arg4[%c0_7, %c0_8, %c0_9] : memref<8x128x32xf32, #tpu.memory_space<vmem>>, vector<8x128x32xf32>
    %c0_10 = arith.constant 0 : index
    %c0_11 = arith.constant 0 : index
    %c0_12 = arith.constant 0 : index
    %8 = vector.load %arg20[%c0_10, %c0_11, %c0_12] : memref<8x128x32xf32, #tpu.memory_space<vmem>>, vector<8x128x32xf32>
    %c0_13 = arith.constant 0 : index
    %c0_14 = arith.constant 0 : index
    %9 = vector.load %arg10[%c0_13, %c0_14] : memref<32x192xf32, #tpu.memory_space<vmem>>, vector<32x192xf32>
    %cst = arith.constant dense<0.000000e+00> : vector<8x192xf32>
    %10 = tpu.matmul %3, %9, %cst {dimension_numbers = #tpu.dot_dimension_numbers<[1], [0], [0], [1], [0, 0, 1, 1], [], []>} : vector<8x32xf32>, vector<32x192xf32>, vector<8x192xf32> -> vector<8x192xf32>
    %c0_15 = arith.constant 0 : index
    %c0_16 = arith.constant 0 : index
    %11 = vector.load %arg11[%c0_15, %c0_16] : memref<1x192xf32, #tpu.memory_space<vmem>>, vector<1x192xf32>
    %12 = vector.broadcast %11 : vector<1x192xf32> to vector<8x192xf32>
    %13 = arith.addf %10, %12 : vector<8x192xf32>
    %14 = vector.extract_strided_slice %13 {offsets = [0, 0], sizes = [8, 32], strides = [1, 1]} : vector<8x192xf32> to vector<8x32xf32>
    %15 = vector.extract_strided_slice %13 {offsets = [0, 32], sizes = [8, 32], strides = [1, 1]} : vector<8x192xf32> to vector<8x32xf32>
    %16 = vector.extract_strided_slice %13 {offsets = [0, 64], sizes = [8, 128], strides = [1, 1]} : vector<8x192xf32> to vector<8x128xf32>
    %17 = vector.shape_cast %14 : vector<8x32xf32> to vector<8x1x32xf32>
    %18 = vector.broadcast %17 : vector<8x1x32xf32> to vector<8x128x32xf32>
    %19 = arith.addf %8, %18 : vector<8x128x32xf32>
    %cst_17 = arith.constant 0.000000e+00 : f32
    %20 = vector.broadcast %cst_17 : f32 to vector<8x128x32xf32>
    %21 = arith.maximumf %19, %20 : vector<8x128x32xf32>
    %c0_18 = arith.constant 0 : index
    %c0_19 = arith.constant 0 : index
    %22 = vector.load %arg9[%c0_18, %c0_19] : memref<1x32xf32, #tpu.memory_space<vmem>>, vector<1x32xf32>
    %23 = vector.shape_cast %22 : vector<1x32xf32> to vector<1x1x32xf32>
    %24 = vector.broadcast %23 : vector<1x1x32xf32> to vector<8x128x32xf32>
    %25 = arith.mulf %21, %24 : vector<8x128x32xf32>
    %cst_20 = arith.constant dense<0.000000e+00> : vector<8x128xf32>
    %26 = vector.multi_reduction <add>, %25, %cst_20 [2] : vector<8x128x32xf32> to vector<8x128xf32>
    %27 = tpu.iota {dimensions = array<i32: 1>} : vector<8x128xi32>
    %c16_i32 = arith.constant 16 : i32
    %28 = vector.broadcast %c16_i32 : i32 to vector<8x128xi32>
    %29 = arith.cmpi slt, %27, %28 : vector<8x128xi32>
    %cst_21 = arith.constant -1.000000e+30 : f32
    %30 = vector.broadcast %cst_21 : f32 to vector<8x128xf32>
    %31 = arith.select %29, %26, %30 : vector<8x128xi1>, vector<8x128xf32>
    %cst_22 = arith.constant dense<0xFF800000> : vector<8xf32>
    %32 = vector.multi_reduction <maximumf>, %31, %cst_22 [1] : vector<8x128xf32> to vector<8xf32>
    %33 = vector.shape_cast %32 : vector<8xf32> to vector<8x1xf32>
    %34 = vector.broadcast %33 : vector<8x1xf32> to vector<8x128xf32>
    %35 = arith.subf %31, %34 : vector<8x128xf32>
    %36 = math.exp %35 : vector<8x128xf32>
    %cst_23 = arith.constant dense<0.000000e+00> : vector<8xf32>
    %37 = vector.multi_reduction <add>, %36, %cst_23 [1] : vector<8x128xf32> to vector<8xf32>
    %38 = vector.shape_cast %37 : vector<8xf32> to vector<8x1xf32>
    %39 = tpu.reciprocal %38 {approx = true} : vector<8x1xf32> -> vector<8x1xf32>
    %40 = vector.broadcast %39 : vector<8x1xf32> to vector<8x128xf32>
    %41 = arith.mulf %36, %40 : vector<8x128xf32>
    %42 = vector.shape_cast %41 : vector<8x128xf32> to vector<8x128x1xf32>
    %43 = vector.broadcast %42 : vector<8x128x1xf32> to vector<8x128x32xf32>
    %44 = arith.mulf %7, %43 : vector<8x128x32xf32>
    %cst_24 = arith.constant dense<0.000000e+00> : vector<8x32xf32>
    %45 = vector.multi_reduction <add>, %44, %cst_24 [1] : vector<8x128x32xf32> to vector<8x32xf32>
    %46 = arith.negf %15 : vector<8x32xf32>
    %47 = math.exp %46 : vector<8x32xf32>
    %cst_25 = arith.constant 1.000000e+00 : f32
    %48 = vector.broadcast %cst_25 : f32 to vector<8x32xf32>
    %49 = arith.addf %48, %47 : vector<8x32xf32>
    %50 = arith.divf %48, %49 : vector<8x32xf32>
    %51 = arith.mulf %50, %45 : vector<8x32xf32>
    %c0_26 = arith.constant 0 : index
    %c0_27 = arith.constant 0 : index
    %c0_28 = arith.constant 0 : index
    %52 = vector.load %arg3[%c0_26, %c0_27, %c0_28] : memref<1x8x32xf32, #tpu.memory_space<vmem>>, vector<1x8x32xf32>
    %53 = vector.shape_cast %52 : vector<1x8x32xf32> to vector<8x32xf32>
    %c0_29 = arith.constant 0 : index
    %c0_30 = arith.constant 0 : index
    %54 = vector.load %arg12[%c0_29, %c0_30] : memref<32x128xf32, #tpu.memory_space<vmem>>, vector<32x128xf32>
    %cst_31 = arith.constant dense<0.000000e+00> : vector<8x128xf32>
    %55 = tpu.matmul %53, %54, %cst_31 {dimension_numbers = #tpu.dot_dimension_numbers<[1], [0], [0], [1], [0, 0, 1, 1], [], []>} : vector<8x32xf32>, vector<32x128xf32>, vector<8x128xf32> -> vector<8x128xf32>
    %c0_32 = arith.constant 0 : index
    %c0_33 = arith.constant 0 : index
    %56 = vector.load %arg13[%c0_32, %c0_33] : memref<32x128xf32, #tpu.memory_space<vmem>>, vector<32x128xf32>
    %cst_34 = arith.constant dense<0.000000e+00> : vector<8x128xf32>
    %57 = tpu.matmul %51, %56, %cst_34 {dimension_numbers = #tpu.dot_dimension_numbers<[1], [0], [0], [1], [0, 0, 1, 1], [], []>} : vector<8x32xf32>, vector<32x128xf32>, vector<8x128xf32> -> vector<8x128xf32>
    %58 = arith.addf %55, %57 : vector<8x128xf32>
    %59 = arith.addf %58, %16 : vector<8x128xf32>
    %60 = vector.extract_strided_slice %59 {offsets = [0, 0], sizes = [8, 32], strides = [1, 1]} : vector<8x128xf32> to vector<8x32xf32>
    %61 = arith.negf %60 : vector<8x32xf32>
    %62 = math.exp %61 : vector<8x32xf32>
    %cst_35 = arith.constant 1.000000e+00 : f32
    %63 = vector.broadcast %cst_35 : f32 to vector<8x32xf32>
    %64 = arith.addf %63, %62 : vector<8x32xf32>
    %65 = arith.divf %63, %64 : vector<8x32xf32>
    %66 = vector.extract_strided_slice %59 {offsets = [0, 32], sizes = [8, 32], strides = [1, 1]} : vector<8x128xf32> to vector<8x32xf32>
    %67 = arith.negf %66 : vector<8x32xf32>
    %68 = math.exp %67 : vector<8x32xf32>
    %cst_36 = arith.constant 1.000000e+00 : f32
    %69 = vector.broadcast %cst_36 : f32 to vector<8x32xf32>
    %70 = arith.addf %69, %68 : vector<8x32xf32>
    %71 = arith.divf %69, %70 : vector<8x32xf32>
    %72 = vector.extract_strided_slice %59 {offsets = [0, 64], sizes = [8, 32], strides = [1, 1]} : vector<8x128xf32> to vector<8x32xf32>
    %73 = math.tanh %72 : vector<8x32xf32>
    %74 = vector.extract_strided_slice %59 {offsets = [0, 96], sizes = [8, 32], strides = [1, 1]} : vector<8x128xf32> to vector<8x32xf32>
    %75 = arith.negf %74 : vector<8x32xf32>
    %76 = math.exp %75 : vector<8x32xf32>
    %cst_37 = arith.constant 1.000000e+00 : f32
    %77 = vector.broadcast %cst_37 : f32 to vector<8x32xf32>
    %78 = arith.addf %77, %76 : vector<8x32xf32>
    %79 = arith.divf %77, %78 : vector<8x32xf32>
    %80 = arith.mulf %71, %4 : vector<8x32xf32>
    %81 = arith.mulf %65, %73 : vector<8x32xf32>
    %82 = arith.addf %80, %81 : vector<8x32xf32>
    %83 = math.tanh %82 : vector<8x32xf32>
    %84 = arith.mulf %79, %83 : vector<8x32xf32>
    %c0_38 = arith.constant 0 : index
    %c0_39 = arith.constant 0 : index
    %85 = vector.load %arg14[%c0_38, %c0_39] : memref<32x128xf32, #tpu.memory_space<vmem>>, vector<32x128xf32>
    %cst_40 = arith.constant dense<0.000000e+00> : vector<8x128xf32>
    %86 = tpu.matmul %84, %85, %cst_40 {dimension_numbers = #tpu.dot_dimension_numbers<[1], [0], [0], [1], [0, 0, 1, 1], [], []>} : vector<8x32xf32>, vector<32x128xf32>, vector<8x128xf32> -> vector<8x128xf32>
    %c0_41 = arith.constant 0 : index
    %c0_42 = arith.constant 0 : index
    %87 = vector.load %arg15[%c0_41, %c0_42] : memref<1x128xf32, #tpu.memory_space<vmem>>, vector<1x128xf32>
    %88 = vector.broadcast %87 : vector<1x128xf32> to vector<8x128xf32>
    %89 = arith.addf %86, %88 : vector<8x128xf32>
    %90 = vector.broadcast %6 : vector<8x1xf32> to vector<8x32xf32>
    %91 = arith.mulf %90, %84 : vector<8x32xf32>
    %cst_43 = arith.constant 1.000000e+00 : f32
    %92 = vector.broadcast %cst_43 : f32 to vector<8x1xf32>
    %93 = arith.subf %92, %6 : vector<8x1xf32>
    %94 = vector.broadcast %93 : vector<8x1xf32> to vector<8x32xf32>
    %95 = arith.mulf %94, %3 : vector<8x32xf32>
    %96 = arith.addf %91, %95 : vector<8x32xf32>
    %c0_44 = arith.constant 0 : index
    %c0_45 = arith.constant 0 : index
    %97 = vector.load %arg18[%c0_44, %c0_45] : memref<8x32xf32, #tpu.memory_space<vmem>>, vector<8x32xf32>
    tpu.vector_store %arg18[%c0_44, %c0_45], %96 {strides = array<i32>} : memref<8x32xf32, #tpu.memory_space<vmem>>, vector<8x32xf32>,
    %98 = vector.broadcast %6 : vector<8x1xf32> to vector<8x32xf32>
    %99 = arith.mulf %98, %82 : vector<8x32xf32>
    %cst_46 = arith.constant 1.000000e+00 : f32
    %100 = vector.broadcast %cst_46 : f32 to vector<8x1xf32>
    %101 = arith.subf %100, %6 : vector<8x1xf32>
    %102 = vector.broadcast %101 : vector<8x1xf32> to vector<8x32xf32>
    %103 = arith.mulf %102, %4 : vector<8x32xf32>
    %104 = arith.addf %99, %103 : vector<8x32xf32>
    %c0_47 = arith.constant 0 : index
    %c0_48 = arith.constant 0 : index
    %105 = vector.load %arg19[%c0_47, %c0_48] : memref<8x32xf32, #tpu.memory_space<vmem>>, vector<8x32xf32>
    tpu.vector_store %arg19[%c0_47, %c0_48], %104 {strides = array<i32>} : memref<8x32xf32, #tpu.memory_space<vmem>>, vector<8x32xf32>,
    %106 = vector.broadcast %6 : vector<8x1xf32> to vector<8x128xf32>
    %107 = arith.mulf %106, %89 : vector<8x128xf32>
    %c0_49 = arith.constant 0 : index
    %c0_50 = arith.constant 0 : index
    %c0_51 = arith.constant 0 : index
    %108 = vector.load %arg16[%c0_49, %c0_50, %c0_51] : memref<1x8x128xf32, #tpu.memory_space<vmem>>, vector<1x8x128xf32>
    %109 = vector.shape_cast %108 : vector<1x8x128xf32> to vector<8x128xf32>
    %110 = vector.shape_cast %107 : vector<8x128xf32> to vector<1x8x128xf32>
    tpu.vector_store %arg16[%c0_49, %c0_50, %c0_51], %110 {strides = array<i32>} : memref<1x8x128xf32, #tpu.memory_space<vmem>>, vector<1x8x128xf32>,
    %111 = vector.broadcast %6 : vector<8x1xf32> to vector<8x128xf32>
    %112 = arith.mulf %111, %41 : vector<8x128xf32>
    %c0_52 = arith.constant 0 : index
    %c0_53 = arith.constant 0 : index
    %c0_54 = arith.constant 0 : index
    %113 = vector.load %arg17[%c0_52, %c0_53, %c0_54] : memref<1x8x128xf32, #tpu.memory_space<vmem>>, vector<1x8x128xf32>
    %114 = vector.shape_cast %113 : vector<1x8x128xf32> to vector<8x128xf32>
    %115 = vector.shape_cast %112 : vector<8x128xf32> to vector<1x8x128xf32>
    tpu.vector_store %arg17[%c0_52, %c0_53, %c0_54], %115 {strides = array<i32>} : memref<1x8x128xf32, #tpu.memory_space<vmem>>, vector<1x8x128xf32>,
    return
  }
  func.func @transform_0(%arg0: i32, %arg1: i32) -> (i32, i32, i32) {
    %c0_i32 = arith.constant 0 : i32
    %c0_i32_0 = arith.constant 0 : i32
    return %arg1, %arg0, %c0_i32 : i32, i32, i32
  }
  func.func @transform_1(%arg0: i32, %arg1: i32) -> (i32, i32, i32) {
    %c0_i32 = arith.constant 0 : i32
    %c0_i32_0 = arith.constant 0 : i32
    return %arg1, %arg0, %c0_i32 : i32, i32, i32
  }
  func.func @transform_2(%arg0: i32, %arg1: i32) -> (i32, i32, i32) {
    %c0_i32 = arith.constant 0 : i32
    %c0_i32_0 = arith.constant 0 : i32
    %c0_i32_1 = arith.constant 0 : i32
    return %arg0, %c0_i32, %c0_i32_0 : i32, i32, i32
  }
  func.func @transform_3(%arg0: i32, %arg1: i32) -> (i32, i32) {
    %c0_i32 = arith.constant 0 : i32
    %c0_i32_0 = arith.constant 0 : i32
    %c0_i32_1 = arith.constant 0 : i32
    return %c0_i32, %c0_i32_0 : i32, i32
  }
  func.func @transform_4(%arg0: i32, %arg1: i32) -> (i32, i32) {
    %c0_i32 = arith.constant 0 : i32
    %c0_i32_0 = arith.constant 0 : i32
    %c0_i32_1 = arith.constant 0 : i32
    return %c0_i32, %c0_i32_0 : i32, i32
  }
  func.func @transform_5(%arg0: i32, %arg1: i32) -> (i32, i32) {
    %c0_i32 = arith.constant 0 : i32
    %c0_i32_0 = arith.constant 0 : i32
    %c0_i32_1 = arith.constant 0 : i32
    return %c0_i32, %c0_i32_0 : i32, i32
  }
  func.func @transform_6(%arg0: i32, %arg1: i32) -> (i32, i32) {
    %c0_i32 = arith.constant 0 : i32
    %c0_i32_0 = arith.constant 0 : i32
    %c0_i32_1 = arith.constant 0 : i32
    return %c0_i32, %c0_i32_0 : i32, i32
  }
  func.func @transform_7(%arg0: i32, %arg1: i32) -> (i32, i32) {
    %c0_i32 = arith.constant 0 : i32
    %c0_i32_0 = arith.constant 0 : i32
    %c0_i32_1 = arith.constant 0 : i32
    return %c0_i32, %c0_i32_0 : i32, i32
  }
  func.func @transform_8(%arg0: i32, %arg1: i32) -> (i32, i32) {
    %c0_i32 = arith.constant 0 : i32
    %c0_i32_0 = arith.constant 0 : i32
    %c0_i32_1 = arith.constant 0 : i32
    return %c0_i32, %c0_i32_0 : i32, i32
  }
  func.func @transform_9(%arg0: i32, %arg1: i32) -> (i32, i32) {
    %c0_i32 = arith.constant 0 : i32
    %c0_i32_0 = arith.constant 0 : i32
    %c0_i32_1 = arith.constant 0 : i32
    return %c0_i32, %c0_i32_0 : i32, i32
  }
  func.func @transform_10(%arg0: i32, %arg1: i32) -> (i32, i32) {
    %c0_i32 = arith.constant 0 : i32
    %c0_i32_0 = arith.constant 0 : i32
    %c0_i32_1 = arith.constant 0 : i32
    return %c0_i32, %c0_i32_0 : i32, i32
  }
  func.func @transform_11(%arg0: i32, %arg1: i32) -> (i32, i32) {
    %c0_i32 = arith.constant 0 : i32
    %c0_i32_0 = arith.constant 0 : i32
    %c0_i32_1 = arith.constant 0 : i32
    return %c0_i32, %c0_i32_0 : i32, i32
  }
  func.func @transform_12(%arg0: i32, %arg1: i32) -> (i32, i32) {
    %c0_i32 = arith.constant 0 : i32
    %c0_i32_0 = arith.constant 0 : i32
    %c0_i32_1 = arith.constant 0 : i32
    return %c0_i32, %c0_i32_0 : i32, i32
  }
  func.func @transform_13(%arg0: i32, %arg1: i32) -> (i32, i32) {
    %c0_i32 = arith.constant 0 : i32
    %c0_i32_0 = arith.constant 0 : i32
    %c0_i32_1 = arith.constant 0 : i32
    return %c0_i32, %c0_i32_0 : i32, i32
  }
  func.func @transform_14(%arg0: i32, %arg1: i32) -> (i32, i32, i32) {
    %c0_i32 = arith.constant 0 : i32
    %c0_i32_0 = arith.constant 0 : i32
    return %arg1, %arg0, %c0_i32 : i32, i32, i32
  }
  func.func @transform_15(%arg0: i32, %arg1: i32) -> (i32, i32, i32) {
    %c0_i32 = arith.constant 0 : i32
    %c0_i32_0 = arith.constant 0 : i32
    return %arg1, %arg0, %c0_i32 : i32, i32, i32
  }
}

</mosaic_0001>

<llo_original>
// kernel: tpu_custom_call.1
$region0: #{tpu_custom_call.1}
  #allocation0 [shape = 'u32[]', space=smem, size = 0x4, offset = 0x4, fixed_abs, tag = 'smem constant byte address 0x4 - core index']
  #allocation1 [shape = 'u32[72,128]{1,0:T(1,128)}', space=vmem, size = 0x9000, scoped, tag = 'internal scratch']
  #allocation2 [shape = 'f32[8,32]{1,0:T(8,128)}', space=vmem, size = 0x1000, scoped, tag = 'scratch operand']
  #allocation3 [shape = 'f32[8,32]{1,0:T(8,128)}', space=vmem, size = 0x1000, scoped, tag = 'scratch operand']
  #allocation4 [shape = 'f32[8,128,32]{2,1,0:T(8,128)}', space=vmem, size = 0x80000, scoped, tag = 'scratch operand']
  %s0 = inlined_call_operand.vmem [shape: f32[7,8,1], index: 0, kind: input, shape index: {}]
  %s1 = inlined_call_operand.vmem [shape: f32[7,8,32], index: 1, kind: input, shape index: {}]
  %s2 = inlined_call_operand.vmem [shape: f32[8,128,32], index: 2, kind: input, shape index: {}]
  %s3 = inlined_call_operand.vmem [shape: f32[32,64], index: 3, kind: input, shape index: {}]
  %s4 = inlined_call_operand.vmem [shape: f32[1,64], index: 4, kind: input, shape index: {}]
  %s5 = inlined_call_operand.vmem [shape: f32[32,32], index: 5, kind: input, shape index: {}]
  %s6 = inlined_call_operand.vmem [shape: f32[1,32], index: 6, kind: input, shape index: {}]
  %s7 = inlined_call_operand.vmem [shape: f32[1,32], index: 7, kind: input, shape index: {}]
  %s8 = inlined_call_operand.vmem [shape: f32[32,192], index: 8, kind: input, shape index: {}]
  %s9 = inlined_call_operand.vmem [shape: f32[1,192], index: 9, kind: input, shape index: {}]
  %s10 = inlined_call_operand.vmem [shape: f32[32,128], index: 10, kind: input, shape index: {}]
  %s11 = inlined_call_operand.vmem [shape: f32[32,128], index: 11, kind: input, shape index: {}]
  %s12 = inlined_call_operand.vmem [shape: f32[32,128], index: 12, kind: input, shape index: {}]
  %s13 = inlined_call_operand.vmem [shape: f32[1,128], index: 13, kind: input, shape index: {}]
  %s14 = inlined_call_operand.hbm [shape: f32[7,8,128], index: 14, kind: output, shape index: {0}]
  %s15 = inlined_call_operand.hbm [shape: f32[7,8,128], index: 15, kind: output, shape index: {1}]
  %16 = xla_tuple %s14, %s15
  %s17 = sld [smem:[#allocation0]]
  $region101: #{tpu_custom_call.1} parent=0
    _
  %s19 = ssub.s32 1, %s17
  %s20 = scalar_select 0, %s19, %s17
  $region1: #{tpu_custom_call.1} parent=0
    #allocation5 [shape = 'u8[8192]{0}', space=vmem, size = 0x2000, scoped, tag = 'output window, operand 0']
    #allocation6 [shape = 's32[2]{0}', space=sflag, size = 0x8, scoped, tag = 'scoped memory for tpu_custom_call.1']
    #allocation7 [shape = 'u8[8192]{0}', space=vmem, size = 0x2000, scoped, tag = 'output window, operand 1']
    #allocation8 [shape = 's32[2]{0}', space=sflag, size = 0x8, scoped, tag = 'scoped memory for tpu_custom_call.1']
    %21 = vsyncpa [#allocation6], 0
    %s22 = scalar_lea.sflag [#allocation6], 1
    %23 = vsyncpa %s22, 0
    %24 = vsyncpa [#allocation8], 0
    %s25 = scalar_lea.sflag [#allocation8], 1
    %26 = vsyncpa %s25, 0
    loop: start=0, step=1, limit=9
    $region2: #{tpu_custom_call.1} parent=1 // loop_pre_header
      _
    $region3: #{tpu_custom_call.1} parent=1 // loop_header
      %s28 = sphi 0, %s32
      %p29 = scmp.ge.s32.totalorder %s28, 9
      %s35 = sphi 0, %s47
      %s36 = sphi 0, %s43
      %s37 = sphi 0, %s35
      %s38 = sphi 0, %s36
      %s39 = sphi 0, %s37
      %s40 = sphi 0, %s38
      %s52 = sphi 0, %s54
      %s55 = sphi 0, %s52
      %s56 = sphi 0, %s55
      %s72 = sphi 0, %s56
      %s80 = sphi 0, %s82
      %s83 = sphi 0, %s80
      %s84 = sphi 0, %s83
      %s100 = sphi 0, %s84
      %s106 = sphi 0, %s108
      %s109 = sphi 0, %s106
      %s110 = sphi 0, %s109
      %s126 = sphi 0, %s110
      %s130 = sphi 0, %s130
      %s132 = sphi 0, %s130
      %s133 = sphi 0, %s132
      %s147 = sphi 0, %s133
      %s151 = sphi 0, %s151
      %s153 = sphi 0, %s151
      %s154 = sphi 0, %s153
      %s168 = sphi 0, %s154
      %s172 = sphi 0, %s172
      %s174 = sphi 0, %s172
      %s175 = sphi 0, %s174
      %s189 = sphi 0, %s175
      %s193 = sphi 0, %s193
      %s195 = sphi 0, %s193
      %s196 = sphi 0, %s195
      %s210 = sphi 0, %s196
      %s214 = sphi 0, %s214
      %s216 = sphi 0, %s214
      %s217 = sphi 0, %s216
      %s231 = sphi 0, %s217
      %s235 = sphi 0, %s235
      %s237 = sphi 0, %s235
      %s238 = sphi 0, %s237
      %s252 = sphi 0, %s238
      %s256 = sphi 0, %s256
      %s258 = sphi 0, %s256
      %s259 = sphi 0, %s258
      %s273 = sphi 0, %s259
      %s277 = sphi 0, %s277
      %s279 = sphi 0, %s277
      %s280 = sphi 0, %s279
      %s294 = sphi 0, %s280
      %s298 = sphi 0, %s298
      %s300 = sphi 0, %s298
      %s301 = sphi 0, %s300
      %s315 = sphi 0, %s301
      %s319 = sphi 0, %s319
      %s321 = sphi 0, %s319
      %s322 = sphi 0, %s321
      %s336 = sphi 0, %s322
      %s340 = sphi 0, %s340
      %s342 = sphi 0, %s340
      %s343 = sphi 0, %s342
      %s357 = sphi 0, %s343
      %s365 = sphi 0, %s367
      %s368 = sphi 0, %s365
      %s369 = sphi 0, %s368
      %s385 = sphi 0, %s369
      %s393 = sphi 0, %s395
      %s396 = sphi 0, %s393
      %s397 = sphi 0, %s396
      %s413 = sphi 0, %s397
    $region4: #{tpu_custom_call.1} parent=1 // loop_header_branch
      %31 = sbr.rel (%p29) target = $region8
    $region5: #{tpu_custom_call.1} parent=1 // loop_body
      %s33 = ssub.s32 %s28, 1
      %s34 = ssub.s32 %s28, 2
      %s41 = sadd.s32 1, %s36
      %p42 = scmp.ge.s32.totalorder %s41, 7
      %s43 = scalar_select %p42, 0, %s41
      %s44 = sadd.s32 1, %s35
      %s45 = scalar_select %p42, %s44, %s35
      %p46 = scmp.ge.s32.totalorder %s45, 1
      %s47 = scalar_select %p46, 0, %s45
      %s48 = ssub.s32 %s36, %s43
      %s49 = ssub.s32 %s35, %s47
      %s50 = sor.u32 %s48, %s49
      %p51 = scmp.eq.s32.totalorder %s50, 0
      %s53 = sadd.s32 %s52, 1
      %s54 = scalar_select %p51, %s52, %s53
      %p57 = pneg %p51
      %p58 = scmp.eq.s32.totalorder %s28, 6
      %p59 = por %p57, %p58
      %p60 = scmp.ne.s32.totalorder %s52, %s55
      %p61 = scmp.eq.s32.totalorder %s28, 0
      %p62 = por %p60, %p61
      %p63 = scmp.ne.s32.totalorder %s52, %s55
      %p64 = scmp.eq.s32.totalorder %s33, 6
      %p65 = por %p63, %p64
      %p66 = scmp.ne.s32.totalorder %s55, %s56
      %p67 = scmp.eq.s32.totalorder %s33, 0
      %p68 = por %p66, %p67
      %p69 = scmp.ne.s32.totalorder %s55, %s56
      %p70 = scmp.eq.s32.totalorder %s34, 6
      %p71 = por %p69, %p70
      %p73 = scmp.ne.s32.totalorder %s56, %s72
      %p74 = scmp.eq.s32.totalorder %s34, 0
      %p75 = por %p73, %p74
      %s76 = ssub.s32 %s36, %s43
      %s77 = ssub.s32 %s35, %s47
      %s78 = sor.u32 %s76, %s77
      %p79 = scmp.eq.s32.totalorder %s78, 0
      %s81 = sadd.s32 %s80, 1
      %s82 = scalar_select %p79, %s80, %s81
      %p85 = pneg %p79
      %p86 = scmp.eq.s32.totalorder %s28, 6
      %p87 = por %p85, %p86
      %p88 = scmp.ne.s32.totalorder %s80, %s83
      %p89 = scmp.eq.s32.totalorder %s28, 0
      %p90 = por %p88, %p89
      %p91 = scmp.ne.s32.totalorder %s80, %s83
      %p92 = scmp.eq.s32.totalorder %s33, 6
      %p93 = por %p91, %p92
      %p94 = scmp.ne.s32.totalorder %s83, %s84
      %p95 = scmp.eq.s32.totalorder %s33, 0
      %p96 = por %p94, %p95
      %p97 = scmp.ne.s32.totalorder %s83, %s84
      %p98 = scmp.eq.s32.totalorder %s34, 6
      %p99 = por %p97, %p98
      %p101 = scmp.ne.s32.totalorder %s84, %s100
      %p102 = scmp.eq.s32.totalorder %s34, 0
      %p103 = por %p101, %p102
      %s104 = ssub.s32 %s35, %s47
      %p105 = scmp.eq.s32.totalorder %s104, 0
      %s107 = sadd.s32 %s106, 1
      %s108 = scalar_select %p105, %s106, %s107
      %p111 = pneg %p105
      %p112 = scmp.eq.s32.totalorder %s28, 6
      %p113 = por %p111, %p112
      %p114 = scmp.ne.s32.totalorder %s106, %s109
      %p115 = scmp.eq.s32.totalorder %s28, 0
      %p116 = por %p114, %p115
      %p117 = scmp.ne.s32.totalorder %s106, %s109
      %p118 = scmp.eq.s32.totalorder %s33, 6
      %p119 = por %p117, %p118
      %p120 = scmp.ne.s32.totalorder %s109, %s110
      %p121 = scmp.eq.s32.totalorder %s33, 0
      %p122 = por %p120, %p121
      %p123 = scmp.ne.s32.totalorder %s109, %s110
      %p124 = scmp.eq.s32.totalorder %s34, 6
      %p125 = por %p123, %p124
      %p127 = scmp.ne.s32.totalorder %s110, %s126
      %p128 = scmp.eq.s32.totalorder %s34, 0
      %p129 = por %p127, %p128
      %s131 = sadd.s32 %s130, 1
      %p134 = scmp.eq.s32.totalorder %s28, 6
      %p135 = scmp.ne.s32.totalorder %s130, %s132
      %p136 = scmp.eq.s32.totalorder %s28, 0
      %p137 = por %p135, %p136
      %p138 = scmp.ne.s32.totalorder %s130, %s132
      %p139 = scmp.eq.s32.totalorder %s33, 6
      %p140 = por %p138, %p139
      %p141 = scmp.ne.s32.totalorder %s132, %s133
      %p142 = scmp.eq.s32.totalorder %s33, 0
      %p143 = por %p141, %p142
      %p144 = scmp.ne.s32.totalorder %s132, %s133
      %p145 = scmp.eq.s32.totalorder %s34, 6
      %p146 = por %p144, %p145
      %p148 = scmp.ne.s32.totalorder %s133, %s147
      %p149 = scmp.eq.s32.totalorder %s34, 0
      %p150 = por %p148, %p149
      %s152 = sadd.s32 %s151, 1
      %p155 = scmp.eq.s32.totalorder %s28, 6
      %p156 = scmp.ne.s32.totalorder %s151, %s153
      %p157 = scmp.eq.s32.totalorder %s28, 0
      %p158 = por %p156, %p157
      %p159 = scmp.ne.s32.totalorder %s151, %s153
      %p160 = scmp.eq.s32.totalorder %s33, 6
      %p161 = por %p159, %p160
      %p162 = scmp.ne.s32.totalorder %s153, %s154
      %p163 = scmp.eq.s32.totalorder %s33, 0
      %p164 = por %p162, %p163
      %p165 = scmp.ne.s32.totalorder %s153, %s154
      %p166 = scmp.eq.s32.totalorder %s34, 6
      %p167 = por %p165, %p166
      %p169 = scmp.ne.s32.totalorder %s154, %s168
      %p170 = scmp.eq.s32.totalorder %s34, 0
      %p171 = por %p169, %p170
      %s173 = sadd.s32 %s172, 1
      %p176 = scmp.eq.s32.totalorder %s28, 6
      %p177 = scmp.ne.s32.totalorder %s172, %s174
      %p178 = scmp.eq.s32.totalorder %s28, 0
      %p179 = por %p177, %p178
      %p180 = scmp.ne.s32.totalorder %s172, %s174
      %p181 = scmp.eq.s32.totalorder %s33, 6
      %p182 = por %p180, %p181
      %p183 = scmp.ne.s32.totalorder %s174, %s175
      %p184 = scmp.eq.s32.totalorder %s33, 0
      %p185 = por %p183, %p184
      %p186 = scmp.ne.s32.totalorder %s174, %s175
      %p187 = scmp.eq.s32.totalorder %s34, 6
      %p188 = por %p186, %p187
      %p190 = scmp.ne.s32.totalorder %s175, %s189
      %p191 = scmp.eq.s32.totalorder %s34, 0
      %p192 = por %p190, %p191
      %s194 = sadd.s32 %s193, 1
      %p197 = scmp.eq.s32.totalorder %s28, 6
      %p198 = scmp.ne.s32.totalorder %s193, %s195
      %p199 = scmp.eq.s32.totalorder %s28, 0
      %p200 = por %p198, %p199
      %p201 = scmp.ne.s32.totalorder %s193, %s195
      %p202 = scmp.eq.s32.totalorder %s33, 6
      %p203 = por %p201, %p202
      %p204 = scmp.ne.s32.totalorder %s195, %s196
      %p205 = scmp.eq.s32.totalorder %s33, 0
      %p206 = por %p204, %p205
      %p207 = scmp.ne.s32.totalorder %s195, %s196
      %p208 = scmp.eq.s32.totalorder %s34, 6
      %p209 = por %p207, %p208
      %p211 = scmp.ne.s32.totalorder %s196, %s210
      %p212 = scmp.eq.s32.totalorder %s34, 0
      %p213 = por %p211, %p212
      %s215 = sadd.s32 %s214, 1
      %p218 = scmp.eq.s32.totalorder %s28, 6
      %p219 = scmp.ne.s32.totalorder %s214, %s216
      %p220 = scmp.eq.s32.totalorder %s28, 0
      %p221 = por %p219, %p220
      %p222 = scmp.ne.s32.totalorder %s214, %s216
      %p223 = scmp.eq.s32.totalorder %s33, 6
      %p224 = por %p222, %p223
      %p225 = scmp.ne.s32.totalorder %s216, %s217
      %p226 = scmp.eq.s32.totalorder %s33, 0
      %p227 = por %p225, %p226
      %p228 = scmp.ne.s32.totalorder %s216, %s217
      %p229 = scmp.eq.s32.totalorder %s34, 6
      %p230 = por %p228, %p229
      %p232 = scmp.ne.s32.totalorder %s217, %s231
      %p233 = scmp.eq.s32.totalorder %s34, 0
      %p234 = por %p232, %p233
      %s236 = sadd.s32 %s235, 1
      %p239 = scmp.eq.s32.totalorder %s28, 6
      %p240 = scmp.ne.s32.totalorder %s235, %s237
      %p241 = scmp.eq.s32.totalorder %s28, 0
      %p242 = por %p240, %p241
      %p243 = scmp.ne.s32.totalorder %s235, %s237
      %p244 = scmp.eq.s32.totalorder %s33, 6
      %p245 = por %p243, %p244
      %p246 = scmp.ne.s32.totalorder %s237, %s238
      %p247 = scmp.eq.s32.totalorder %s33, 0
      %p248 = por %p246, %p247
      %p249 = scmp.ne.s32.totalorder %s237, %s238
      %p250 = scmp.eq.s32.totalorder %s34, 6
      %p251 = por %p249, %p250
      %p253 = scmp.ne.s32.totalorder %s238, %s252
      %p254 = scmp.eq.s32.totalorder %s34, 0
      %p255 = por %p253, %p254
      %s257 = sadd.s32 %s256, 1
      %p260 = scmp.eq.s32.totalorder %s28, 6
      %p261 = scmp.ne.s32.totalorder %s256, %s258
      %p262 = scmp.eq.s32.totalorder %s28, 0
      %p263 = por %p261, %p262
      %p264 = scmp.ne.s32.totalorder %s256, %s258
      %p265 = scmp.eq.s32.totalorder %s33, 6
      %p266 = por %p264, %p265
      %p267 = scmp.ne.s32.totalorder %s258, %s259
      %p268 = scmp.eq.s32.totalorder %s33, 0
      %p269 = por %p267, %p268
      %p270 = scmp.ne.s32.totalorder %s258, %s259
      %p271 = scmp.eq.s32.totalorder %s34, 6
      %p272 = por %p270, %p271
      %p274 = scmp.ne.s32.totalorder %s259, %s273
      %p275 = scmp.eq.s32.totalorder %s34, 0
      %p276 = por %p274, %p275
      %s278 = sadd.s32 %s277, 1
      %p281 = scmp.eq.s32.totalorder %s28, 6
      %p282 = scmp.ne.s32.totalorder %s277, %s279
      %p283 = scmp.eq.s32.totalorder %s28, 0
      %p284 = por %p282, %p283
      %p285 = scmp.ne.s32.totalorder %s277, %s279
      %p286 = scmp.eq.s32.totalorder %s33, 6
      %p287 = por %p285, %p286
      %p288 = scmp.ne.s32.totalorder %s279, %s280
      %p289 = scmp.eq.s32.totalorder %s33, 0
      %p290 = por %p288, %p289
      %p291 = scmp.ne.s32.totalorder %s279, %s280
      %p292 = scmp.eq.s32.totalorder %s34, 6
      %p293 = por %p291, %p292
      %p295 = scmp.ne.s32.totalorder %s280, %s294
      %p296 = scmp.eq.s32.totalorder %s34, 0
      %p297 = por %p295, %p296
      %s299 = sadd.s32 %s298, 1
      %p302 = scmp.eq.s32.totalorder %s28, 6
      %p303 = scmp.ne.s32.totalorder %s298, %s300
      %p304 = scmp.eq.s32.totalorder %s28, 0
      %p305 = por %p303, %p304
      %p306 = scmp.ne.s32.totalorder %s298, %s300
      %p307 = scmp.eq.s32.totalorder %s33, 6
      %p308 = por %p306, %p307
      %p309 = scmp.ne.s32.totalorder %s300, %s301
      %p310 = scmp.eq.s32.totalorder %s33, 0
      %p311 = por %p309, %p310
      %p312 = scmp.ne.s32.totalorder %s300, %s301
      %p313 = scmp.eq.s32.totalorder %s34, 6
      %p314 = por %p312, %p313
      %p316 = scmp.ne.s32.totalorder %s301, %s315
      %p317 = scmp.eq.s32.totalorder %s34, 0
      %p318 = por %p316, %p317
      %s320 = sadd.s32 %s319, 1
      %p323 = scmp.eq.s32.totalorder %s28, 6
      %p324 = scmp.ne.s32.totalorder %s319, %s321
      %p325 = scmp.eq.s32.totalorder %s28, 0
      %p326 = por %p324, %p325
      %p327 = scmp.ne.s32.totalorder %s319, %s321
      %p328 = scmp.eq.s32.totalorder %s33, 6
      %p329 = por %p327, %p328
      %p330 = scmp.ne.s32.totalorder %s321, %s322
      %p331 = scmp.eq.s32.totalorder %s33, 0
      %p332 = por %p330, %p331
      %p333 = scmp.ne.s32.totalorder %s321, %s322
      %p334 = scmp.eq.s32.totalorder %s34, 6
      %p335 = por %p333, %p334
      %p337 = scmp.ne.s32.totalorder %s322, %s336
      %p338 = scmp.eq.s32.totalorder %s34, 0
      %p339 = por %p337, %p338
      %s341 = sadd.s32 %s340, 1
      %p344 = scmp.eq.s32.totalorder %s28, 6
      %p345 = scmp.ne.s32.totalorder %s340, %s342
      %p346 = scmp.eq.s32.totalorder %s28, 0
      %p347 = por %p345, %p346
      %p348 = scmp.ne.s32.totalorder %s340, %s342
      %p349 = scmp.eq.s32.totalorder %s33, 6
      %p350 = por %p348, %p349
      %p351 = scmp.ne.s32.totalorder %s342, %s343
      %p352 = scmp.eq.s32.totalorder %s33, 0
      %p353 = por %p351, %p352
      %p354 = scmp.ne.s32.totalorder %s342, %s343
      %p355 = scmp.eq.s32.totalorder %s34, 6
      %p356 = por %p354, %p355
      %p358 = scmp.ne.s32.totalorder %s343, %s357
      %p359 = scmp.eq.s32.totalorder %s34, 0
      %p360 = por %p358, %p359
      %s361 = ssub.s32 %s36, %s43
      %s362 = ssub.s32 %s35, %s47
      %s363 = sor.u32 %s361, %s362
      %p364 = scmp.eq.s32.totalorder %s363, 0
      %s366 = sadd.s32 %s365, 1
      %s367 = scalar_select %p364, %s365, %s366
      %p370 = pneg %p364
      %p371 = scmp.eq.s32.totalorder %s28, 6
      %p372 = por %p370, %p371
      %p373 = scmp.ne.s32.totalorder %s365, %s368
      %p374 = scmp.eq.s32.totalorder %s28, 0
      %p375 = por %p373, %p374
      %p376 = scmp.ne.s32.totalorder %s365, %s368
      %p377 = scmp.eq.s32.totalorder %s33, 6
      %p378 = por %p376, %p377
      %p379 = scmp.ne.s32.totalorder %s368, %s369
      %p380 = scmp.eq.s32.totalorder %s33, 0
      %p381 = por %p379, %p380
      %p382 = scmp.ne.s32.totalorder %s368, %s369
      %p383 = scmp.eq.s32.totalorder %s34, 6
      %p384 = por %p382, %p383
      %p386 = scmp.ne.s32.totalorder %s369, %s385
      %p387 = scmp.eq.s32.totalorder %s34, 0
      %p388 = por %p386, %p387
      %s389 = ssub.s32 %s36, %s43
      %s390 = ssub.s32 %s35, %s47
      %s391 = sor.u32 %s389, %s390
      %p392 = scmp.eq.s32.totalorder %s391, 0
      %s394 = sadd.s32 %s393, 1
      %s395 = scalar_select %p392, %s393, %s394
      %p398 = pneg %p392
      %p399 = scmp.eq.s32.totalorder %s28, 6
      %p400 = por %p398, %p399
      %p401 = scmp.ne.s32.totalorder %s393, %s396
      %p402 = scmp.eq.s32.totalorder %s28, 0
      %p403 = por %p401, %p402
      %p404 = scmp.ne.s32.totalorder %s393, %s396
      %p405 = scmp.eq.s32.totalorder %s33, 6
      %p406 = por %p404, %p405
      %p407 = scmp.ne.s32.totalorder %s396, %s397
      %p408 = scmp.eq.s32.totalorder %s33, 0
      %p409 = por %p407, %p408
      %p410 = scmp.ne.s32.totalorder %s396, %s397
      %p411 = scmp.eq.s32.totalorder %s34, 6
      %p412 = por %p410, %p411
      %p414 = scmp.ne.s32.totalorder %s397, %s413
      %p415 = scmp.eq.s32.totalorder %s34, 0
      %p416 = por %p414, %p415
      %p417 = scmp.le.s32.totalorder 1, %s28
      %p418 = scmp.lt.s32.totalorder %s28, 8
      %p419 = pnand %p417, %p418
      %p420 = pneg %p419
      // Predicated region
      $region9: #{tpu_custom_call.1} parent=5 // pred_check
        _
      $region10: #{tpu_custom_call.1} parent=5 // pred_check_branch
        %422 = sbr.rel (%p419) target = $region12
      $region11: #{tpu_custom_call.1} parent=5 // pred_region
        %s423 = ssub.s32 %s28, 1
        // Predicated region
        $region13: #{tpu_custom_call.1} parent=11 // pred_check
          %p424 = pneg %p122
        $region14: #{tpu_custom_call.1} parent=11 // pred_check_branch
          %426 = sbr.rel (%p424) target = $region16
        $region15: #{tpu_custom_call.1} parent=11 // pred_region
          %s427 = smul.u32 8, %s37
          %p428 = scmp.lt.s32.totalorder %s427, 7
          %s429 = scalar_select %p428, %s427, 7
          %s430 = smul.addr %s429, 16
          %s431 = smul.addr %s430, 8
          %s432 = scalar_lea.vmem %s2, %s431
          %s433 = smul.u32 8, %s37
        $region16: #{tpu_custom_call.1} parent=11 // pred_fallthru
          _
        // Predicated region
        $region17: #{tpu_custom_call.1} parent=11 // pred_check
          %p434 = pneg %p143
        $region18: #{tpu_custom_call.1} parent=11 // pred_check_branch
          %436 = sbr.rel (%p434) target = $region20
        $region19: #{tpu_custom_call.1} parent=11 // pred_region
          _
        $region20: #{tpu_custom_call.1} parent=11 // pred_fallthru
          _
        // Predicated region
        $region21: #{tpu_custom_call.1} parent=11 // pred_check
          %p437 = pneg %p164
        $region22: #{tpu_custom_call.1} parent=11 // pred_check_branch
          %439 = sbr.rel (%p437) target = $region24
        $region23: #{tpu_custom_call.1} parent=11 // pred_region
          _
        $region24: #{tpu_custom_call.1} parent=11 // pred_fallthru
          _
        // Predicated region
        $region25: #{tpu_custom_call.1} parent=11 // pred_check
          %p440 = pneg %p185
        $region26: #{tpu_custom_call.1} parent=11 // pred_check_branch
          %442 = sbr.rel (%p440) target = $region28
        $region27: #{tpu_custom_call.1} parent=11 // pred_region
          _
        $region28: #{tpu_custom_call.1} parent=11 // pred_fallthru
          _
        // Predicated region
        $region29: #{tpu_custom_call.1} parent=11 // pred_check
          %p443 = pneg %p206
        $region30: #{tpu_custom_call.1} parent=11 // pred_check_branch
          %445 = sbr.rel (%p443) target = $region32
        $region31: #{tpu_custom_call.1} parent=11 // pred_region
          _
        $region32: #{tpu_custom_call.1} parent=11 // pred_fallthru
          _
        // Predicated region
        $region33: #{tpu_custom_call.1} parent=11 // pred_check
          %p446 = pneg %p227
        $region34: #{tpu_custom_call.1} parent=11 // pred_check_branch
          %448 = sbr.rel (%p446) target = $region36
        $region35: #{tpu_custom_call.1} parent=11 // pred_region
          _
        $region36: #{tpu_custom_call.1} parent=11 // pred_fallthru
          _
        // Predicated region
        $region37: #{tpu_custom_call.1} parent=11 // pred_check
          %p449 = pneg %p248
        $region38: #{tpu_custom_call.1} parent=11 // pred_check_branch
          %451 = sbr.rel (%p449) target = $region40
        $region39: #{tpu_custom_call.1} parent=11 // pred_region
          _
        $region40: #{tpu_custom_call.1} parent=11 // pred_fallthru
          _
        // Predicated region
        $region41: #{tpu_custom_call.1} parent=11 // pred_check
          %p452 = pneg %p269
        $region42: #{tpu_custom_call.1} parent=11 // pred_check_branch
          %454 = sbr.rel (%p452) target = $region44
        $region43: #{tpu_custom_call.1} parent=11 // pred_region
          _
        $region44: #{tpu_custom_call.1} parent=11 // pred_fallthru
          _
        // Predicated region
        $region45: #{tpu_custom_call.1} parent=11 // pred_check
          %p455 = pneg %p290
        $region46: #{tpu_custom_call.1} parent=11 // pred_check_branch
          %457 = sbr.rel (%p455) target = $region48
        $region47: #{tpu_custom_call.1} parent=11 // pred_region
          _
        $region48: #{tpu_custom_call.1} parent=11 // pred_fallthru
          _
        // Predicated region
        $region49: #{tpu_custom_call.1} parent=11 // pred_check
          %p458 = pneg %p311
        $region50: #{tpu_custom_call.1} parent=11 // pred_check_branch
          %460 = sbr.rel (%p458) target = $region52
        $region51: #{tpu_custom_call.1} parent=11 // pred_region
          _
        $region52: #{tpu_custom_call.1} parent=11 // pred_fallthru
          _
        // Predicated region
        $region53: #{tpu_custom_call.1} parent=11 // pred_check
          %p461 = pneg %p332
        $region54: #{tpu_custom_call.1} parent=11 // pred_check_branch
          %463 = sbr.rel (%p461) target = $region56
        $region55: #{tpu_custom_call.1} parent=11 // pred_region
          _
        $region56: #{tpu_custom_call.1} parent=11 // pred_fallthru
          _
        // Predicated region
        $region57: #{tpu_custom_call.1} parent=11 // pred_check
          %p464 = pneg %p353
        $region58: #{tpu_custom_call.1} parent=11 // pred_check_branch
          %466 = sbr.rel (%p464) target = $region60
        $region59: #{tpu_custom_call.1} parent=11 // pred_region
          _
        $region60: #{tpu_custom_call.1} parent=11 // pred_fallthru
          _
      $region12: #{tpu_custom_call.1} parent=5 // pred_fallthru
        _
      %p467 = scmp.lt.s32.totalorder %s28, 7
      // Predicated region
      $region61: #{tpu_custom_call.1} parent=5 // pred_check
        %p468 = pneg %p467
      $region62: #{tpu_custom_call.1} parent=5 // pred_check_branch
        %470 = sbr.rel (%p468) target = $region64
      $region63: #{tpu_custom_call.1} parent=5 // pred_region
        // Predicated region
        $region65: #{tpu_custom_call.1} parent=63 // pred_check
          %p471 = pneg %p62
        $region66: #{tpu_custom_call.1} parent=63 // pred_check_branch
          %473 = sbr.rel (%p471) target = $region68
        $region67: #{tpu_custom_call.1} parent=63 // pred_region
          %p474 = scmp.lt.s32.totalorder %s36, 6
          %s475 = scalar_select %p474, %s36, 6
          %p476 = scmp.lt.s32.totalorder %s35, 0
          %s477 = scalar_select %p476, %s35, 0
          %s478 = sadd.s32 %s477, %s475
          %s479 = smul.addr %s478, 8
          %s480 = scalar_lea.vmem %s0, %s479
        $region68: #{tpu_custom_call.1} parent=63 // pred_fallthru
          _
        // Predicated region
        $region69: #{tpu_custom_call.1} parent=63 // pred_check
          %p481 = pneg %p90
        $region70: #{tpu_custom_call.1} parent=63 // pred_check_branch
          %483 = sbr.rel (%p481) target = $region72
        $region71: #{tpu_custom_call.1} parent=63 // pred_region
          %p484 = scmp.lt.s32.totalorder %s36, 6
          %s485 = scalar_select %p484, %s36, 6
          %p486 = scmp.lt.s32.totalorder %s35, 0
          %s487 = scalar_select %p486, %s35, 0
          %s488 = sadd.s32 %s487, %s485
          %s489 = smul.addr %s488, 8
          %s490 = scalar_lea.vmem %s1, %s489
        $region72: #{tpu_custom_call.1} parent=63 // pred_fallthru
          _
      $region64: #{tpu_custom_call.1} parent=5 // pred_fallthru
        _
      %p491 = scmp.le.s32.totalorder 1, %s28
      %p492 = scmp.lt.s32.totalorder %s28, 8
      %p493 = pnand %p491, %p492
      %p494 = pneg %p493
      // Predicated region
      $region73: #{tpu_custom_call.1} parent=5 // pred_check
        _
      $region74: #{tpu_custom_call.1} parent=5 // pred_check_branch
        %496 = sbr.rel (%p493) target = $region76
      $region75: #{tpu_custom_call.1} parent=5 // pred_region
        %s497 = ssub.s32 %s28, 1
        %p498 = scmp.lt.s32.totalorder %s38, 6
        %s499 = scalar_select %p498, %s38, 6
        %p500 = scmp.lt.s32.totalorder %s37, 0
        %s501 = scalar_select %p500, %s37, 0
        %s502 = sadd.s32 %s501, %s499
        %s503 = smul.addr %s502, 8
        %s504 = scalar_lea.vmem %s0, %s503
        %p505 = pneg %p68
        %p506 = pneg %p65
        %p507 = scmp.lt.s32.totalorder %s38, 6
        %s508 = scalar_select %p507, %s38, 6
        %p509 = scmp.lt.s32.totalorder %s37, 0
        %s510 = scalar_select %p509, %s37, 0
        %s511 = sadd.s32 %s510, %s508
        %s512 = smul.addr %s511, 8
        %s513 = scalar_lea.vmem %s1, %s512
        %p514 = pneg %p96
        %p515 = pneg %p93
        %s516 = smul.u32 8, %s37
        %p517 = scmp.lt.s32.totalorder %s516, 7
        %s518 = scalar_select %p517, %s516, 7
        %s519 = smul.addr %s518, 16
        %s520 = smul.addr %s519, 8
        %s521 = scalar_lea.vmem %s2, %s520
        %p522 = pneg %p122
        %p523 = pneg %p119
        %p524 = pneg %p143
        %p525 = pneg %p140
        %p526 = pneg %p164
        %p527 = pneg %p161
        %p528 = pneg %p185
        %p529 = pneg %p182
        %p530 = pneg %p206
        %p531 = pneg %p203
        %p532 = pneg %p227
        %p533 = pneg %p224
        %p534 = pneg %p248
        %p535 = pneg %p245
        %p536 = pneg %p269
        %p537 = pneg %p266
        %p538 = pneg %p290
        %p539 = pneg %p287
        %p540 = pneg %p311
        %p541 = pneg %p308
        %p542 = pneg %p332
        %p543 = pneg %p329
        %p544 = pneg %p353
        %p545 = pneg %p350
        %p546 = pneg %p381
        %p547 = pneg %p378
        %s548 = sand.u32 %s368, 1
        %s549 = scalar_lea.sflag [#allocation6], %s548
        %s550 = sand.u32 %s368, 1
        %s551 = smul.addr %s550, 8
        %s552 = scalar_lea.vmem [#allocation5], %s551
        %p553 = pneg %p409
        %p554 = pneg %p406
        %s555 = sand.u32 %s396, 1
        %s556 = scalar_lea.sflag [#allocation8], %s555
        %s557 = sand.u32 %s396, 1
        %s558 = smul.addr %s557, 8
        %s559 = scalar_lea.vmem [#allocation7], %s558
        %p560 = scmp.lt.s32.totalorder %s38, 6
        %s561 = scalar_select %p560, %s38, 6
        %p562 = scmp.lt.s32.totalorder %s37, 0
        %s563 = scalar_select %p562, %s37, 0
        %s564 = sadd.s32 %s563, %s561
        %s565 = smul.addr %s564, 8
        %s566 = scalar_lea.vmem %s0, %s565
        %p567 = scmp.lt.s32.totalorder %s38, 6
        %s568 = scalar_select %p567, %s38, 6
        %p569 = scmp.lt.s32.totalorder %s37, 0
        %s570 = scalar_select %p569, %s37, 0
        %s571 = sadd.s32 %s570, %s568
        %s572 = smul.addr %s571, 8
        %s573 = scalar_lea.vmem %s1, %s572
        %s574 = smul.u32 8, %s37
        %p575 = scmp.lt.s32.totalorder %s574, 7
        %s576 = scalar_select %p575, %s574, 7
        %s577 = smul.addr %s576, 16
        %s578 = smul.addr %s577, 8
        %s579 = scalar_lea.vmem %s2, %s578
        %s580 = smul.u32 8, %s37
        %p581 = scmp.eq.s32.totalorder %s38, 0
        // Predicated region
        $region77: #{tpu_custom_call.1} parent=75 // pred_check
          %p582 = pneg %p581
        $region78: #{tpu_custom_call.1} parent=75 // pred_check_branch
          %584 = sbr.rel (%p582) target = $region80
        $region79: #{tpu_custom_call.1} parent=75 // pred_region
          %v585 = vld [vmem:[%s579] sm:$0xff]
          %v586 = vld [vmem:[%s579 + $0x8] sm:$0xff]
          %v587 = vld [vmem:[%s579 + $0x10] sm:$0xff]
          %v588 = vld [vmem:[%s579 + $0x18] sm:$0xff]
          %v589 = vld [vmem:[%s579 + $0x20] sm:$0xff]
          %v590 = vld [vmem:[%s579 + $0x28] sm:$0xff]
          %v591 = vld [vmem:[%s579 + $0x30] sm:$0xff]
          %v592 = vld [vmem:[%s579 + $0x38] sm:$0xff]
          %v593 = vld [vmem:[%s579 + $0x40] sm:$0xff]
          %v594 = vld [vmem:[%s579 + $0x48] sm:$0xff]
          %v595 = vld [vmem:[%s579 + $0x50] sm:$0xff]
          %v596 = vld [vmem:[%s579 + $0x58] sm:$0xff]
          %v597 = vld [vmem:[%s579 + $0x60] sm:$0xff]
          %v598 = vld [vmem:[%s579 + $0x68] sm:$0xff]
          %v599 = vld [vmem:[%s579 + $0x70] sm:$0xff]
          %v600 = vld [vmem:[%s579 + $0x78] sm:$0xff]
          %v601 = vld [vmem:[%s579 + $0x80] sm:$0xff]
          %v602 = vld [vmem:[%s579 + $0x88] sm:$0xff]
          %v603 = vld [vmem:[%s579 + $0x90] sm:$0xff]
          %v604 = vld [vmem:[%s579 + $0x98] sm:$0xff]
          %v605 = vld [vmem:[%s579 + $0xa0] sm:$0xff]
          %v606 = vld [vmem:[%s579 + $0xa8] sm:$0xff]
          %v607 = vld [vmem:[%s579 + $0xb0] sm:$0xff]
          %v608 = vld [vmem:[%s579 + $0xb8] sm:$0xff]
          %v609 = vld [vmem:[%s579 + $0xc0] sm:$0xff]
          %v610 = vld [vmem:[%s579 + $0xc8] sm:$0xff]
          %v611 = vld [vmem:[%s579 + $0xd0] sm:$0xff]
          %v612 = vld [vmem:[%s579 + $0xd8] sm:$0xff]
          %v613 = vld [vmem:[%s579 + $0xe0] sm:$0xff]
          %v614 = vld [vmem:[%s579 + $0xe8] sm:$0xff]
          %v615 = vld [vmem:[%s579 + $0xf0] sm:$0xff]
          %v616 = vld [vmem:[%s579 + $0xf8] sm:$0xff]
          %v617 = vld [vmem:[%s579 + $0x100] sm:$0xff]
          %v618 = vld [vmem:[%s579 + $0x108] sm:$0xff]
          %v619 = vld [vmem:[%s579 + $0x110] sm:$0xff]
          %v620 = vld [vmem:[%s579 + $0x118] sm:$0xff]
          %v621 = vld [vmem:[%s579 + $0x120] sm:$0xff]
          %v622 = vld [vmem:[%s579 + $0x128] sm:$0xff]
          %v623 = vld [vmem:[%s579 + $0x130] sm:$0xff]
          %v624 = vld [vmem:[%s579 + $0x138] sm:$0xff]
          %v625 = vld [vmem:[%s579 + $0x140] sm:$0xff]
          %v626 = vld [vmem:[%s579 + $0x148] sm:$0xff]
          %v627 = vld [vmem:[%s579 + $0x150] sm:$0xff]
          %v628 = vld [vmem:[%s579 + $0x158] sm:$0xff]
          %v629 = vld [vmem:[%s579 + $0x160] sm:$0xff]
          %v630 = vld [vmem:[%s579 + $0x168] sm:$0xff]
          %v631 = vld [vmem:[%s579 + $0x170] sm:$0xff]
          %v632 = vld [vmem:[%s579 + $0x178] sm:$0xff]
          %v633 = vld [vmem:[%s579 + $0x180] sm:$0xff]
          %v634 = vld [vmem:[%s579 + $0x188] sm:$0xff]
          %v635 = vld [vmem:[%s579 + $0x190] sm:$0xff]
          %v636 = vld [vmem:[%s579 + $0x198] sm:$0xff]
          %v637 = vld [vmem:[%s579 + $0x1a0] sm:$0xff]
          %v638 = vld [vmem:[%s579 + $0x1a8] sm:$0xff]
          %v639 = vld [vmem:[%s579 + $0x1b0] sm:$0xff]
          %v640 = vld [vmem:[%s579 + $0x1b8] sm:$0xff]
          %v641 = vld [vmem:[%s579 + $0x1c0] sm:$0xff]
          %v642 = vld [vmem:[%s579 + $0x1c8] sm:$0xff]
          %v643 = vld [vmem:[%s579 + $0x1d0] sm:$0xff]
          %v644 = vld [vmem:[%s579 + $0x1d8] sm:$0xff]
          %v645 = vld [vmem:[%s579 + $0x1e0] sm:$0xff]
          %v646 = vld [vmem:[%s579 + $0x1e8] sm:$0xff]
          %v647 = vld [vmem:[%s579 + $0x1f0] sm:$0xff]
          %v648 = vld [vmem:[%s579 + $0x1f8] sm:$0xff]
          %v649 = vld [vmem:[%s579 + $0x200] sm:$0xff]
          %v650 = vld [vmem:[%s579 + $0x208] sm:$0xff]
          %v651 = vld [vmem:[%s579 + $0x210] sm:$0xff]
          %v652 = vld [vmem:[%s579 + $0x218] sm:$0xff]
          %v653 = vld [vmem:[%s579 + $0x220] sm:$0xff]
          %v654 = vld [vmem:[%s579 + $0x228] sm:$0xff]
          %v655 = vld [vmem:[%s579 + $0x230] sm:$0xff]
          %v656 = vld [vmem:[%s579 + $0x238] sm:$0xff]
          %v657 = vld [vmem:[%s579 + $0x240] sm:$0xff]
          %v658 = vld [vmem:[%s579 + $0x248] sm:$0xff]
          %v659 = vld [vmem:[%s579 + $0x250] sm:$0xff]
          %v660 = vld [vmem:[%s579 + $0x258] sm:$0xff]
          %v661 = vld [vmem:[%s579 + $0x260] sm:$0xff]
          %v662 = vld [vmem:[%s579 + $0x268] sm:$0xff]
          %v663 = vld [vmem:[%s579 + $0x270] sm:$0xff]
          %v664 = vld [vmem:[%s579 + $0x278] sm:$0xff]
          %v665 = vld [vmem:[%s579 + $0x280] sm:$0xff]
          %v666 = vld [vmem:[%s579 + $0x288] sm:$0xff]
          %v667 = vld [vmem:[%s579 + $0x290] sm:$0xff]
          %v668 = vld [vmem:[%s579 + $0x298] sm:$0xff]
          %v669 = vld [vmem:[%s579 + $0x2a0] sm:$0xff]
          %v670 = vld [vmem:[%s579 + $0x2a8] sm:$0xff]
          %v671 = vld [vmem:[%s579 + $0x2b0] sm:$0xff]
          %v672 = vld [vmem:[%s579 + $0x2b8] sm:$0xff]
          %v673 = vld [vmem:[%s579 + $0x2c0] sm:$0xff]
          %v674 = vld [vmem:[%s579 + $0x2c8] sm:$0xff]
          %v675 = vld [vmem:[%s579 + $0x2d0] sm:$0xff]
          %v676 = vld [vmem:[%s579 + $0x2d8] sm:$0xff]
          %v677 = vld [vmem:[%s579 + $0x2e0] sm:$0xff]
          %v678 = vld [vmem:[%s579 + $0x2e8] sm:$0xff]
          %v679 = vld [vmem:[%s579 + $0x2f0] sm:$0xff]
          %v680 = vld [vmem:[%s579 + $0x2f8] sm:$0xff]
          %v681 = vld [vmem:[%s579 + $0x300] sm:$0xff]
          %v682 = vld [vmem:[%s579 + $0x308] sm:$0xff]
          %v683 = vld [vmem:[%s579 + $0x310] sm:$0xff]
          %v684 = vld [vmem:[%s579 + $0x318] sm:$0xff]
          %v685 = vld [vmem:[%s579 + $0x320] sm:$0xff]
          %v686 = vld [vmem:[%s579 + $0x328] sm:$0xff]
          %v687 = vld [vmem:[%s579 + $0x330] sm:$0xff]
          %v688 = vld [vmem:[%s579 + $0x338] sm:$0xff]
          %v689 = vld [vmem:[%s579 + $0x340] sm:$0xff]
          %v690 = vld [vmem:[%s579 + $0x348] sm:$0xff]
          %v691 = vld [vmem:[%s579 + $0x350] sm:$0xff]
          %v692 = vld [vmem:[%s579 + $0x358] sm:$0xff]
          %v693 = vld [vmem:[%s579 + $0x360] sm:$0xff]
          %v694 = vld [vmem:[%s579 + $0x368] sm:$0xff]
          %v695 = vld [vmem:[%s579 + $0x370] sm:$0xff]
          %v696 = vld [vmem:[%s579 + $0x378] sm:$0xff]
          %v697 = vld [vmem:[%s579 + $0x380] sm:$0xff]
          %v698 = vld [vmem:[%s579 + $0x388] sm:$0xff]
          %v699 = vld [vmem:[%s579 + $0x390] sm:$0xff]
          %v700 = vld [vmem:[%s579 + $0x398] sm:$0xff]
          %v701 = vld [vmem:[%s579 + $0x3a0] sm:$0xff]
          %v702 = vld [vmem:[%s579 + $0x3a8] sm:$0xff]
          %v703 = vld [vmem:[%s579 + $0x3b0] sm:$0xff]
          %v704 = vld [vmem:[%s579 + $0x3b8] sm:$0xff]
          %v705 = vld [vmem:[%s579 + $0x3c0] sm:$0xff]
          %v706 = vld [vmem:[%s579 + $0x3c8] sm:$0xff]
          %v707 = vld [vmem:[%s579 + $0x3d0] sm:$0xff]
          %v708 = vld [vmem:[%s579 + $0x3d8] sm:$0xff]
          %v709 = vld [vmem:[%s579 + $0x3e0] sm:$0xff]
          %v710 = vld [vmem:[%s579 + $0x3e8] sm:$0xff]
          %v711 = vld [vmem:[%s579 + $0x3f0] sm:$0xff]
          %v712 = vld [vmem:[%s579 + $0x3f8] sm:$0xff]
          %vm713 = vcmask 261120
          %v714 = vsel %vm713, %v585, 0.0
          %v715 = vsel %vm713, %v586, 0.0
          %v716 = vadd.f32 %v714, %v715
          %v717 = vsel %vm713, %v587, 0.0
          %v718 = vadd.f32 %v716, %v717
          %v719 = vsel %vm713, %v588, 0.0
          %v720 = vadd.f32 %v718, %v719
          %v721 = vsel %vm713, %v589, 0.0
          %v722 = vadd.f32 %v720, %v721
          %v723 = vsel %vm713, %v590, 0.0
          %v724 = vadd.f32 %v722, %v723
          %v725 = vsel %vm713, %v591, 0.0
          %v726 = vadd.f32 %v724, %v725
          %v727 = vsel %vm713, %v592, 0.0
          %v728 = vadd.f32 %v726, %v727
          %v729 = vsel %vm713, %v593, 0.0
          %v730 = vadd.f32 %v728, %v729
          %v731 = vsel %vm713, %v594, 0.0
          %v732 = vadd.f32 %v730, %v731
          %v733 = vsel %vm713, %v595, 0.0
          %v734 = vadd.f32 %v732, %v733
          %v735 = vsel %vm713, %v596, 0.0
          %v736 = vadd.f32 %v734, %v735
          %v737 = vsel %vm713, %v597, 0.0
          %v738 = vadd.f32 %v736, %v737
          %v739 = vsel %vm713, %v598, 0.0
          %v740 = vadd.f32 %v738, %v739
          %v741 = vsel %vm713, %v599, 0.0
          %v742 = vadd.f32 %v740, %v741
          %v743 = vsel %vm713, %v600, 0.0
          %v744 = vadd.f32 %v742, %v743
          %v745 = vrot.slane %v744, 4
          %v746 = vadd.f32 %v744, %v745
          %v747 = vrot.slane %v746, 2
          %v748 = vadd.f32 %v746, %v747
          %v749 = vrot.slane %v748, 1
          %v750 = vadd.f32 %v748, %v749
          %v751 = vsel %vm713, %v601, 0.0
          %v752 = vsel %vm713, %v602, 0.0
          %v753 = vadd.f32 %v751, %v752
          %v754 = vsel %vm713, %v603, 0.0
          %v755 = vadd.f32 %v753, %v754
          %v756 = vsel %vm713, %v604, 0.0
          %v757 = vadd.f32 %v755, %v756
          %v758 = vsel %vm713, %v605, 0.0
          %v759 = vadd.f32 %v757, %v758
          %v760 = vsel %vm713, %v606, 0.0
          %v761 = vadd.f32 %v759, %v760
          %v762 = vsel %vm713, %v607, 0.0
          %v763 = vadd.f32 %v761, %v762
          %v764 = vsel %vm713, %v608, 0.0
          %v765 = vadd.f32 %v763, %v764
          %v766 = vsel %vm713, %v609, 0.0
          %v767 = vadd.f32 %v765, %v766
          %v768 = vsel %vm713, %v610, 0.0
          %v769 = vadd.f32 %v767, %v768
          %v770 = vsel %vm713, %v611, 0.0
          %v771 = vadd.f32 %v769, %v770
          %v772 = vsel %vm713, %v612, 0.0
          %v773 = vadd.f32 %v771, %v772
          %v774 = vsel %vm713, %v613, 0.0
          %v775 = vadd.f32 %v773, %v774
          %v776 = vsel %vm713, %v614, 0.0
          %v777 = vadd.f32 %v775, %v776
          %v778 = vsel %vm713, %v615, 0.0
          %v779 = vadd.f32 %v777, %v778
          %v780 = vsel %vm713, %v616, 0.0
          %v781 = vadd.f32 %v779, %v780
          %v782 = vrot.slane %v781, 4
          %v783 = vadd.f32 %v781, %v782
          %v784 = vrot.slane %v783, 2
          %v785 = vadd.f32 %v783, %v784
          %v786 = vrot.slane %v785, 1
          %v787 = vadd.f32 %v785, %v786
          %v788 = vsel %vm713, %v617, 0.0
          %v789 = vsel %vm713, %v618, 0.0
          %v790 = vadd.f32 %v788, %v789
          %v791 = vsel %vm713, %v619, 0.0
          %v792 = vadd.f32 %v790, %v791
          %v793 = vsel %vm713, %v620, 0.0
          %v794 = vadd.f32 %v792, %v793
          %v795 = vsel %vm713, %v621, 0.0
          %v796 = vadd.f32 %v794, %v795
          %v797 = vsel %vm713, %v622, 0.0
          %v798 = vadd.f32 %v796, %v797
          %v799 = vsel %vm713, %v623, 0.0
          %v800 = vadd.f32 %v798, %v799
          %v801 = vsel %vm713, %v624, 0.0
          %v802 = vadd.f32 %v800, %v801
          %v803 = vsel %vm713, %v625, 0.0
          %v804 = vadd.f32 %v802, %v803
          %v805 = vsel %vm713, %v626, 0.0
          %v806 = vadd.f32 %v804, %v805
          %v807 = vsel %vm713, %v627, 0.0
          %v808 = vadd.f32 %v806, %v807
          %v809 = vsel %vm713, %v628, 0.0
          %v810 = vadd.f32 %v808, %v809
          %v811 = vsel %vm713, %v629, 0.0
          %v812 = vadd.f32 %v810, %v811
          %v813 = vsel %vm713, %v630, 0.0
          %v814 = vadd.f32 %v812, %v813
          %v815 = vsel %vm713, %v631, 0.0
          %v816 = vadd.f32 %v814, %v815
          %v817 = vsel %vm713, %v632, 0.0
          %v818 = vadd.f32 %v816, %v817
          %v819 = vrot.slane %v818, 4
          %v820 = vadd.f32 %v818, %v819
          %v821 = vrot.slane %v820, 2
          %v822 = vadd.f32 %v820, %v821
          %v823 = vrot.slane %v822, 1
          %v824 = vadd.f32 %v822, %v823
          %v825 = vsel %vm713, %v633, 0.0
          %v826 = vsel %vm713, %v634, 0.0
          %v827 = vadd.f32 %v825, %v826
          %v828 = vsel %vm713, %v635, 0.0
          %v829 = vadd.f32 %v827, %v828
          %v830 = vsel %vm713, %v636, 0.0
          %v831 = vadd.f32 %v829, %v830
          %v832 = vsel %vm713, %v637, 0.0
          %v833 = vadd.f32 %v831, %v832
          %v834 = vsel %vm713, %v638, 0.0
          %v835 = vadd.f32 %v833, %v834
          %v836 = vsel %vm713, %v639, 0.0
          %v837 = vadd.f32 %v835, %v836
          %v838 = vsel %vm713, %v640, 0.0
          %v839 = vadd.f32 %v837, %v838
          %v840 = vsel %vm713, %v641, 0.0
          %v841 = vadd.f32 %v839, %v840
          %v842 = vsel %vm713, %v642, 0.0
          %v843 = vadd.f32 %v841, %v842
          %v844 = vsel %vm713, %v643, 0.0
          %v845 = vadd.f32 %v843, %v844
          %v846 = vsel %vm713, %v644, 0.0
          %v847 = vadd.f32 %v845, %v846
          %v848 = vsel %vm713, %v645, 0.0
          %v849 = vadd.f32 %v847, %v848
          %v850 = vsel %vm713, %v646, 0.0
          %v851 = vadd.f32 %v849, %v850
          %v852 = vsel %vm713, %v647, 0.0
          %v853 = vadd.f32 %v851, %v852
          %v854 = vsel %vm713, %v648, 0.0
          %v855 = vadd.f32 %v853, %v854
          %v856 = vrot.slane %v855, 4
          %v857 = vadd.f32 %v855, %v856
          %v858 = vrot.slane %v857, 2
          %v859 = vadd.f32 %v857, %v858
          %v860 = vrot.slane %v859, 1
          %v861 = vadd.f32 %v859, %v860
          %v862 = vsel %vm713, %v649, 0.0
          %v863 = vsel %vm713, %v650, 0.0
          %v864 = vadd.f32 %v862, %v863
          %v865 = vsel %vm713, %v651, 0.0
          %v866 = vadd.f32 %v864, %v865
          %v867 = vsel %vm713, %v652, 0.0
          %v868 = vadd.f32 %v866, %v867
          %v869 = vsel %vm713, %v653, 0.0
          %v870 = vadd.f32 %v868, %v869
          %v871 = vsel %vm713, %v654, 0.0
          %v872 = vadd.f32 %v870, %v871
          %v873 = vsel %vm713, %v655, 0.0
          %v874 = vadd.f32 %v872, %v873
          %v875 = vsel %vm713, %v656, 0.0
          %v876 = vadd.f32 %v874, %v875
          %v877 = vsel %vm713, %v657, 0.0
          %v878 = vadd.f32 %v876, %v877
          %v879 = vsel %vm713, %v658, 0.0
          %v880 = vadd.f32 %v878, %v879
          %v881 = vsel %vm713, %v659, 0.0
          %v882 = vadd.f32 %v880, %v881
          %v883 = vsel %vm713, %v660, 0.0
          %v884 = vadd.f32 %v882, %v883
          %v885 = vsel %vm713, %v661, 0.0
          %v886 = vadd.f32 %v884, %v885
          %v887 = vsel %vm713, %v662, 0.0
          %v888 = vadd.f32 %v886, %v887
          %v889 = vsel %vm713, %v663, 0.0
          %v890 = vadd.f32 %v888, %v889
          %v891 = vsel %vm713, %v664, 0.0
          %v892 = vadd.f32 %v890, %v891
          %v893 = vrot.slane %v892, 4
          %v894 = vadd.f32 %v892, %v893
          %v895 = vrot.slane %v894, 2
          %v896 = vadd.f32 %v894, %v895
          %v897 = vrot.slane %v896, 1
          %v898 = vadd.f32 %v896, %v897
          %v899 = vsel %vm713, %v665, 0.0
          %v900 = vsel %vm713, %v666, 0.0
          %v901 = vadd.f32 %v899, %v900
          %v902 = vsel %vm713, %v667, 0.0
          %v903 = vadd.f32 %v901, %v902
          %v904 = vsel %vm713, %v668, 0.0
          %v905 = vadd.f32 %v903, %v904
          %v906 = vsel %vm713, %v669, 0.0
          %v907 = vadd.f32 %v905, %v906
          %v908 = vsel %vm713, %v670, 0.0
          %v909 = vadd.f32 %v907, %v908
          %v910 = vsel %vm713, %v671, 0.0
          %v911 = vadd.f32 %v909, %v910
          %v912 = vsel %vm713, %v672, 0.0
          %v913 = vadd.f32 %v911, %v912
          %v914 = vsel %vm713, %v673, 0.0
          %v915 = vadd.f32 %v913, %v914
          %v916 = vsel %vm713, %v674, 0.0
          %v917 = vadd.f32 %v915, %v916
          %v918 = vsel %vm713, %v675, 0.0
          %v919 = vadd.f32 %v917, %v918
          %v920 = vsel %vm713, %v676, 0.0
          %v921 = vadd.f32 %v919, %v920
          %v922 = vsel %vm713, %v677, 0.0
          %v923 = vadd.f32 %v921, %v922
          %v924 = vsel %vm713, %v678, 0.0
          %v925 = vadd.f32 %v923, %v924
          %v926 = vsel %vm713, %v679, 0.0
          %v927 = vadd.f32 %v925, %v926
          %v928 = vsel %vm713, %v680, 0.0
          %v929 = vadd.f32 %v927, %v928
          %v930 = vrot.slane %v929, 4
          %v931 = vadd.f32 %v929, %v930
          %v932 = vrot.slane %v931, 2
          %v933 = vadd.f32 %v931, %v932
          %v934 = vrot.slane %v933, 1
          %v935 = vadd.f32 %v933, %v934
          %v936 = vsel %vm713, %v681, 0.0
          %v937 = vsel %vm713, %v682, 0.0
          %v938 = vadd.f32 %v936, %v937
          %v939 = vsel %vm713, %v683, 0.0
          %v940 = vadd.f32 %v938, %v939
          %v941 = vsel %vm713, %v684, 0.0
          %v942 = vadd.f32 %v940, %v941
          %v943 = vsel %vm713, %v685, 0.0
          %v944 = vadd.f32 %v942, %v943
          %v945 = vsel %vm713, %v686, 0.0
          %v946 = vadd.f32 %v944, %v945
          %v947 = vsel %vm713, %v687, 0.0
          %v948 = vadd.f32 %v946, %v947
          %v949 = vsel %vm713, %v688, 0.0
          %v950 = vadd.f32 %v948, %v949
          %v951 = vsel %vm713, %v689, 0.0
          %v952 = vadd.f32 %v950, %v951
          %v953 = vsel %vm713, %v690, 0.0
          %v954 = vadd.f32 %v952, %v953
          %v955 = vsel %vm713, %v691, 0.0
          %v956 = vadd.f32 %v954, %v955
          %v957 = vsel %vm713, %v692, 0.0
          %v958 = vadd.f32 %v956, %v957
          %v959 = vsel %vm713, %v693, 0.0
          %v960 = vadd.f32 %v958, %v959
          %v961 = vsel %vm713, %v694, 0.0
          %v962 = vadd.f32 %v960, %v961
          %v963 = vsel %vm713, %v695, 0.0
          %v964 = vadd.f32 %v962, %v963
          %v965 = vsel %vm713, %v696, 0.0
          %v966 = vadd.f32 %v964, %v965
          %v967 = vrot.slane %v966, 4
          %v968 = vadd.f32 %v966, %v967
          %v969 = vrot.slane %v968, 2
          %v970 = vadd.f32 %v968, %v969
          %v971 = vrot.slane %v970, 1
          %v972 = vadd.f32 %v970, %v971
          %v973 = vsel %vm713, %v697, 0.0
          %v974 = vsel %vm713, %v698, 0.0
          %v975 = vadd.f32 %v973, %v974
          %v976 = vsel %vm713, %v699, 0.0
          %v977 = vadd.f32 %v975, %v976
          %v978 = vsel %vm713, %v700, 0.0
          %v979 = vadd.f32 %v977, %v978
          %v980 = vsel %vm713, %v701, 0.0
          %v981 = vadd.f32 %v979, %v980
          %v982 = vsel %vm713, %v702, 0.0
          %v983 = vadd.f32 %v981, %v982
          %v984 = vsel %vm713, %v703, 0.0
          %v985 = vadd.f32 %v983, %v984
          %v986 = vsel %vm713, %v704, 0.0
          %v987 = vadd.f32 %v985, %v986
          %v988 = vsel %vm713, %v705, 0.0
          %v989 = vadd.f32 %v987, %v988
          %v990 = vsel %vm713, %v706, 0.0
          %v991 = vadd.f32 %v989, %v990
          %v992 = vsel %vm713, %v707, 0.0
          %v993 = vadd.f32 %v991, %v992
          %v994 = vsel %vm713, %v708, 0.0
          %v995 = vadd.f32 %v993, %v994
          %v996 = vsel %vm713, %v709, 0.0
          %v997 = vadd.f32 %v995, %v996
          %v998 = vsel %vm713, %v710, 0.0
          %v999 = vadd.f32 %v997, %v998
          %v1000 = vsel %vm713, %v711, 0.0
          %v1001 = vadd.f32 %v999, %v1000
          %v1002 = vsel %vm713, %v712, 0.0
          %v1003 = vadd.f32 %v1001, %v1002
          %v1004 = vrot.slane %v1003, 4
          %v1005 = vadd.f32 %v1003, %v1004
          %v1006 = vrot.slane %v1005, 2
          %v1007 = vadd.f32 %v1005, %v1006
          %v1008 = vrot.slane %v1007, 1
          %v1009 = vadd.f32 %v1007, %v1008
          %v1010 = vmul.f32 %v750, 0.0625
          %v1011 = vmul.f32 %v787, 0.0625
          %v1012 = vmul.f32 %v824, 0.0625
          %v1013 = vmul.f32 %v861, 0.0625
          %v1014 = vmul.f32 %v898, 0.0625
          %v1015 = vmul.f32 %v935, 0.0625
          %v1016 = vmul.f32 %v972, 0.0625
          %v1017 = vmul.f32 %v1009, 0.0625
          %v1018 = vld [vmem:[%s3] sm:$0xff]
          %v1019 = vld [vmem:[%s3 + $0x8] sm:$0xff]
          %v1020 = vld [vmem:[%s3 + $0x10] sm:$0xff]
          %v1021 = vld [vmem:[%s3 + $0x18] sm:$0xff]
          %v1022 = vld [vmem:[%s4] sm:$0x1]
          %v1024 = vperm.slane %v1022, 0
          %vm1034 = vcmask 1041409
          %v1035 = vsel %vm1034, %v1011, %v1010
          %vm1036 = vcmask 1042434
          %v1037 = vsel %vm1036, %v1012, %v1035
          %vm1038 = vcmask 1043459
          %v1039 = vsel %vm1038, %v1013, %v1037
          %vm1040 = vcmask 1044484
          %v1041 = vsel %vm1040, %v1014, %v1039
          %vm1042 = vcmask 1045509
          %v1043 = vsel %vm1042, %v1015, %v1041
          %vm1044 = vcmask 1046534
          %v1045 = vsel %vm1044, %v1016, %v1043
          %vm1046 = vcmask 1047559
          %v1047 = vsel %vm1046, %v1017, %v1045
          %v1048 = vsel %vm713, %v1047, 0
          %1050 = vmatpush.msra.mxu0 0.0
          %1051 = vmatpush.msra.mxu0 0.0
          %1052 = vmatpush.msra.mxu0 0.0
          %1053 = vmatpush.msra.mxu0 0.0
          %1054 = vmatpush.msra.mxu0 0.0
          %1055 = vmatpush.msra.mxu0 0.0
          %1056 = vmatpush.msra.mxu0 0.0
          %1057 = vmatpush.msra.mxu0 0.0
          %1058 = vmatpush.msra.mxu0 0.0
          %1059 = vmatpush.msra.mxu0 0.0
          %1060 = vmatpush.msra.mxu0 0.0
          %1061 = vmatpush.msra.mxu0 0.0
          %1062 = vmatpush.msra.mxu0 %v1021
          %1063 = vmatpush.msra.mxu0 %v1020
          %1064 = vmatpush.msra.mxu0 %v1019
          %1065 = vmatpush.msra.mxu0 %v1018
          %1066 = vmatmul.f32.gmra.mxu0 %v1048
          %v1067 = vpop.f32.mrf.mxu0
          %v1068 = vadd.f32 %v1024, %v1067
          %1069 = vdwg.mxu0
          %1070 = vst.msk [vmem:[#allocation2] sm:$0xff] %vm713, %v1068
          %1072 = vrot.lane.b32.xlu0 %v1068, 96
          %v1073 = vpop.permute.xlu0 %1072
          %1075 = vst.msk [vmem:[#allocation3] sm:$0xff] %vm713, %v1073
          %v1076 = vld [vmem:[%s5] sm:$0xff]
          %v1077 = vld [vmem:[%s5 + $0x8] sm:$0xff]
          %v1078 = vld [vmem:[%s5 + $0x10] sm:$0xff]
          %v1079 = vld [vmem:[%s5 + $0x18] sm:$0xff]
          %v1080 = vld [vmem:[%s6] sm:$0x1]
          %v1082 = vperm.slane %v1080, 0
          %v1085 = vsel %vm713, %v585, 0
          %v1088 = vsel %vm713, %v586, 0
          %v1091 = vsel %vm713, %v587, 0
          %v1094 = vsel %vm713, %v588, 0
          %v1097 = vsel %vm713, %v589, 0
          %v1100 = vsel %vm713, %v590, 0
          %v1103 = vsel %vm713, %v591, 0
          %v1106 = vsel %vm713, %v592, 0
          %v1109 = vsel %vm713, %v593, 0
          %v1112 = vsel %vm713, %v594, 0
          %v1115 = vsel %vm713, %v595, 0
          %v1118 = vsel %vm713, %v596, 0
          %v1121 = vsel %vm713, %v597, 0
          %v1124 = vsel %vm713, %v598, 0
          %v1127 = vsel %vm713, %v599, 0
          %v1130 = vsel %vm713, %v600, 0
          %v1133 = vsel %vm713, %v601, 0
          %v1136 = vsel %vm713, %v602, 0
          %v1139 = vsel %vm713, %v603, 0
          %v1142 = vsel %vm713, %v604, 0
          %v1145 = vsel %vm713, %v605, 0
          %v1148 = vsel %vm713, %v606, 0
          %v1151 = vsel %vm713, %v607, 0
          %v1154 = vsel %vm713, %v608, 0
          %v1157 = vsel %vm713, %v609, 0
          %v1160 = vsel %vm713, %v610, 0
          %v1163 = vsel %vm713, %v611, 0
          %v1166 = vsel %vm713, %v612, 0
          %v1169 = vsel %vm713, %v613, 0
          %v1172 = vsel %vm713, %v614, 0
          %v1175 = vsel %vm713, %v615, 0
          %v1178 = vsel %vm713, %v616, 0
          %v1181 = vsel %vm713, %v617, 0
          %v1184 = vsel %vm713, %v618, 0
          %v1187 = vsel %vm713, %v619, 0
          %v1190 = vsel %vm713, %v620, 0
          %v1193 = vsel %vm713, %v621, 0
          %v1196 = vsel %vm713, %v622, 0
          %v1199 = vsel %vm713, %v623, 0
          %v1202 = vsel %vm713, %v624, 0
          %v1205 = vsel %vm713, %v625, 0
          %v1208 = vsel %vm713, %v626, 0
          %v1211 = vsel %vm713, %v627, 0
          %v1214 = vsel %vm713, %v628, 0
          %v1217 = vsel %vm713, %v629, 0
          %v1220 = vsel %vm713, %v630, 0
          %v1223 = vsel %vm713, %v631, 0
          %v1226 = vsel %vm713, %v632, 0
          %v1229 = vsel %vm713, %v633, 0
          %v1232 = vsel %vm713, %v634, 0
          %v1235 = vsel %vm713, %v635, 0
          %v1238 = vsel %vm713, %v636, 0
          %v1241 = vsel %vm713, %v637, 0
          %v1244 = vsel %vm713, %v638, 0
          %v1247 = vsel %vm713, %v639, 0
          %v1250 = vsel %vm713, %v640, 0
          %v1253 = vsel %vm713, %v641, 0
          %v1256 = vsel %vm713, %v642, 0
          %v1259 = vsel %vm713, %v643, 0
          %v1262 = vsel %vm713, %v644, 0
          %v1265 = vsel %vm713, %v645, 0
          %v1268 = vsel %vm713, %v646, 0
          %v1271 = vsel %vm713, %v647, 0
          %v1274 = vsel %vm713, %v648, 0
          %v1277 = vsel %vm713, %v649, 0
          %v1280 = vsel %vm713, %v650, 0
          %v1283 = vsel %vm713, %v651, 0
          %v1286 = vsel %vm713, %v652, 0
          %v1289 = vsel %vm713, %v653, 0
          %v1292 = vsel %vm713, %v654, 0
          %v1295 = vsel %vm713, %v655, 0
          %v1298 = vsel %vm713, %v656, 0
          %v1301 = vsel %vm713, %v657, 0
          %v1304 = vsel %vm713, %v658, 0
          %v1307 = vsel %vm713, %v659, 0
          %v1310 = vsel %vm713, %v660, 0
          %v1313 = vsel %vm713, %v661, 0
          %v1316 = vsel %vm713, %v662, 0
          %v1319 = vsel %vm713, %v663, 0
          %v1322 = vsel %vm713, %v664, 0
          %v1325 = vsel %vm713, %v665, 0
          %v1328 = vsel %vm713, %v666, 0
          %v1331 = vsel %vm713, %v667, 0
          %v1334 = vsel %vm713, %v668, 0
          %v1337 = vsel %vm713, %v669, 0
          %v1340 = vsel %vm713, %v670, 0
          %v1343 = vsel %vm713, %v671, 0
          %v1346 = vsel %vm713, %v672, 0
          %v1349 = vsel %vm713, %v673, 0
          %v1352 = vsel %vm713, %v674, 0
          %v1355 = vsel %vm713, %v675, 0
          %v1358 = vsel %vm713, %v676, 0
          %v1361 = vsel %vm713, %v677, 0
          %v1364 = vsel %vm713, %v678, 0
          %v1367 = vsel %vm713, %v679, 0
          %v1370 = vsel %vm713, %v680, 0
          %v1373 = vsel %vm713, %v681, 0
          %v1376 = vsel %vm713, %v682, 0
          %v1379 = vsel %vm713, %v683, 0
          %v1382 = vsel %vm713, %v684, 0
          %v1385 = vsel %vm713, %v685, 0
          %v1388 = vsel %vm713, %v686, 0
          %v1391 = vsel %vm713, %v687, 0
          %v1394 = vsel %vm713, %v688, 0
          %v1397 = vsel %vm713, %v689, 0
          %v1400 = vsel %vm713, %v690, 0
          %v1403 = vsel %vm713, %v691, 0
          %v1406 = vsel %vm713, %v692, 0
          %v1409 = vsel %vm713, %v693, 0
          %v1412 = vsel %vm713, %v694, 0
          %v1415 = vsel %vm713, %v695, 0
          %v1418 = vsel %vm713, %v696, 0
          %v1421 = vsel %vm713, %v697, 0
          %v1424 = vsel %vm713, %v698, 0
          %v1427 = vsel %vm713, %v699, 0
          %v1430 = vsel %vm713, %v700, 0
          %v1433 = vsel %vm713, %v701, 0
          %v1436 = vsel %vm713, %v702, 0
          %v1439 = vsel %vm713, %v703, 0
          %v1442 = vsel %vm713, %v704, 0
          %v1445 = vsel %vm713, %v705, 0
          %v1448 = vsel %vm713, %v706, 0
          %v1451 = vsel %vm713, %v707, 0
          %v1454 = vsel %vm713, %v708, 0
          %v1457 = vsel %vm713, %v709, 0
          %v1460 = vsel %vm713, %v710, 0
          %v1463 = vsel %vm713, %v711, 0
          %v1466 = vsel %vm713, %v712, 0
          %1468 = vmatpush.msra.mxu0 0.0
          %1469 = vmatpush.msra.mxu0 0.0
          %1470 = vmatpush.msra.mxu0 0.0
          %1471 = vmatpush.msra.mxu0 0.0
          %1472 = vmatpush.msra.mxu0 0.0
          %1473 = vmatpush.msra.mxu0 0.0
          %1474 = vmatpush.msra.mxu0 0.0
          %1475 = vmatpush.msra.mxu0 0.0
          %1476 = vmatpush.msra.mxu0 0.0
          %1477 = vmatpush.msra.mxu0 0.0
          %1478 = vmatpush.msra.mxu0 0.0
          %1479 = vmatpush.msra.mxu0 0.0
          %1480 = vmatpush.msra.mxu0 %v1079
          %1481 = vmatpush.msra.mxu0 %v1078
          %1482 = vmatpush.msra.mxu0 %v1077
          %1483 = vmatpush.msra.mxu0 %v1076
          %1484 = vmatmul.f32.gmra.mxu0 %v1085
          %v1485 = vpop.f32.mrf.mxu0
          %v1486 = vadd.f32 %v1082, %v1485
          %1487 = vmatmul.f32.gmra.mxu0 %v1088
          %v1488 = vpop.f32.mrf.mxu0
          %v1489 = vadd.f32 %v1082, %v1488
          %1490 = vmatmul.f32.gmra.mxu0 %v1091
          %v1491 = vpop.f32.mrf.mxu0
          %v1492 = vadd.f32 %v1082, %v1491
          %1493 = vmatmul.f32.gmra.mxu0 %v1094
          %v1494 = vpop.f32.mrf.mxu0
          %v1495 = vadd.f32 %v1082, %v1494
          %1496 = vmatmul.f32.gmra.mxu0 %v1097
          %v1497 = vpop.f32.mrf.mxu0
          %v1498 = vadd.f32 %v1082, %v1497
          %1499 = vmatmul.f32.gmra.mxu0 %v1100
          %v1500 = vpop.f32.mrf.mxu0
          %v1501 = vadd.f32 %v1082, %v1500
          %1502 = vmatmul.f32.gmra.mxu0 %v1103
          %v1503 = vpop.f32.mrf.mxu0
          %v1504 = vadd.f32 %v1082, %v1503
          %1505 = vmatmul.f32.gmra.mxu0 %v1106
          %v1506 = vpop.f32.mrf.mxu0
          %v1507 = vadd.f32 %v1082, %v1506
          %1508 = vmatmul.f32.gmra.mxu0 %v1109
          %v1509 = vpop.f32.mrf.mxu0
          %v1510 = vadd.f32 %v1082, %v1509
          %1511 = vmatmul.f32.gmra.mxu0 %v1112
          %v1512 = vpop.f32.mrf.mxu0
          %v1513 = vadd.f32 %v1082, %v1512
          %1514 = vmatmul.f32.gmra.mxu0 %v1115
          %v1515 = vpop.f32.mrf.mxu0
          %v1516 = vadd.f32 %v1082, %v1515
          %1517 = vmatmul.f32.gmra.mxu0 %v1118
          %v1518 = vpop.f32.mrf.mxu0
          %v1519 = vadd.f32 %v1082, %v1518
          %1520 = vmatmul.f32.gmra.mxu0 %v1121
          %v1521 = vpop.f32.mrf.mxu0
          %v1522 = vadd.f32 %v1082, %v1521
          %1523 = vmatmul.f32.gmra.mxu0 %v1124
          %v1524 = vpop.f32.mrf.mxu0
          %v1525 = vadd.f32 %v1082, %v1524
          %1526 = vmatmul.f32.gmra.mxu0 %v1127
          %v1527 = vpop.f32.mrf.mxu0
          %v1528 = vadd.f32 %v1082, %v1527
          %1529 = vmatmul.f32.gmra.mxu0 %v1130
          %v1530 = vpop.f32.mrf.mxu0
          %v1531 = vadd.f32 %v1082, %v1530
          %1532 = vmatmul.f32.gmra.mxu0 %v1133
          %v1533 = vpop.f32.mrf.mxu0
          %v1534 = vadd.f32 %v1082, %v1533
          %1535 = vmatmul.f32.gmra.mxu0 %v1136
          %v1536 = vpop.f32.mrf.mxu0
          %v1537 = vadd.f32 %v1082, %v1536
          %1538 = vmatmul.f32.gmra.mxu0 %v1139
          %v1539 = vpop.f32.mrf.mxu0
          %v1540 = vadd.f32 %v1082, %v1539
          %1541 = vmatmul.f32.gmra.mxu0 %v1142
          %v1542 = vpop.f32.mrf.mxu0
          %v1543 = vadd.f32 %v1082, %v1542
          %1544 = vmatmul.f32.gmra.mxu0 %v1145
          %v1545 = vpop.f32.mrf.mxu0
          %v1546 = vadd.f32 %v1082, %v1545
          %1547 = vmatmul.f32.gmra.mxu0 %v1148
          %v1548 = vpop.f32.mrf.mxu0
          %v1549 = vadd.f32 %v1082, %v1548
          %1550 = vmatmul.f32.gmra.mxu0 %v1151
          %v1551 = vpop.f32.mrf.mxu0
          %v1552 = vadd.f32 %v1082, %v1551
          %1553 = vmatmul.f32.gmra.mxu0 %v1154
          %v1554 = vpop.f32.mrf.mxu0
          %v1555 = vadd.f32 %v1082, %v1554
          %1556 = vmatmul.f32.gmra.mxu0 %v1157
          %v1557 = vpop.f32.mrf.mxu0
          %v1558 = vadd.f32 %v1082, %v1557
          %1559 = vmatmul.f32.gmra.mxu0 %v1160
          %v1560 = vpop.f32.mrf.mxu0
          %v1561 = vadd.f32 %v1082, %v1560
          %1562 = vmatmul.f32.gmra.mxu0 %v1163
          %v1563 = vpop.f32.mrf.mxu0
          %v1564 = vadd.f32 %v1082, %v1563
          %1565 = vmatmul.f32.gmra.mxu0 %v1166
          %v1566 = vpop.f32.mrf.mxu0
          %v1567 = vadd.f32 %v1082, %v1566
          %1568 = vmatmul.f32.gmra.mxu0 %v1169
          %v1569 = vpop.f32.mrf.mxu0
          %v1570 = vadd.f32 %v1082, %v1569
          %1571 = vmatmul.f32.gmra.mxu0 %v1172
          %v1572 = vpop.f32.mrf.mxu0
          %v1573 = vadd.f32 %v1082, %v1572
          %1574 = vmatmul.f32.gmra.mxu0 %v1175
          %v1575 = vpop.f32.mrf.mxu0
          %v1576 = vadd.f32 %v1082, %v1575
          %1577 = vmatmul.f32.gmra.mxu0 %v1178
          %v1578 = vpop.f32.mrf.mxu0
          %v1579 = vadd.f32 %v1082, %v1578
          %1580 = vmatmul.f32.gmra.mxu0 %v1181
          %v1581 = vpop.f32.mrf.mxu0
          %v1582 = vadd.f32 %v1082, %v1581
          %1583 = vmatmul.f32.gmra.mxu0 %v1184
          %v1584 = vpop.f32.mrf.mxu0
          %v1585 = vadd.f32 %v1082, %v1584
          %1586 = vmatmul.f32.gmra.mxu0 %v1187
          %v1587 = vpop.f32.mrf.mxu0
          %v1588 = vadd.f32 %v1082, %v1587
          %1589 = vmatmul.f32.gmra.mxu0 %v1190
          %v1590 = vpop.f32.mrf.mxu0
          %v1591 = vadd.f32 %v1082, %v1590
          %1592 = vmatmul.f32.gmra.mxu0 %v1193
          %v1593 = vpop.f32.mrf.mxu0
          %v1594 = vadd.f32 %v1082, %v1593
          %1595 = vmatmul.f32.gmra.mxu0 %v1196
          %v1596 = vpop.f32.mrf.mxu0
          %v1597 = vadd.f32 %v1082, %v1596
          %1598 = vmatmul.f32.gmra.mxu0 %v1199
          %v1599 = vpop.f32.mrf.mxu0
          %v1600 = vadd.f32 %v1082, %v1599
          %1601 = vmatmul.f32.gmra.mxu0 %v1202
          %v1602 = vpop.f32.mrf.mxu0
          %v1603 = vadd.f32 %v1082, %v1602
          %1604 = vmatmul.f32.gmra.mxu0 %v1205
          %v1605 = vpop.f32.mrf.mxu0
          %v1606 = vadd.f32 %v1082, %v1605
          %1607 = vmatmul.f32.gmra.mxu0 %v1208
          %v1608 = vpop.f32.mrf.mxu0
          %v1609 = vadd.f32 %v1082, %v1608
          %1610 = vmatmul.f32.gmra.mxu0 %v1211
          %v1611 = vpop.f32.mrf.mxu0
          %v1612 = vadd.f32 %v1082, %v1611
          %1613 = vmatmul.f32.gmra.mxu0 %v1214
          %v1614 = vpop.f32.mrf.mxu0
          %v1615 = vadd.f32 %v1082, %v1614
          %1616 = vmatmul.f32.gmra.mxu0 %v1217
          %v1617 = vpop.f32.mrf.mxu0
          %v1618 = vadd.f32 %v1082, %v1617
          %1619 = vmatmul.f32.gmra.mxu0 %v1220
          %v1620 = vpop.f32.mrf.mxu0
          %v1621 = vadd.f32 %v1082, %v1620
          %1622 = vmatmul.f32.gmra.mxu0 %v1223
          %v1623 = vpop.f32.mrf.mxu0
          %v1624 = vadd.f32 %v1082, %v1623
          %1625 = vmatmul.f32.gmra.mxu0 %v1226
          %v1626 = vpop.f32.mrf.mxu0
          %v1627 = vadd.f32 %v1082, %v1626
          %1628 = vmatmul.f32.gmra.mxu0 %v1229
          %v1629 = vpop.f32.mrf.mxu0
          %v1630 = vadd.f32 %v1082, %v1629
          %1631 = vmatmul.f32.gmra.mxu0 %v1232
          %v1632 = vpop.f32.mrf.mxu0
          %v1633 = vadd.f32 %v1082, %v1632
          %1634 = vmatmul.f32.gmra.mxu0 %v1235
          %v1635 = vpop.f32.mrf.mxu0
          %v1636 = vadd.f32 %v1082, %v1635
          %1637 = vmatmul.f32.gmra.mxu0 %v1238
          %v1638 = vpop.f32.mrf.mxu0
          %v1639 = vadd.f32 %v1082, %v1638
          %1640 = vmatmul.f32.gmra.mxu0 %v1241
          %v1641 = vpop.f32.mrf.mxu0
          %v1642 = vadd.f32 %v1082, %v1641
          %1643 = vmatmul.f32.gmra.mxu0 %v1244
          %v1644 = vpop.f32.mrf.mxu0
          %v1645 = vadd.f32 %v1082, %v1644
          %1646 = vmatmul.f32.gmra.mxu0 %v1247
          %v1647 = vpop.f32.mrf.mxu0
          %v1648 = vadd.f32 %v1082, %v1647
          %1649 = vmatmul.f32.gmra.mxu0 %v1250
          %v1650 = vpop.f32.mrf.mxu0
          %v1651 = vadd.f32 %v1082, %v1650
          %1652 = vmatmul.f32.gmra.mxu0 %v1253
          %v1653 = vpop.f32.mrf.mxu0
          %v1654 = vadd.f32 %v1082, %v1653
          %1655 = vmatmul.f32.gmra.mxu0 %v1256
          %v1656 = vpop.f32.mrf.mxu0
          %v1657 = vadd.f32 %v1082, %v1656
          %1658 = vmatmul.f32.gmra.mxu0 %v1259
          %v1659 = vpop.f32.mrf.mxu0
          %v1660 = vadd.f32 %v1082, %v1659
          %1661 = vmatmul.f32.gmra.mxu0 %v1262
          %v1662 = vpop.f32.mrf.mxu0
          %v1663 = vadd.f32 %v1082, %v1662
          %1664 = vmatmul.f32.gmra.mxu0 %v1265
          %v1665 = vpop.f32.mrf.mxu0
          %v1666 = vadd.f32 %v1082, %v1665
          %1667 = vmatmul.f32.gmra.mxu0 %v1268
          %v1668 = vpop.f32.mrf.mxu0
          %v1669 = vadd.f32 %v1082, %v1668
          %1670 = vmatmul.f32.gmra.mxu0 %v1271
          %v1671 = vpop.f32.mrf.mxu0
          %v1672 = vadd.f32 %v1082, %v1671
          %1673 = vmatmul.f32.gmra.mxu0 %v1274
          %v1674 = vpop.f32.mrf.mxu0
          %v1675 = vadd.f32 %v1082, %v1674
          %1676 = vmatmul.f32.gmra.mxu0 %v1277
          %v1677 = vpop.f32.mrf.mxu0
          %v1678 = vadd.f32 %v1082, %v1677
          %1679 = vmatmul.f32.gmra.mxu0 %v1280
          %v1680 = vpop.f32.mrf.mxu0
          %v1681 = vadd.f32 %v1082, %v1680
          %1682 = vmatmul.f32.gmra.mxu0 %v1283
          %v1683 = vpop.f32.mrf.mxu0
          %v1684 = vadd.f32 %v1082, %v1683
          %1685 = vmatmul.f32.gmra.mxu0 %v1286
          %v1686 = vpop.f32.mrf.mxu0
          %v1687 = vadd.f32 %v1082, %v1686
          %1688 = vmatmul.f32.gmra.mxu0 %v1289
          %v1689 = vpop.f32.mrf.mxu0
          %v1690 = vadd.f32 %v1082, %v1689
          %1691 = vmatmul.f32.gmra.mxu0 %v1292
          %v1692 = vpop.f32.mrf.mxu0
          %v1693 = vadd.f32 %v1082, %v1692
          %1694 = vmatmul.f32.gmra.mxu0 %v1295
          %v1695 = vpop.f32.mrf.mxu0
          %v1696 = vadd.f32 %v1082, %v1695
          %1697 = vmatmul.f32.gmra.mxu0 %v1298
          %v1698 = vpop.f32.mrf.mxu0
          %v1699 = vadd.f32 %v1082, %v1698
          %1700 = vmatmul.f32.gmra.mxu0 %v1301
          %v1701 = vpop.f32.mrf.mxu0
          %v1702 = vadd.f32 %v1082, %v1701
          %1703 = vmatmul.f32.gmra.mxu0 %v1304
          %v1704 = vpop.f32.mrf.mxu0
          %v1705 = vadd.f32 %v1082, %v1704
          %1706 = vmatmul.f32.gmra.mxu0 %v1307
          %v1707 = vpop.f32.mrf.mxu0
          %v1708 = vadd.f32 %v1082, %v1707
          %1709 = vmatmul.f32.gmra.mxu0 %v1310
          %v1710 = vpop.f32.mrf.mxu0
          %v1711 = vadd.f32 %v1082, %v1710
          %1712 = vmatmul.f32.gmra.mxu0 %v1313
          %v1713 = vpop.f32.mrf.mxu0
          %v1714 = vadd.f32 %v1082, %v1713
          %1715 = vmatmul.f32.gmra.mxu0 %v1316
          %v1716 = vpop.f32.mrf.mxu0
          %v1717 = vadd.f32 %v1082, %v1716
          %1718 = vmatmul.f32.gmra.mxu0 %v1319
          %v1719 = vpop.f32.mrf.mxu0
          %v1720 = vadd.f32 %v1082, %v1719
          %1721 = vmatmul.f32.gmra.mxu0 %v1322
          %v1722 = vpop.f32.mrf.mxu0
          %v1723 = vadd.f32 %v1082, %v1722
          %1724 = vmatmul.f32.gmra.mxu0 %v1325
          %v1725 = vpop.f32.mrf.mxu0
          %v1726 = vadd.f32 %v1082, %v1725
          %1727 = vmatmul.f32.gmra.mxu0 %v1328
          %v1728 = vpop.f32.mrf.mxu0
          %v1729 = vadd.f32 %v1082, %v1728
          %1730 = vmatmul.f32.gmra.mxu0 %v1331
          %v1731 = vpop.f32.mrf.mxu0
          %v1732 = vadd.f32 %v1082, %v1731
          %1733 = vmatmul.f32.gmra.mxu0 %v1334
          %v1734 = vpop.f32.mrf.mxu0
          %v1735 = vadd.f32 %v1082, %v1734
          %1736 = vmatmul.f32.gmra.mxu0 %v1337
          %v1737 = vpop.f32.mrf.mxu0
          %v1738 = vadd.f32 %v1082, %v1737
          %1739 = vmatmul.f32.gmra.mxu0 %v1340
          %v1740 = vpop.f32.mrf.mxu0
          %v1741 = vadd.f32 %v1082, %v1740
          %1742 = vmatmul.f32.gmra.mxu0 %v1343
          %v1743 = vpop.f32.mrf.mxu0
          %v1744 = vadd.f32 %v1082, %v1743
          %1745 = vmatmul.f32.gmra.mxu0 %v1346
          %v1746 = vpop.f32.mrf.mxu0
          %v1747 = vadd.f32 %v1082, %v1746
          %1748 = vmatmul.f32.gmra.mxu0 %v1349
          %v1749 = vpop.f32.mrf.mxu0
          %v1750 = vadd.f32 %v1082, %v1749
          %1751 = vmatmul.f32.gmra.mxu0 %v1352
          %v1752 = vpop.f32.mrf.mxu0
          %v1753 = vadd.f32 %v1082, %v1752
          %1754 = vmatmul.f32.gmra.mxu0 %v1355
          %v1755 = vpop.f32.mrf.mxu0
          %v1756 = vadd.f32 %v1082, %v1755
          %1757 = vmatmul.f32.gmra.mxu0 %v1358
          %v1758 = vpop.f32.mrf.mxu0
          %v1759 = vadd.f32 %v1082, %v1758
          %1760 = vmatmul.f32.gmra.mxu0 %v1361
          %v1761 = vpop.f32.mrf.mxu0
          %v1762 = vadd.f32 %v1082, %v1761
          %1763 = vmatmul.f32.gmra.mxu0 %v1364
          %v1764 = vpop.f32.mrf.mxu0
          %v1765 = vadd.f32 %v1082, %v1764
          %1766 = vmatmul.f32.gmra.mxu0 %v1367
          %v1767 = vpop.f32.mrf.mxu0
          %v1768 = vadd.f32 %v1082, %v1767
          %1769 = vmatmul.f32.gmra.mxu0 %v1370
          %v1770 = vpop.f32.mrf.mxu0
          %v1771 = vadd.f32 %v1082, %v1770
          %1772 = vmatmul.f32.gmra.mxu0 %v1373
          %v1773 = vpop.f32.mrf.mxu0
          %v1774 = vadd.f32 %v1082, %v1773
          %1775 = vmatmul.f32.gmra.mxu0 %v1376
          %v1776 = vpop.f32.mrf.mxu0
          %v1777 = vadd.f32 %v1082, %v1776
          %1778 = vmatmul.f32.gmra.mxu0 %v1379
          %v1779 = vpop.f32.mrf.mxu0
          %v1780 = vadd.f32 %v1082, %v1779
          %1781 = vmatmul.f32.gmra.mxu0 %v1382
          %v1782 = vpop.f32.mrf.mxu0
          %v1783 = vadd.f32 %v1082, %v1782
          %1784 = vmatmul.f32.gmra.mxu0 %v1385
          %v1785 = vpop.f32.mrf.mxu0
          %v1786 = vadd.f32 %v1082, %v1785
          %1787 = vmatmul.f32.gmra.mxu0 %v1388
          %v1788 = vpop.f32.mrf.mxu0
          %v1789 = vadd.f32 %v1082, %v1788
          %1790 = vmatmul.f32.gmra.mxu0 %v1391
          %v1791 = vpop.f32.mrf.mxu0
          %v1792 = vadd.f32 %v1082, %v1791
          %1793 = vmatmul.f32.gmra.mxu0 %v1394
          %v1794 = vpop.f32.mrf.mxu0
          %v1795 = vadd.f32 %v1082, %v1794
          %1796 = vmatmul.f32.gmra.mxu0 %v1397
          %v1797 = vpop.f32.mrf.mxu0
          %v1798 = vadd.f32 %v1082, %v1797
          %1799 = vmatmul.f32.gmra.mxu0 %v1400
          %v1800 = vpop.f32.mrf.mxu0
          %v1801 = vadd.f32 %v1082, %v1800
          %1802 = vmatmul.f32.gmra.mxu0 %v1403
          %v1803 = vpop.f32.mrf.mxu0
          %v1804 = vadd.f32 %v1082, %v1803
          %1805 = vmatmul.f32.gmra.mxu0 %v1406
          %v1806 = vpop.f32.mrf.mxu0
          %v1807 = vadd.f32 %v1082, %v1806
          %1808 = vmatmul.f32.gmra.mxu0 %v1409
          %v1809 = vpop.f32.mrf.mxu0
          %v1810 = vadd.f32 %v1082, %v1809
          %1811 = vmatmul.f32.gmra.mxu0 %v1412
          %v1812 = vpop.f32.mrf.mxu0
          %v1813 = vadd.f32 %v1082, %v1812
          %1814 = vmatmul.f32.gmra.mxu0 %v1415
          %v1815 = vpop.f32.mrf.mxu0
          %v1816 = vadd.f32 %v1082, %v1815
          %1817 = vmatmul.f32.gmra.mxu0 %v1418
          %v1818 = vpop.f32.mrf.mxu0
          %v1819 = vadd.f32 %v1082, %v1818
          %1820 = vmatmul.f32.gmra.mxu0 %v1421
          %v1821 = vpop.f32.mrf.mxu0
          %v1822 = vadd.f32 %v1082, %v1821
          %1823 = vmatmul.f32.gmra.mxu0 %v1424
          %v1824 = vpop.f32.mrf.mxu0
          %v1825 = vadd.f32 %v1082, %v1824
          %1826 = vmatmul.f32.gmra.mxu0 %v1427
          %v1827 = vpop.f32.mrf.mxu0
          %v1828 = vadd.f32 %v1082, %v1827
          %1829 = vmatmul.f32.gmra.mxu0 %v1430
          %v1830 = vpop.f32.mrf.mxu0
          %v1831 = vadd.f32 %v1082, %v1830
          %1832 = vmatmul.f32.gmra.mxu0 %v1433
          %v1833 = vpop.f32.mrf.mxu0
          %v1834 = vadd.f32 %v1082, %v1833
          %1835 = vmatmul.f32.gmra.mxu0 %v1436
          %v1836 = vpop.f32.mrf.mxu0
          %v1837 = vadd.f32 %v1082, %v1836
          %1838 = vmatmul.f32.gmra.mxu0 %v1439
          %v1839 = vpop.f32.mrf.mxu0
          %v1840 = vadd.f32 %v1082, %v1839
          %1841 = vmatmul.f32.gmra.mxu0 %v1442
          %v1842 = vpop.f32.mrf.mxu0
          %v1843 = vadd.f32 %v1082, %v1842
          %1844 = vmatmul.f32.gmra.mxu0 %v1445
          %v1845 = vpop.f32.mrf.mxu0
          %v1846 = vadd.f32 %v1082, %v1845
          %1847 = vmatmul.f32.gmra.mxu0 %v1448
          %v1848 = vpop.f32.mrf.mxu0
          %v1849 = vadd.f32 %v1082, %v1848
          %1850 = vmatmul.f32.gmra.mxu0 %v1451
          %v1851 = vpop.f32.mrf.mxu0
          %v1852 = vadd.f32 %v1082, %v1851
          %1853 = vmatmul.f32.gmra.mxu0 %v1454
          %v1854 = vpop.f32.mrf.mxu0
          %v1855 = vadd.f32 %v1082, %v1854
          %1856 = vmatmul.f32.gmra.mxu0 %v1457
          %v1857 = vpop.f32.mrf.mxu0
          %v1858 = vadd.f32 %v1082, %v1857
          %1859 = vmatmul.f32.gmra.mxu0 %v1460
          %v1860 = vpop.f32.mrf.mxu0
          %v1861 = vadd.f32 %v1082, %v1860
          %1862 = vmatmul.f32.gmra.mxu0 %v1463
          %v1863 = vpop.f32.mrf.mxu0
          %v1864 = vadd.f32 %v1082, %v1863
          %1865 = vmatmul.f32.gmra.mxu0 %v1466
          %v1866 = vpop.f32.mrf.mxu0
          %v1867 = vadd.f32 %v1082, %v1866
          %1868 = vdwg.mxu0
          %1869 = vst.msk [vmem:[#allocation4] sm:$0xff] %vm713, %v1486
          %1870 = vst.msk [vmem:[#allocation4 + $0x8] sm:$0xff] %vm713, %v1489
          %1871 = vst.msk [vmem:[#allocation4 + $0x10] sm:$0xff] %vm713, %v1492
          %1872 = vst.msk [vmem:[#allocation4 + $0x18] sm:$0xff] %vm713, %v1495
          %1873 = vst.msk [vmem:[#allocation4 + $0x20] sm:$0xff] %vm713, %v1498
          %1874 = vst.msk [vmem:[#allocation4 + $0x28] sm:$0xff] %vm713, %v1501
          %1875 = vst.msk [vmem:[#allocation4 + $0x30] sm:$0xff] %vm713, %v1504
          %1876 = vst.msk [vmem:[#allocation4 + $0x38] sm:$0xff] %vm713, %v1507
          %1877 = vst.msk [vmem:[#allocation4 + $0x40] sm:$0xff] %vm713, %v1510
          %1878 = vst.msk [vmem:[#allocation4 + $0x48] sm:$0xff] %vm713, %v1513
          %1879 = vst.msk [vmem:[#allocation4 + $0x50] sm:$0xff] %vm713, %v1516
          %1880 = vst.msk [vmem:[#allocation4 + $0x58] sm:$0xff] %vm713, %v1519
          %1881 = vst.msk [vmem:[#allocation4 + $0x60] sm:$0xff] %vm713, %v1522
          %1882 = vst.msk [vmem:[#allocation4 + $0x68] sm:$0xff] %vm713, %v1525
          %1883 = vst.msk [vmem:[#allocation4 + $0x70] sm:$0xff] %vm713, %v1528
          %1884 = vst.msk [vmem:[#allocation4 + $0x78] sm:$0xff] %vm713, %v1531
          %1885 = vst.msk [vmem:[#allocation4 + $0x80] sm:$0xff] %vm713, %v1534
          %1886 = vst.msk [vmem:[#allocation4 + $0x88] sm:$0xff] %vm713, %v1537
          %1887 = vst.msk [vmem:[#allocation4 + $0x90] sm:$0xff] %vm713, %v1540
          %1888 = vst.msk [vmem:[#allocation4 + $0x98] sm:$0xff] %vm713, %v1543
          %1889 = vst.msk [vmem:[#allocation4 + $0xa0] sm:$0xff] %vm713, %v1546
          %1890 = vst.msk [vmem:[#allocation4 + $0xa8] sm:$0xff] %vm713, %v1549
          %1891 = vst.msk [vmem:[#allocation4 + $0xb0] sm:$0xff] %vm713, %v1552
          %1892 = vst.msk [vmem:[#allocation4 + $0xb8] sm:$0xff] %vm713, %v1555
          %1893 = vst.msk [vmem:[#allocation4 + $0xc0] sm:$0xff] %vm713, %v1558
          %1894 = vst.msk [vmem:[#allocation4 + $0xc8] sm:$0xff] %vm713, %v1561
          %1895 = vst.msk [vmem:[#allocation4 + $0xd0] sm:$0xff] %vm713, %v1564
          %1896 = vst.msk [vmem:[#allocation4 + $0xd8] sm:$0xff] %vm713, %v1567
          %1897 = vst.msk [vmem:[#allocation4 + $0xe0] sm:$0xff] %vm713, %v1570
          %1898 = vst.msk [vmem:[#allocation4 + $0xe8] sm:$0xff] %vm713, %v1573
          %1899 = vst.msk [vmem:[#allocation4 + $0xf0] sm:$0xff] %vm713, %v1576
          %1900 = vst.msk [vmem:[#allocation4 + $0xf8] sm:$0xff] %vm713, %v1579
          %1901 = vst.msk [vmem:[#allocation4 + $0x100] sm:$0xff] %vm713, %v1582
          %1902 = vst.msk [vmem:[#allocation4 + $0x108] sm:$0xff] %vm713, %v1585
          %1903 = vst.msk [vmem:[#allocation4 + $0x110] sm:$0xff] %vm713, %v1588
          %1904 = vst.msk [vmem:[#allocation4 + $0x118] sm:$0xff] %vm713, %v1591
          %1905 = vst.msk [vmem:[#allocation4 + $0x120] sm:$0xff] %vm713, %v1594
          %1906 = vst.msk [vmem:[#allocation4 + $0x128] sm:$0xff] %vm713, %v1597
          %1907 = vst.msk [vmem:[#allocation4 + $0x130] sm:$0xff] %vm713, %v1600
          %1908 = vst.msk [vmem:[#allocation4 + $0x138] sm:$0xff] %vm713, %v1603
          %1909 = vst.msk [vmem:[#allocation4 + $0x140] sm:$0xff] %vm713, %v1606
          %1910 = vst.msk [vmem:[#allocation4 + $0x148] sm:$0xff] %vm713, %v1609
          %1911 = vst.msk [vmem:[#allocation4 + $0x150] sm:$0xff] %vm713, %v1612
          %1912 = vst.msk [vmem:[#allocation4 + $0x158] sm:$0xff] %vm713, %v1615
          %1913 = vst.msk [vmem:[#allocation4 + $0x160] sm:$0xff] %vm713, %v1618
          %1914 = vst.msk [vmem:[#allocation4 + $0x168] sm:$0xff] %vm713, %v1621
          %1915 = vst.msk [vmem:[#allocation4 + $0x170] sm:$0xff] %vm713, %v1624
          %1916 = vst.msk [vmem:[#allocation4 + $0x178] sm:$0xff] %vm713, %v1627
          %1917 = vst.msk [vmem:[#allocation4 + $0x180] sm:$0xff] %vm713, %v1630
          %1918 = vst.msk [vmem:[#allocation4 + $0x188] sm:$0xff] %vm713, %v1633
          %1919 = vst.msk [vmem:[#allocation4 + $0x190] sm:$0xff] %vm713, %v1636
          %1920 = vst.msk [vmem:[#allocation4 + $0x198] sm:$0xff] %vm713, %v1639
          %1921 = vst.msk [vmem:[#allocation4 + $0x1a0] sm:$0xff] %vm713, %v1642
          %1922 = vst.msk [vmem:[#allocation4 + $0x1a8] sm:$0xff] %vm713, %v1645
          %1923 = vst.msk [vmem:[#allocation4 + $0x1b0] sm:$0xff] %vm713, %v1648
          %1924 = vst.msk [vmem:[#allocation4 + $0x1b8] sm:$0xff] %vm713, %v1651
          %1925 = vst.msk [vmem:[#allocation4 + $0x1c0] sm:$0xff] %vm713, %v1654
          %1926 = vst.msk [vmem:[#allocation4 + $0x1c8] sm:$0xff] %vm713, %v1657
          %1927 = vst.msk [vmem:[#allocation4 + $0x1d0] sm:$0xff] %vm713, %v1660
          %1928 = vst.msk [vmem:[#allocation4 + $0x1d8] sm:$0xff] %vm713, %v1663
          %1929 = vst.msk [vmem:[#allocation4 + $0x1e0] sm:$0xff] %vm713, %v1666
          %1930 = vst.msk [vmem:[#allocation4 + $0x1e8] sm:$0xff] %vm713, %v1669
          %1931 = vst.msk [vmem:[#allocation4 + $0x1f0] sm:$0xff] %vm713, %v1672
          %1932 = vst.msk [vmem:[#allocation4 + $0x1f8] sm:$0xff] %vm713, %v1675
          %1933 = vst.msk [vmem:[#allocation4 + $0x200] sm:$0xff] %vm713, %v1678
          %1934 = vst.msk [vmem:[#allocation4 + $0x208] sm:$0xff] %vm713, %v1681
          %1935 = vst.msk [vmem:[#allocation4 + $0x210] sm:$0xff] %vm713, %v1684
          %1936 = vst.msk [vmem:[#allocation4 + $0x218] sm:$0xff] %vm713, %v1687
          %1937 = vst.msk [vmem:[#allocation4 + $0x220] sm:$0xff] %vm713, %v1690
          %1938 = vst.msk [vmem:[#allocation4 + $0x228] sm:$0xff] %vm713, %v1693
          %1939 = vst.msk [vmem:[#allocation4 + $0x230] sm:$0xff] %vm713, %v1696
          %1940 = vst.msk [vmem:[#allocation4 + $0x238] sm:$0xff] %vm713, %v1699
          %1941 = vst.msk [vmem:[#allocation4 + $0x240] sm:$0xff] %vm713, %v1702
          %1942 = vst.msk [vmem:[#allocation4 + $0x248] sm:$0xff] %vm713, %v1705
          %1943 = vst.msk [vmem:[#allocation4 + $0x250] sm:$0xff] %vm713, %v1708
          %1944 = vst.msk [vmem:[#allocation4 + $0x258] sm:$0xff] %vm713, %v1711
          %1945 = vst.msk [vmem:[#allocation4 + $0x260] sm:$0xff] %vm713, %v1714
          %1946 = vst.msk [vmem:[#allocation4 + $0x268] sm:$0xff] %vm713, %v1717
          %1947 = vst.msk [vmem:[#allocation4 + $0x270] sm:$0xff] %vm713, %v1720
          %1948 = vst.msk [vmem:[#allocation4 + $0x278] sm:$0xff] %vm713, %v1723
          %1949 = vst.msk [vmem:[#allocation4 + $0x280] sm:$0xff] %vm713, %v1726
          %1950 = vst.msk [vmem:[#allocation4 + $0x288] sm:$0xff] %vm713, %v1729
          %1951 = vst.msk [vmem:[#allocation4 + $0x290] sm:$0xff] %vm713, %v1732
          %1952 = vst.msk [vmem:[#allocation4 + $0x298] sm:$0xff] %vm713, %v1735
          %1953 = vst.msk [vmem:[#allocation4 + $0x2a0] sm:$0xff] %vm713, %v1738
          %1954 = vst.msk [vmem:[#allocation4 + $0x2a8] sm:$0xff] %vm713, %v1741
          %1955 = vst.msk [vmem:[#allocation4 + $0x2b0] sm:$0xff] %vm713, %v1744
          %1956 = vst.msk [vmem:[#allocation4 + $0x2b8] sm:$0xff] %vm713, %v1747
          %1957 = vst.msk [vmem:[#allocation4 + $0x2c0] sm:$0xff] %vm713, %v1750
          %1958 = vst.msk [vmem:[#allocation4 + $0x2c8] sm:$0xff] %vm713, %v1753
          %1959 = vst.msk [vmem:[#allocation4 + $0x2d0] sm:$0xff] %vm713, %v1756
          %1960 = vst.msk [vmem:[#allocation4 + $0x2d8] sm:$0xff] %vm713, %v1759
          %1961 = vst.msk [vmem:[#allocation4 + $0x2e0] sm:$0xff] %vm713, %v1762
          %1962 = vst.msk [vmem:[#allocation4 + $0x2e8] sm:$0xff] %vm713, %v1765
          %1963 = vst.msk [vmem:[#allocation4 + $0x2f0] sm:$0xff] %vm713, %v1768
          %1964 = vst.msk [vmem:[#allocation4 + $0x2f8] sm:$0xff] %vm713, %v1771
          %1965 = vst.msk [vmem:[#allocation4 + $0x300] sm:$0xff] %vm713, %v1774
          %1966 = vst.msk [vmem:[#allocation4 + $0x308] sm:$0xff] %vm713, %v1777
          %1967 = vst.msk [vmem:[#allocation4 + $0x310] sm:$0xff] %vm713, %v1780
          %1968 = vst.msk [vmem:[#allocation4 + $0x318] sm:$0xff] %vm713, %v1783
          %1969 = vst.msk [vmem:[#allocation4 + $0x320] sm:$0xff] %vm713, %v1786
          %1970 = vst.msk [vmem:[#allocation4 + $0x328] sm:$0xff] %vm713, %v1789
          %1971 = vst.msk [vmem:[#allocation4 + $0x330] sm:$0xff] %vm713, %v1792
          %1972 = vst.msk [vmem:[#allocation4 + $0x338] sm:$0xff] %vm713, %v1795
          %1973 = vst.msk [vmem:[#allocation4 + $0x340] sm:$0xff] %vm713, %v1798
          %1974 = vst.msk [vmem:[#allocation4 + $0x348] sm:$0xff] %vm713, %v1801
          %1975 = vst.msk [vmem:[#allocation4 + $0x350] sm:$0xff] %vm713, %v1804
          %1976 = vst.msk [vmem:[#allocation4 + $0x358] sm:$0xff] %vm713, %v1807
          %1977 = vst.msk [vmem:[#allocation4 + $0x360] sm:$0xff] %vm713, %v1810
          %1978 = vst.msk [vmem:[#allocation4 + $0x368] sm:$0xff] %vm713, %v1813
          %1979 = vst.msk [vmem:[#allocation4 + $0x370] sm:$0xff] %vm713, %v1816
          %1980 = vst.msk [vmem:[#allocation4 + $0x378] sm:$0xff] %vm713, %v1819
          %1981 = vst.msk [vmem:[#allocation4 + $0x380] sm:$0xff] %vm713, %v1822
          %1982 = vst.msk [vmem:[#allocation4 + $0x388] sm:$0xff] %vm713, %v1825
          %1983 = vst.msk [vmem:[#allocation4 + $0x390] sm:$0xff] %vm713, %v1828
          %1984 = vst.msk [vmem:[#allocation4 + $0x398] sm:$0xff] %vm713, %v1831
          %1985 = vst.msk [vmem:[#allocation4 + $0x3a0] sm:$0xff] %vm713, %v1834
          %1986 = vst.msk [vmem:[#allocation4 + $0x3a8] sm:$0xff] %vm713, %v1837
          %1987 = vst.msk [vmem:[#allocation4 + $0x3b0] sm:$0xff] %vm713, %v1840
          %1988 = vst.msk [vmem:[#allocation4 + $0x3b8] sm:$0xff] %vm713, %v1843
          %1989 = vst.msk [vmem:[#allocation4 + $0x3c0] sm:$0xff] %vm713, %v1846
          %1990 = vst.msk [vmem:[#allocation4 + $0x3c8] sm:$0xff] %vm713, %v1849
          %1991 = vst.msk [vmem:[#allocation4 + $0x3d0] sm:$0xff] %vm713, %v1852
          %1992 = vst.msk [vmem:[#allocation4 + $0x3d8] sm:$0xff] %vm713, %v1855
          %1993 = vst.msk [vmem:[#allocation4 + $0x3e0] sm:$0xff] %vm713, %v1858
          %1994 = vst.msk [vmem:[#allocation4 + $0x3e8] sm:$0xff] %vm713, %v1861
          %1995 = vst.msk [vmem:[#allocation4 + $0x3f0] sm:$0xff] %vm713, %v1864
          %1996 = vst.msk [vmem:[#allocation4 + $0x3f8] sm:$0xff] %vm713, %v1867
        $region80: #{tpu_custom_call.1} parent=75 // pred_fallthru
          _
        %v1997 = vld [vmem:[#allocation2] sm:$0xff]
        %v1998 = vld [vmem:[#allocation3] sm:$0xff]
        %v1999 = vld [vmem:[%s566] sm:$0xff]
        %v2000 = vld [vmem:[%s579] sm:$0xff]
        %v2001 = vld [vmem:[%s579 + $0x8] sm:$0xff]
        %v2002 = vld [vmem:[%s579 + $0x10] sm:$0xff]
        %v2003 = vld [vmem:[%s579 + $0x18] sm:$0xff]
        %v2004 = vld [vmem:[%s579 + $0x20] sm:$0xff]
        %v2005 = vld [vmem:[%s579 + $0x28] sm:$0xff]
        %v2006 = vld [vmem:[%s579 + $0x30] sm:$0xff]
        %v2007 = vld [vmem:[%s579 + $0x38] sm:$0xff]
        %v2008 = vld [vmem:[%s579 + $0x40] sm:$0xff]
        %v2009 = vld [vmem:[%s579 + $0x48] sm:$0xff]
        %v2010 = vld [vmem:[%s579 + $0x50] sm:$0xff]
        %v2011 = vld [vmem:[%s579 + $0x58] sm:$0xff]
        %v2012 = vld [vmem:[%s579 + $0x60] sm:$0xff]
        %v2013 = vld [vmem:[%s579 + $0x68] sm:$0xff]
        %v2014 = vld [vmem:[%s579 + $0x70] sm:$0xff]
        %v2015 = vld [vmem:[%s579 + $0x78] sm:$0xff]
        %v2016 = vld [vmem:[%s579 + $0x80] sm:$0xff]
        %v2017 = vld [vmem:[%s579 + $0x88] sm:$0xff]
        %v2018 = vld [vmem:[%s579 + $0x90] sm:$0xff]
        %v2019 = vld [vmem:[%s579 + $0x98] sm:$0xff]
        %v2020 = vld [vmem:[%s579 + $0xa0] sm:$0xff]
        %v2021 = vld [vmem:[%s579 + $0xa8] sm:$0xff]
        %v2022 = vld [vmem:[%s579 + $0xb0] sm:$0xff]
        %v2023 = vld [vmem:[%s579 + $0xb8] sm:$0xff]
        %v2024 = vld [vmem:[%s579 + $0xc0] sm:$0xff]
        %v2025 = vld [vmem:[%s579 + $0xc8] sm:$0xff]
        %v2026 = vld [vmem:[%s579 + $0xd0] sm:$0xff]
        %v2027 = vld [vmem:[%s579 + $0xd8] sm:$0xff]
        %v2028 = vld [vmem:[%s579 + $0xe0] sm:$0xff]
        %v2029 = vld [vmem:[%s579 + $0xe8] sm:$0xff]
        %v2030 = vld [vmem:[%s579 + $0xf0] sm:$0xff]
        %v2031 = vld [vmem:[%s579 + $0xf8] sm:$0xff]
        %v2032 = vld [vmem:[%s579 + $0x100] sm:$0xff]
        %v2033 = vld [vmem:[%s579 + $0x108] sm:$0xff]
        %v2034 = vld [vmem:[%s579 + $0x110] sm:$0xff]
        %v2035 = vld [vmem:[%s579 + $0x118] sm:$0xff]
        %v2036 = vld [vmem:[%s579 + $0x120] sm:$0xff]
        %v2037 = vld [vmem:[%s579 + $0x128] sm:$0xff]
        %v2038 = vld [vmem:[%s579 + $0x130] sm:$0xff]
        %v2039 = vld [vmem:[%s579 + $0x138] sm:$0xff]
        %v2040 = vld [vmem:[%s579 + $0x140] sm:$0xff]
        %v2041 = vld [vmem:[%s579 + $0x148] sm:$0xff]
        %v2042 = vld [vmem:[%s579 + $0x150] sm:$0xff]
        %v2043 = vld [vmem:[%s579 + $0x158] sm:$0xff]
        %v2044 = vld [vmem:[%s579 + $0x160] sm:$0xff]
        %v2045 = vld [vmem:[%s579 + $0x168] sm:$0xff]
        %v2046 = vld [vmem:[%s579 + $0x170] sm:$0xff]
        %v2047 = vld [vmem:[%s579 + $0x178] sm:$0xff]
        %v2048 = vld [vmem:[%s579 + $0x180] sm:$0xff]
        %v2049 = vld [vmem:[%s579 + $0x188] sm:$0xff]
        %v2050 = vld [vmem:[%s579 + $0x190] sm:$0xff]
        %v2051 = vld [vmem:[%s579 + $0x198] sm:$0xff]
        %v2052 = vld [vmem:[%s579 + $0x1a0] sm:$0xff]
        %v2053 = vld [vmem:[%s579 + $0x1a8] sm:$0xff]
        %v2054 = vld [vmem:[%s579 + $0x1b0] sm:$0xff]
        %v2055 = vld [vmem:[%s579 + $0x1b8] sm:$0xff]
        %v2056 = vld [vmem:[%s579 + $0x1c0] sm:$0xff]
        %v2057 = vld [vmem:[%s579 + $0x1c8] sm:$0xff]
        %v2058 = vld [vmem:[%s579 + $0x1d0] sm:$0xff]
        %v2059 = vld [vmem:[%s579 + $0x1d8] sm:$0xff]
        %v2060 = vld [vmem:[%s579 + $0x1e0] sm:$0xff]
        %v2061 = vld [vmem:[%s579 + $0x1e8] sm:$0xff]
        %v2062 = vld [vmem:[%s579 + $0x1f0] sm:$0xff]
        %v2063 = vld [vmem:[%s579 + $0x1f8] sm:$0xff]
        %v2064 = vld [vmem:[%s579 + $0x200] sm:$0xff]
        %v2065 = vld [vmem:[%s579 + $0x208] sm:$0xff]
        %v2066 = vld [vmem:[%s579 + $0x210] sm:$0xff]
        %v2067 = vld [vmem:[%s579 + $0x218] sm:$0xff]
        %v2068 = vld [vmem:[%s579 + $0x220] sm:$0xff]
        %v2069 = vld [vmem:[%s579 + $0x228] sm:$0xff]
        %v2070 = vld [vmem:[%s579 + $0x230] sm:$0xff]
        %v2071 = vld [vmem:[%s579 + $0x238] sm:$0xff]
        %v2072 = vld [vmem:[%s579 + $0x240] sm:$0xff]
        %v2073 = vld [vmem:[%s579 + $0x248] sm:$0xff]
        %v2074 = vld [vmem:[%s579 + $0x250] sm:$0xff]
        %v2075 = vld [vmem:[%s579 + $0x258] sm:$0xff]
        %v2076 = vld [vmem:[%s579 + $0x260] sm:$0xff]
        %v2077 = vld [vmem:[%s579 + $0x268] sm:$0xff]
        %v2078 = vld [vmem:[%s579 + $0x270] sm:$0xff]
        %v2079 = vld [vmem:[%s579 + $0x278] sm:$0xff]
        %v2080 = vld [vmem:[%s579 + $0x280] sm:$0xff]
        %v2081 = vld [vmem:[%s579 + $0x288] sm:$0xff]
        %v2082 = vld [vmem:[%s579 + $0x290] sm:$0xff]
        %v2083 = vld [vmem:[%s579 + $0x298] sm:$0xff]
        %v2084 = vld [vmem:[%s579 + $0x2a0] sm:$0xff]
        %v2085 = vld [vmem:[%s579 + $0x2a8] sm:$0xff]
        %v2086 = vld [vmem:[%s579 + $0x2b0] sm:$0xff]
        %v2087 = vld [vmem:[%s579 + $0x2b8] sm:$0xff]
        %v2088 = vld [vmem:[%s579 + $0x2c0] sm:$0xff]
        %v2089 = vld [vmem:[%s579 + $0x2c8] sm:$0xff]
        %v2090 = vld [vmem:[%s579 + $0x2d0] sm:$0xff]
        %v2091 = vld [vmem:[%s579 + $0x2d8] sm:$0xff]
        %v2092 = vld [vmem:[%s579 + $0x2e0] sm:$0xff]
        %v2093 = vld [vmem:[%s579 + $0x2e8] sm:$0xff]
        %v2094 = vld [vmem:[%s579 + $0x2f0] sm:$0xff]
        %v2095 = vld [vmem:[%s579 + $0x2f8] sm:$0xff]
        %v2096 = vld [vmem:[%s579 + $0x300] sm:$0xff]
        %v2097 = vld [vmem:[%s579 + $0x308] sm:$0xff]
        %v2098 = vld [vmem:[%s579 + $0x310] sm:$0xff]
        %v2099 = vld [vmem:[%s579 + $0x318] sm:$0xff]
        %v2100 = vld [vmem:[%s579 + $0x320] sm:$0xff]
        %v2101 = vld [vmem:[%s579 + $0x328] sm:$0xff]
        %v2102 = vld [vmem:[%s579 + $0x330] sm:$0xff]
        %v2103 = vld [vmem:[%s579 + $0x338] sm:$0xff]
        %v2104 = vld [vmem:[%s579 + $0x340] sm:$0xff]
        %v2105 = vld [vmem:[%s579 + $0x348] sm:$0xff]
        %v2106 = vld [vmem:[%s579 + $0x350] sm:$0xff]
        %v2107 = vld [vmem:[%s579 + $0x358] sm:$0xff]
        %v2108 = vld [vmem:[%s579 + $0x360] sm:$0xff]
        %v2109 = vld [vmem:[%s579 + $0x368] sm:$0xff]
        %v2110 = vld [vmem:[%s579 + $0x370] sm:$0xff]
        %v2111 = vld [vmem:[%s579 + $0x378] sm:$0xff]
        %v2112 = vld [vmem:[%s579 + $0x380] sm:$0xff]
        %v2113 = vld [vmem:[%s579 + $0x388] sm:$0xff]
        %v2114 = vld [vmem:[%s579 + $0x390] sm:$0xff]
        %v2115 = vld [vmem:[%s579 + $0x398] sm:$0xff]
        %v2116 = vld [vmem:[%s579 + $0x3a0] sm:$0xff]
        %v2117 = vld [vmem:[%s579 + $0x3a8] sm:$0xff]
        %v2118 = vld [vmem:[%s579 + $0x3b0] sm:$0xff]
        %v2119 = vld [vmem:[%s579 + $0x3b8] sm:$0xff]
        %v2120 = vld [vmem:[%s579 + $0x3c0] sm:$0xff]
        %v2121 = vld [vmem:[%s579 + $0x3c8] sm:$0xff]
        %v2122 = vld [vmem:[%s579 + $0x3d0] sm:$0xff]
        %v2123 = vld [vmem:[%s579 + $0x3d8] sm:$0xff]
        %v2124 = vld [vmem:[%s579 + $0x3e0] sm:$0xff]
        %v2125 = vld [vmem:[%s579 + $0x3e8] sm:$0xff]
        %v2126 = vld [vmem:[%s579 + $0x3f0] sm:$0xff]
        %v2127 = vld [vmem:[%s579 + $0x3f8] sm:$0xff]
        %v2128 = vld [vmem:[#allocation4] sm:$0xff]
        %v2129 = vld [vmem:[#allocation4 + $0x8] sm:$0xff]
        %v2130 = vld [vmem:[#allocation4 + $0x10] sm:$0xff]
        %v2131 = vld [vmem:[#allocation4 + $0x18] sm:$0xff]
        %v2132 = vld [vmem:[#allocation4 + $0x20] sm:$0xff]
        %v2133 = vld [vmem:[#allocation4 + $0x28] sm:$0xff]
        %v2134 = vld [vmem:[#allocation4 + $0x30] sm:$0xff]
        %v2135 = vld [vmem:[#allocation4 + $0x38] sm:$0xff]
        %v2136 = vld [vmem:[#allocation4 + $0x40] sm:$0xff]
        %v2137 = vld [vmem:[#allocation4 + $0x48] sm:$0xff]
        %v2138 = vld [vmem:[#allocation4 + $0x50] sm:$0xff]
        %v2139 = vld [vmem:[#allocation4 + $0x58] sm:$0xff]
        %v2140 = vld [vmem:[#allocation4 + $0x60] sm:$0xff]
        %v2141 = vld [vmem:[#allocation4 + $0x68] sm:$0xff]
        %v2142 = vld [vmem:[#allocation4 + $0x70] sm:$0xff]
        %v2143 = vld [vmem:[#allocation4 + $0x78] sm:$0xff]
        %v2144 = vld [vmem:[#allocation4 + $0x80] sm:$0xff]
        %v2145 = vld [vmem:[#allocation4 + $0x88] sm:$0xff]
        %v2146 = vld [vmem:[#allocation4 + $0x90] sm:$0xff]
        %v2147 = vld [vmem:[#allocation4 + $0x98] sm:$0xff]
        %v2148 = vld [vmem:[#allocation4 + $0xa0] sm:$0xff]
        %v2149 = vld [vmem:[#allocation4 + $0xa8] sm:$0xff]
        %v2150 = vld [vmem:[#allocation4 + $0xb0] sm:$0xff]
        %v2151 = vld [vmem:[#allocation4 + $0xb8] sm:$0xff]
        %v2152 = vld [vmem:[#allocation4 + $0xc0] sm:$0xff]
        %v2153 = vld [vmem:[#allocation4 + $0xc8] sm:$0xff]
        %v2154 = vld [vmem:[#allocation4 + $0xd0] sm:$0xff]
        %v2155 = vld [vmem:[#allocation4 + $0xd8] sm:$0xff]
        %v2156 = vld [vmem:[#allocation4 + $0xe0] sm:$0xff]
        %v2157 = vld [vmem:[#allocation4 + $0xe8] sm:$0xff]
        %v2158 = vld [vmem:[#allocation4 + $0xf0] sm:$0xff]
        %v2159 = vld [vmem:[#allocation4 + $0xf8] sm:$0xff]
        %v2160 = vld [vmem:[#allocation4 + $0x100] sm:$0xff]
        %v2161 = vld [vmem:[#allocation4 + $0x108] sm:$0xff]
        %v2162 = vld [vmem:[#allocation4 + $0x110] sm:$0xff]
        %v2163 = vld [vmem:[#allocation4 + $0x118] sm:$0xff]
        %v2164 = vld [vmem:[#allocation4 + $0x120] sm:$0xff]
        %v2165 = vld [vmem:[#allocation4 + $0x128] sm:$0xff]
        %v2166 = vld [vmem:[#allocation4 + $0x130] sm:$0xff]
        %v2167 = vld [vmem:[#allocation4 + $0x138] sm:$0xff]
        %v2168 = vld [vmem:[#allocation4 + $0x140] sm:$0xff]
        %v2169 = vld [vmem:[#allocation4 + $0x148] sm:$0xff]
        %v2170 = vld [vmem:[#allocation4 + $0x150] sm:$0xff]
        %v2171 = vld [vmem:[#allocation4 + $0x158] sm:$0xff]
        %v2172 = vld [vmem:[#allocation4 + $0x160] sm:$0xff]
        %v2173 = vld [vmem:[#allocation4 + $0x168] sm:$0xff]
        %v2174 = vld [vmem:[#allocation4 + $0x170] sm:$0xff]
        %v2175 = vld [vmem:[#allocation4 + $0x178] sm:$0xff]
        %v2176 = vld [vmem:[#allocation4 + $0x180] sm:$0xff]
        %v2177 = vld [vmem:[#allocation4 + $0x188] sm:$0xff]
        %v2178 = vld [vmem:[#allocation4 + $0x190] sm:$0xff]
        %v2179 = vld [vmem:[#allocation4 + $0x198] sm:$0xff]
        %v2180 = vld [vmem:[#allocation4 + $0x1a0] sm:$0xff]
        %v2181 = vld [vmem:[#allocation4 + $0x1a8] sm:$0xff]
        %v2182 = vld [vmem:[#allocation4 + $0x1b0] sm:$0xff]
        %v2183 = vld [vmem:[#allocation4 + $0x1b8] sm:$0xff]
        %v2184 = vld [vmem:[#allocation4 + $0x1c0] sm:$0xff]
        %v2185 = vld [vmem:[#allocation4 + $0x1c8] sm:$0xff]
        %v2186 = vld [vmem:[#allocation4 + $0x1d0] sm:$0xff]
        %v2187 = vld [vmem:[#allocation4 + $0x1d8] sm:$0xff]
        %v2188 = vld [vmem:[#allocation4 + $0x1e0] sm:$0xff]
        %v2189 = vld [vmem:[#allocation4 + $0x1e8] sm:$0xff]
        %v2190 = vld [vmem:[#allocation4 + $0x1f0] sm:$0xff]
        %v2191 = vld [vmem:[#allocation4 + $0x1f8] sm:$0xff]
        %v2192 = vld [vmem:[#allocation4 + $0x200] sm:$0xff]
        %v2193 = vld [vmem:[#allocation4 + $0x208] sm:$0xff]
        %v2194 = vld [vmem:[#allocation4 + $0x210] sm:$0xff]
        %v2195 = vld [vmem:[#allocation4 + $0x218] sm:$0xff]
        %v2196 = vld [vmem:[#allocation4 + $0x220] sm:$0xff]
        %v2197 = vld [vmem:[#allocation4 + $0x228] sm:$0xff]
        %v2198 = vld [vmem:[#allocation4 + $0x230] sm:$0xff]
        %v2199 = vld [vmem:[#allocation4 + $0x238] sm:$0xff]
        %v2200 = vld [vmem:[#allocation4 + $0x240] sm:$0xff]
        %v2201 = vld [vmem:[#allocation4 + $0x248] sm:$0xff]
        %v2202 = vld [vmem:[#allocation4 + $0x250] sm:$0xff]
        %v2203 = vld [vmem:[#allocation4 + $0x258] sm:$0xff]
        %v2204 = vld [vmem:[#allocation4 + $0x260] sm:$0xff]
        %v2205 = vld [vmem:[#allocation4 + $0x268] sm:$0xff]
        %v2206 = vld [vmem:[#allocation4 + $0x270] sm:$0xff]
        %v2207 = vld [vmem:[#allocation4 + $0x278] sm:$0xff]
        %v2208 = vld [vmem:[#allocation4 + $0x280] sm:$0xff]
        %v2209 = vld [vmem:[#allocation4 + $0x288] sm:$0xff]
        %v2210 = vld [vmem:[#allocation4 + $0x290] sm:$0xff]
        %v2211 = vld [vmem:[#allocation4 + $0x298] sm:$0xff]
        %v2212 = vld [vmem:[#allocation4 + $0x2a0] sm:$0xff]
        %v2213 = vld [vmem:[#allocation4 + $0x2a8] sm:$0xff]
        %v2214 = vld [vmem:[#allocation4 + $0x2b0] sm:$0xff]
        %v2215 = vld [vmem:[#allocation4 + $0x2b8] sm:$0xff]
        %v2216 = vld [vmem:[#allocation4 + $0x2c0] sm:$0xff]
        %v2217 = vld [vmem:[#allocation4 + $0x2c8] sm:$0xff]
        %v2218 = vld [vmem:[#allocation4 + $0x2d0] sm:$0xff]
        %v2219 = vld [vmem:[#allocation4 + $0x2d8] sm:$0xff]
        %v2220 = vld [vmem:[#allocation4 + $0x2e0] sm:$0xff]
        %v2221 = vld [vmem:[#allocation4 + $0x2e8] sm:$0xff]
        %v2222 = vld [vmem:[#allocation4 + $0x2f0] sm:$0xff]
        %v2223 = vld [vmem:[#allocation4 + $0x2f8] sm:$0xff]
        %v2224 = vld [vmem:[#allocation4 + $0x300] sm:$0xff]
        %v2225 = vld [vmem:[#allocation4 + $0x308] sm:$0xff]
        %v2226 = vld [vmem:[#allocation4 + $0x310] sm:$0xff]
        %v2227 = vld [vmem:[#allocation4 + $0x318] sm:$0xff]
        %v2228 = vld [vmem:[#allocation4 + $0x320] sm:$0xff]
        %v2229 = vld [vmem:[#allocation4 + $0x328] sm:$0xff]
        %v2230 = vld [vmem:[#allocation4 + $0x330] sm:$0xff]
        %v2231 = vld [vmem:[#allocation4 + $0x338] sm:$0xff]
        %v2232 = vld [vmem:[#allocation4 + $0x340] sm:$0xff]
        %v2233 = vld [vmem:[#allocation4 + $0x348] sm:$0xff]
        %v2234 = vld [vmem:[#allocation4 + $0x350] sm:$0xff]
        %v2235 = vld [vmem:[#allocation4 + $0x358] sm:$0xff]
        %v2236 = vld [vmem:[#allocation4 + $0x360] sm:$0xff]
        %v2237 = vld [vmem:[#allocation4 + $0x368] sm:$0xff]
        %v2238 = vld [vmem:[#allocation4 + $0x370] sm:$0xff]
        %v2239 = vld [vmem:[#allocation4 + $0x378] sm:$0xff]
        %v2240 = vld [vmem:[#allocation4 + $0x380] sm:$0xff]
        %v2241 = vld [vmem:[#allocation4 + $0x388] sm:$0xff]
        %v2242 = vld [vmem:[#allocation4 + $0x390] sm:$0xff]
        %v2243 = vld [vmem:[#allocation4 + $0x398] sm:$0xff]
        %v2244 = vld [vmem:[#allocation4 + $0x3a0] sm:$0xff]
        %v2245 = vld [vmem:[#allocation4 + $0x3a8] sm:$0xff]
        %v2246 = vld [vmem:[#allocation4 + $0x3b0] sm:$0xff]
        %v2247 = vld [vmem:[#allocation4 + $0x3b8] sm:$0xff]
        %v2248 = vld [vmem:[#allocation4 + $0x3c0] sm:$0xff]
        %v2249 = vld [vmem:[#allocation4 + $0x3c8] sm:$0xff]
        %v2250 = vld [vmem:[#allocation4 + $0x3d0] sm:$0xff]
        %v2251 = vld [vmem:[#allocation4 + $0x3d8] sm:$0xff]
        %v2252 = vld [vmem:[#allocation4 + $0x3e0] sm:$0xff]
        %v2253 = vld [vmem:[#allocation4 + $0x3e8] sm:$0xff]
        %v2254 = vld [vmem:[#allocation4 + $0x3f0] sm:$0xff]
        %v2255 = vld [vmem:[#allocation4 + $0x3f8] sm:$0xff]
        %v2256 = vld [vmem:[%s8] sm:$0xff]
        %v2257 = vld [vmem:[%s8 + $0x8] sm:$0xff]
        %v2258 = vld [vmem:[%s8 + $0x10] sm:$0xff]
        %v2259 = vld [vmem:[%s8 + $0x18] sm:$0xff]
        %v2260 = vld [vmem:[%s8 + $0x20] sm:$0xff]
        %v2261 = vld [vmem:[%s8 + $0x28] sm:$0xff]
        %v2262 = vld [vmem:[%s8 + $0x30] sm:$0xff]
        %v2263 = vld [vmem:[%s8 + $0x38] sm:$0xff]
        %v2264 = vld [vmem:[%s9] sm:$0x3]
        %v2266 = vperm.slane %v2264, 0
        %v2267 = vperm.slane %v2264, 1
        %vm2270 = vcmask 261120
        %v2272 = vsel %vm2270, %v1997, 0
        %2274 = vmatpush.msra.mxu0 0.0
        %2275 = vmatpush.msra.mxu0 0.0
        %2276 = vmatpush.msra.mxu0 0.0
        %2277 = vmatpush.msra.mxu0 0.0
        %2278 = vmatpush.msra.mxu0 0.0
        %2279 = vmatpush.msra.mxu0 0.0
        %2280 = vmatpush.msra.mxu0 0.0
        %2281 = vmatpush.msra.mxu0 0.0
        %2282 = vmatpush.msra.mxu0 0.0
        %2283 = vmatpush.msra.mxu0 0.0
        %2284 = vmatpush.msra.mxu0 0.0
        %2285 = vmatpush.msra.mxu0 0.0
        %2286 = vmatpush.msra.mxu0 %v2262
        %2287 = vmatpush.msra.mxu0 %v2260
        %2288 = vmatpush.msra.mxu0 %v2258
        %2289 = vmatpush.msra.mxu0 %v2256
        %2290 = vmatmul.f32.gmra.mxu0 %v2272
        %v2291 = vpop.f32.mrf.mxu0
        %v2292 = vadd.f32 %v2266, %v2291
        %2293 = vdwg.mxu0
        %2294 = vmatpush.msra.mxu0 0.0
        %2295 = vmatpush.msra.mxu0 0.0
        %2296 = vmatpush.msra.mxu0 0.0
        %2297 = vmatpush.msra.mxu0 0.0
        %2298 = vmatpush.msra.mxu0 0.0
        %2299 = vmatpush.msra.mxu0 0.0
        %2300 = vmatpush.msra.mxu0 0.0
        %2301 = vmatpush.msra.mxu0 0.0
        %2302 = vmatpush.msra.mxu0 0.0
        %2303 = vmatpush.msra.mxu0 0.0
        %2304 = vmatpush.msra.mxu0 0.0
        %2305 = vmatpush.msra.mxu0 0.0
        %2306 = vmatpush.msra.mxu0 %v2263
        %2307 = vmatpush.msra.mxu0 %v2261
        %2308 = vmatpush.msra.mxu0 %v2259
        %2309 = vmatpush.msra.mxu0 %v2257
        %2310 = vmatmul.f32.gmra.mxu0 %v2272
        %v2311 = vpop.f32.mrf.mxu0
        %v2312 = vadd.f32 %v2267, %v2311
        %2313 = vdwg.mxu0
        %v2315 = vrot.slane %v2292, 1
        %v2316 = vrot.slane %v2292, 2
        %v2317 = vrot.slane %v2292, 3
        %v2318 = vrot.slane %v2292, 4
        %v2319 = vrot.slane %v2292, 5
        %v2320 = vrot.slane %v2292, 6
        %v2321 = vrot.slane %v2292, 7
        %v2322 = vperm.slane %v2292, 0
        %v2323 = vperm.slane %v2315, 0
        %v2324 = vperm.slane %v2316, 0
        %v2325 = vperm.slane %v2317, 0
        %v2326 = vperm.slane %v2318, 0
        %v2327 = vperm.slane %v2319, 0
        %v2328 = vperm.slane %v2320, 0
        %v2329 = vperm.slane %v2321, 0
        %v2338 = vadd.f32 %v2128, %v2322
        %v2339 = vadd.f32 %v2129, %v2322
        %v2340 = vadd.f32 %v2130, %v2322
        %v2341 = vadd.f32 %v2131, %v2322
        %v2342 = vadd.f32 %v2132, %v2322
        %v2343 = vadd.f32 %v2133, %v2322
        %v2344 = vadd.f32 %v2134, %v2322
        %v2345 = vadd.f32 %v2135, %v2322
        %v2346 = vadd.f32 %v2136, %v2322
        %v2347 = vadd.f32 %v2137, %v2322
        %v2348 = vadd.f32 %v2138, %v2322
        %v2349 = vadd.f32 %v2139, %v2322
        %v2350 = vadd.f32 %v2140, %v2322
        %v2351 = vadd.f32 %v2141, %v2322
        %v2352 = vadd.f32 %v2142, %v2322
        %v2353 = vadd.f32 %v2143, %v2322
        %v2354 = vadd.f32 %v2144, %v2323
        %v2355 = vadd.f32 %v2145, %v2323
        %v2356 = vadd.f32 %v2146, %v2323
        %v2357 = vadd.f32 %v2147, %v2323
        %v2358 = vadd.f32 %v2148, %v2323
        %v2359 = vadd.f32 %v2149, %v2323
        %v2360 = vadd.f32 %v2150, %v2323
        %v2361 = vadd.f32 %v2151, %v2323
        %v2362 = vadd.f32 %v2152, %v2323
        %v2363 = vadd.f32 %v2153, %v2323
        %v2364 = vadd.f32 %v2154, %v2323
        %v2365 = vadd.f32 %v2155, %v2323
        %v2366 = vadd.f32 %v2156, %v2323
        %v2367 = vadd.f32 %v2157, %v2323
        %v2368 = vadd.f32 %v2158, %v2323
        %v2369 = vadd.f32 %v2159, %v2323
        %v2370 = vadd.f32 %v2160, %v2324
        %v2371 = vadd.f32 %v2161, %v2324
        %v2372 = vadd.f32 %v2162, %v2324
        %v2373 = vadd.f32 %v2163, %v2324
        %v2374 = vadd.f32 %v2164, %v2324
        %v2375 = vadd.f32 %v2165, %v2324
        %v2376 = vadd.f32 %v2166, %v2324
        %v2377 = vadd.f32 %v2167, %v2324
        %v2378 = vadd.f32 %v2168, %v2324
        %v2379 = vadd.f32 %v2169, %v2324
        %v2380 = vadd.f32 %v2170, %v2324
        %v2381 = vadd.f32 %v2171, %v2324
        %v2382 = vadd.f32 %v2172, %v2324
        %v2383 = vadd.f32 %v2173, %v2324
        %v2384 = vadd.f32 %v2174, %v2324
        %v2385 = vadd.f32 %v2175, %v2324
        %v2386 = vadd.f32 %v2176, %v2325
        %v2387 = vadd.f32 %v2177, %v2325
        %v2388 = vadd.f32 %v2178, %v2325
        %v2389 = vadd.f32 %v2179, %v2325
        %v2390 = vadd.f32 %v2180, %v2325
        %v2391 = vadd.f32 %v2181, %v2325
        %v2392 = vadd.f32 %v2182, %v2325
        %v2393 = vadd.f32 %v2183, %v2325
        %v2394 = vadd.f32 %v2184, %v2325
        %v2395 = vadd.f32 %v2185, %v2325
        %v2396 = vadd.f32 %v2186, %v2325
        %v2397 = vadd.f32 %v2187, %v2325
        %v2398 = vadd.f32 %v2188, %v2325
        %v2399 = vadd.f32 %v2189, %v2325
        %v2400 = vadd.f32 %v2190, %v2325
        %v2401 = vadd.f32 %v2191, %v2325
        %v2402 = vadd.f32 %v2192, %v2326
        %v2403 = vadd.f32 %v2193, %v2326
        %v2404 = vadd.f32 %v2194, %v2326
        %v2405 = vadd.f32 %v2195, %v2326
        %v2406 = vadd.f32 %v2196, %v2326
        %v2407 = vadd.f32 %v2197, %v2326
        %v2408 = vadd.f32 %v2198, %v2326
        %v2409 = vadd.f32 %v2199, %v2326
        %v2410 = vadd.f32 %v2200, %v2326
        %v2411 = vadd.f32 %v2201, %v2326
        %v2412 = vadd.f32 %v2202, %v2326
        %v2413 = vadd.f32 %v2203, %v2326
        %v2414 = vadd.f32 %v2204, %v2326
        %v2415 = vadd.f32 %v2205, %v2326
        %v2416 = vadd.f32 %v2206, %v2326
        %v2417 = vadd.f32 %v2207, %v2326
        %v2418 = vadd.f32 %v2208, %v2327
        %v2419 = vadd.f32 %v2209, %v2327
        %v2420 = vadd.f32 %v2210, %v2327
        %v2421 = vadd.f32 %v2211, %v2327
        %v2422 = vadd.f32 %v2212, %v2327
        %v2423 = vadd.f32 %v2213, %v2327
        %v2424 = vadd.f32 %v2214, %v2327
        %v2425 = vadd.f32 %v2215, %v2327
        %v2426 = vadd.f32 %v2216, %v2327
        %v2427 = vadd.f32 %v2217, %v2327
        %v2428 = vadd.f32 %v2218, %v2327
        %v2429 = vadd.f32 %v2219, %v2327
        %v2430 = vadd.f32 %v2220, %v2327
        %v2431 = vadd.f32 %v2221, %v2327
        %v2432 = vadd.f32 %v2222, %v2327
        %v2433 = vadd.f32 %v2223, %v2327
        %v2434 = vadd.f32 %v2224, %v2328
        %v2435 = vadd.f32 %v2225, %v2328
        %v2436 = vadd.f32 %v2226, %v2328
        %v2437 = vadd.f32 %v2227, %v2328
        %v2438 = vadd.f32 %v2228, %v2328
        %v2439 = vadd.f32 %v2229, %v2328
        %v2440 = vadd.f32 %v2230, %v2328
        %v2441 = vadd.f32 %v2231, %v2328
        %v2442 = vadd.f32 %v2232, %v2328
        %v2443 = vadd.f32 %v2233, %v2328
        %v2444 = vadd.f32 %v2234, %v2328
        %v2445 = vadd.f32 %v2235, %v2328
        %v2446 = vadd.f32 %v2236, %v2328
        %v2447 = vadd.f32 %v2237, %v2328
        %v2448 = vadd.f32 %v2238, %v2328
        %v2449 = vadd.f32 %v2239, %v2328
        %v2450 = vadd.f32 %v2240, %v2329
        %v2451 = vadd.f32 %v2241, %v2329
        %v2452 = vadd.f32 %v2242, %v2329
        %v2453 = vadd.f32 %v2243, %v2329
        %v2454 = vadd.f32 %v2244, %v2329
        %v2455 = vadd.f32 %v2245, %v2329
        %v2456 = vadd.f32 %v2246, %v2329
        %v2457 = vadd.f32 %v2247, %v2329
        %v2458 = vadd.f32 %v2248, %v2329
        %v2459 = vadd.f32 %v2249, %v2329
        %v2460 = vadd.f32 %v2250, %v2329
        %v2461 = vadd.f32 %v2251, %v2329
        %v2462 = vadd.f32 %v2252, %v2329
        %v2463 = vadd.f32 %v2253, %v2329
        %v2464 = vadd.f32 %v2254, %v2329
        %v2465 = vadd.f32 %v2255, %v2329
        %v2466 = vmax.f32 %v2338, 0.0
        %v2467 = vmax.f32 %v2339, 0.0
        %v2468 = vmax.f32 %v2340, 0.0
        %v2469 = vmax.f32 %v2341, 0.0
        %v2470 = vmax.f32 %v2342, 0.0
        %v2471 = vmax.f32 %v2343, 0.0
        %v2472 = vmax.f32 %v2344, 0.0
        %v2473 = vmax.f32 %v2345, 0.0
        %v2474 = vmax.f32 %v2346, 0.0
        %v2475 = vmax.f32 %v2347, 0.0
        %v2476 = vmax.f32 %v2348, 0.0
        %v2477 = vmax.f32 %v2349, 0.0
        %v2478 = vmax.f32 %v2350, 0.0
        %v2479 = vmax.f32 %v2351, 0.0
        %v2480 = vmax.f32 %v2352, 0.0
        %v2481 = vmax.f32 %v2353, 0.0
        %v2482 = vmax.f32 %v2354, 0.0
        %v2483 = vmax.f32 %v2355, 0.0
        %v2484 = vmax.f32 %v2356, 0.0
        %v2485 = vmax.f32 %v2357, 0.0
        %v2486 = vmax.f32 %v2358, 0.0
        %v2487 = vmax.f32 %v2359, 0.0
        %v2488 = vmax.f32 %v2360, 0.0
        %v2489 = vmax.f32 %v2361, 0.0
        %v2490 = vmax.f32 %v2362, 0.0
        %v2491 = vmax.f32 %v2363, 0.0
        %v2492 = vmax.f32 %v2364, 0.0
        %v2493 = vmax.f32 %v2365, 0.0
        %v2494 = vmax.f32 %v2366, 0.0
        %v2495 = vmax.f32 %v2367, 0.0
        %v2496 = vmax.f32 %v2368, 0.0
        %v2497 = vmax.f32 %v2369, 0.0
        %v2498 = vmax.f32 %v2370, 0.0
        %v2499 = vmax.f32 %v2371, 0.0
        %v2500 = vmax.f32 %v2372, 0.0
        %v2501 = vmax.f32 %v2373, 0.0
        %v2502 = vmax.f32 %v2374, 0.0
        %v2503 = vmax.f32 %v2375, 0.0
        %v2504 = vmax.f32 %v2376, 0.0
        %v2505 = vmax.f32 %v2377, 0.0
        %v2506 = vmax.f32 %v2378, 0.0
        %v2507 = vmax.f32 %v2379, 0.0
        %v2508 = vmax.f32 %v2380, 0.0
        %v2509 = vmax.f32 %v2381, 0.0
        %v2510 = vmax.f32 %v2382, 0.0
        %v2511 = vmax.f32 %v2383, 0.0
        %v2512 = vmax.f32 %v2384, 0.0
        %v2513 = vmax.f32 %v2385, 0.0
        %v2514 = vmax.f32 %v2386, 0.0
        %v2515 = vmax.f32 %v2387, 0.0
        %v2516 = vmax.f32 %v2388, 0.0
        %v2517 = vmax.f32 %v2389, 0.0
        %v2518 = vmax.f32 %v2390, 0.0
        %v2519 = vmax.f32 %v2391, 0.0
        %v2520 = vmax.f32 %v2392, 0.0
        %v2521 = vmax.f32 %v2393, 0.0
        %v2522 = vmax.f32 %v2394, 0.0
        %v2523 = vmax.f32 %v2395, 0.0
        %v2524 = vmax.f32 %v2396, 0.0
        %v2525 = vmax.f32 %v2397, 0.0
        %v2526 = vmax.f32 %v2398, 0.0
        %v2527 = vmax.f32 %v2399, 0.0
        %v2528 = vmax.f32 %v2400, 0.0
        %v2529 = vmax.f32 %v2401, 0.0
        %v2530 = vmax.f32 %v2402, 0.0
        %v2531 = vmax.f32 %v2403, 0.0
        %v2532 = vmax.f32 %v2404, 0.0
        %v2533 = vmax.f32 %v2405, 0.0
        %v2534 = vmax.f32 %v2406, 0.0
        %v2535 = vmax.f32 %v2407, 0.0
        %v2536 = vmax.f32 %v2408, 0.0
        %v2537 = vmax.f32 %v2409, 0.0
        %v2538 = vmax.f32 %v2410, 0.0
        %v2539 = vmax.f32 %v2411, 0.0
        %v2540 = vmax.f32 %v2412, 0.0
        %v2541 = vmax.f32 %v2413, 0.0
        %v2542 = vmax.f32 %v2414, 0.0
        %v2543 = vmax.f32 %v2415, 0.0
        %v2544 = vmax.f32 %v2416, 0.0
        %v2545 = vmax.f32 %v2417, 0.0
        %v2546 = vmax.f32 %v2418, 0.0
        %v2547 = vmax.f32 %v2419, 0.0
        %v2548 = vmax.f32 %v2420, 0.0
        %v2549 = vmax.f32 %v2421, 0.0
        %v2550 = vmax.f32 %v2422, 0.0
        %v2551 = vmax.f32 %v2423, 0.0
        %v2552 = vmax.f32 %v2424, 0.0
        %v2553 = vmax.f32 %v2425, 0.0
        %v2554 = vmax.f32 %v2426, 0.0
        %v2555 = vmax.f32 %v2427, 0.0
        %v2556 = vmax.f32 %v2428, 0.0
        %v2557 = vmax.f32 %v2429, 0.0
        %v2558 = vmax.f32 %v2430, 0.0
        %v2559 = vmax.f32 %v2431, 0.0
        %v2560 = vmax.f32 %v2432, 0.0
        %v2561 = vmax.f32 %v2433, 0.0
        %v2562 = vmax.f32 %v2434, 0.0
        %v2563 = vmax.f32 %v2435, 0.0
        %v2564 = vmax.f32 %v2436, 0.0
        %v2565 = vmax.f32 %v2437, 0.0
        %v2566 = vmax.f32 %v2438, 0.0
        %v2567 = vmax.f32 %v2439, 0.0
        %v2568 = vmax.f32 %v2440, 0.0
        %v2569 = vmax.f32 %v2441, 0.0
        %v2570 = vmax.f32 %v2442, 0.0
        %v2571 = vmax.f32 %v2443, 0.0
        %v2572 = vmax.f32 %v2444, 0.0
        %v2573 = vmax.f32 %v2445, 0.0
        %v2574 = vmax.f32 %v2446, 0.0
        %v2575 = vmax.f32 %v2447, 0.0
        %v2576 = vmax.f32 %v2448, 0.0
        %v2577 = vmax.f32 %v2449, 0.0
        %v2578 = vmax.f32 %v2450, 0.0
        %v2579 = vmax.f32 %v2451, 0.0
        %v2580 = vmax.f32 %v2452, 0.0
        %v2581 = vmax.f32 %v2453, 0.0
        %v2582 = vmax.f32 %v2454, 0.0
        %v2583 = vmax.f32 %v2455, 0.0
        %v2584 = vmax.f32 %v2456, 0.0
        %v2585 = vmax.f32 %v2457, 0.0
        %v2586 = vmax.f32 %v2458, 0.0
        %v2587 = vmax.f32 %v2459, 0.0
        %v2588 = vmax.f32 %v2460, 0.0
        %v2589 = vmax.f32 %v2461, 0.0
        %v2590 = vmax.f32 %v2462, 0.0
        %v2591 = vmax.f32 %v2463, 0.0
        %v2592 = vmax.f32 %v2464, 0.0
        %v2593 = vmax.f32 %v2465, 0.0
        %v2594 = vld [vmem:[%s7] sm:$0x1]
        %v2596 = vperm.slane %v2594, 0
        %v2598 = vmul.f32 %v2466, %v2596
        %v2599 = vmul.f32 %v2467, %v2596
        %v2600 = vmul.f32 %v2468, %v2596
        %v2601 = vmul.f32 %v2469, %v2596
        %v2602 = vmul.f32 %v2470, %v2596
        %v2603 = vmul.f32 %v2471, %v2596
        %v2604 = vmul.f32 %v2472, %v2596
        %v2605 = vmul.f32 %v2473, %v2596
        %v2606 = vmul.f32 %v2474, %v2596
        %v2607 = vmul.f32 %v2475, %v2596
        %v2608 = vmul.f32 %v2476, %v2596
        %v2609 = vmul.f32 %v2477, %v2596
        %v2610 = vmul.f32 %v2478, %v2596
        %v2611 = vmul.f32 %v2479, %v2596
        %v2612 = vmul.f32 %v2480, %v2596
        %v2613 = vmul.f32 %v2481, %v2596
        %v2614 = vmul.f32 %v2482, %v2596
        %v2615 = vmul.f32 %v2483, %v2596
        %v2616 = vmul.f32 %v2484, %v2596
        %v2617 = vmul.f32 %v2485, %v2596
        %v2618 = vmul.f32 %v2486, %v2596
        %v2619 = vmul.f32 %v2487, %v2596
        %v2620 = vmul.f32 %v2488, %v2596
        %v2621 = vmul.f32 %v2489, %v2596
        %v2622 = vmul.f32 %v2490, %v2596
        %v2623 = vmul.f32 %v2491, %v2596
        %v2624 = vmul.f32 %v2492, %v2596
        %v2625 = vmul.f32 %v2493, %v2596
        %v2626 = vmul.f32 %v2494, %v2596
        %v2627 = vmul.f32 %v2495, %v2596
        %v2628 = vmul.f32 %v2496, %v2596
        %v2629 = vmul.f32 %v2497, %v2596
        %v2630 = vmul.f32 %v2498, %v2596
        %v2631 = vmul.f32 %v2499, %v2596
        %v2632 = vmul.f32 %v2500, %v2596
        %v2633 = vmul.f32 %v2501, %v2596
        %v2634 = vmul.f32 %v2502, %v2596
        %v2635 = vmul.f32 %v2503, %v2596
        %v2636 = vmul.f32 %v2504, %v2596
        %v2637 = vmul.f32 %v2505, %v2596
        %v2638 = vmul.f32 %v2506, %v2596
        %v2639 = vmul.f32 %v2507, %v2596
        %v2640 = vmul.f32 %v2508, %v2596
        %v2641 = vmul.f32 %v2509, %v2596
        %v2642 = vmul.f32 %v2510, %v2596
        %v2643 = vmul.f32 %v2511, %v2596
        %v2644 = vmul.f32 %v2512, %v2596
        %v2645 = vmul.f32 %v2513, %v2596
        %v2646 = vmul.f32 %v2514, %v2596
        %v2647 = vmul.f32 %v2515, %v2596
        %v2648 = vmul.f32 %v2516, %v2596
        %v2649 = vmul.f32 %v2517, %v2596
        %v2650 = vmul.f32 %v2518, %v2596
        %v2651 = vmul.f32 %v2519, %v2596
        %v2652 = vmul.f32 %v2520, %v2596
        %v2653 = vmul.f32 %v2521, %v2596
        %v2654 = vmul.f32 %v2522, %v2596
        %v2655 = vmul.f32 %v2523, %v2596
        %v2656 = vmul.f32 %v2524, %v2596
        %v2657 = vmul.f32 %v2525, %v2596
        %v2658 = vmul.f32 %v2526, %v2596
        %v2659 = vmul.f32 %v2527, %v2596
        %v2660 = vmul.f32 %v2528, %v2596
        %v2661 = vmul.f32 %v2529, %v2596
        %v2662 = vmul.f32 %v2530, %v2596
        %v2663 = vmul.f32 %v2531, %v2596
        %v2664 = vmul.f32 %v2532, %v2596
        %v2665 = vmul.f32 %v2533, %v2596
        %v2666 = vmul.f32 %v2534, %v2596
        %v2667 = vmul.f32 %v2535, %v2596
        %v2668 = vmul.f32 %v2536, %v2596
        %v2669 = vmul.f32 %v2537, %v2596
        %v2670 = vmul.f32 %v2538, %v2596
        %v2671 = vmul.f32 %v2539, %v2596
        %v2672 = vmul.f32 %v2540, %v2596
        %v2673 = vmul.f32 %v2541, %v2596
        %v2674 = vmul.f32 %v2542, %v2596
        %v2675 = vmul.f32 %v2543, %v2596
        %v2676 = vmul.f32 %v2544, %v2596
        %v2677 = vmul.f32 %v2545, %v2596
        %v2678 = vmul.f32 %v2546, %v2596
        %v2679 = vmul.f32 %v2547, %v2596
        %v2680 = vmul.f32 %v2548, %v2596
        %v2681 = vmul.f32 %v2549, %v2596
        %v2682 = vmul.f32 %v2550, %v2596
        %v2683 = vmul.f32 %v2551, %v2596
        %v2684 = vmul.f32 %v2552, %v2596
        %v2685 = vmul.f32 %v2553, %v2596
        %v2686 = vmul.f32 %v2554, %v2596
        %v2687 = vmul.f32 %v2555, %v2596
        %v2688 = vmul.f32 %v2556, %v2596
        %v2689 = vmul.f32 %v2557, %v2596
        %v2690 = vmul.f32 %v2558, %v2596
        %v2691 = vmul.f32 %v2559, %v2596
        %v2692 = vmul.f32 %v2560, %v2596
        %v2693 = vmul.f32 %v2561, %v2596
        %v2694 = vmul.f32 %v2562, %v2596
        %v2695 = vmul.f32 %v2563, %v2596
        %v2696 = vmul.f32 %v2564, %v2596
        %v2697 = vmul.f32 %v2565, %v2596
        %v2698 = vmul.f32 %v2566, %v2596
        %v2699 = vmul.f32 %v2567, %v2596
        %v2700 = vmul.f32 %v2568, %v2596
        %v2701 = vmul.f32 %v2569, %v2596
        %v2702 = vmul.f32 %v2570, %v2596
        %v2703 = vmul.f32 %v2571, %v2596
        %v2704 = vmul.f32 %v2572, %v2596
        %v2705 = vmul.f32 %v2573, %v2596
        %v2706 = vmul.f32 %v2574, %v2596
        %v2707 = vmul.f32 %v2575, %v2596
        %v2708 = vmul.f32 %v2576, %v2596
        %v2709 = vmul.f32 %v2577, %v2596
        %v2710 = vmul.f32 %v2578, %v2596
        %v2711 = vmul.f32 %v2579, %v2596
        %v2712 = vmul.f32 %v2580, %v2596
        %v2713 = vmul.f32 %v2581, %v2596
        %v2714 = vmul.f32 %v2582, %v2596
        %v2715 = vmul.f32 %v2583, %v2596
        %v2716 = vmul.f32 %v2584, %v2596
        %v2717 = vmul.f32 %v2585, %v2596
        %v2718 = vmul.f32 %v2586, %v2596
        %v2719 = vmul.f32 %v2587, %v2596
        %v2720 = vmul.f32 %v2588, %v2596
        %v2721 = vmul.f32 %v2589, %v2596
        %v2722 = vmul.f32 %v2590, %v2596
        %v2723 = vmul.f32 %v2591, %v2596
        %v2724 = vmul.f32 %v2592, %v2596
        %v2725 = vmul.f32 %v2593, %v2596
        %v2726 = vsel %vm2270, %v2598, 0.0
        %2727 = vadd.xlane.f32.xlu0 %v2726
        %v2728 = vpop.xlane.xlu0 %2727
        %v2729 = vsel %vm2270, %v2599, 0.0
        %2730 = vadd.xlane.f32.xlu0 %v2729
        %v2731 = vpop.xlane.xlu0 %2730
        %v2732 = vsel %vm2270, %v2600, 0.0
        %2733 = vadd.xlane.f32.xlu0 %v2732
        %v2734 = vpop.xlane.xlu0 %2733
        %v2735 = vsel %vm2270, %v2601, 0.0
        %2736 = vadd.xlane.f32.xlu0 %v2735
        %v2737 = vpop.xlane.xlu0 %2736
        %v2738 = vsel %vm2270, %v2602, 0.0
        %2739 = vadd.xlane.f32.xlu0 %v2738
        %v2740 = vpop.xlane.xlu0 %2739
        %v2741 = vsel %vm2270, %v2603, 0.0
        %2742 = vadd.xlane.f32.xlu0 %v2741
        %v2743 = vpop.xlane.xlu0 %2742
        %v2744 = vsel %vm2270, %v2604, 0.0
        %2745 = vadd.xlane.f32.xlu0 %v2744
        %v2746 = vpop.xlane.xlu0 %2745
        %v2747 = vsel %vm2270, %v2605, 0.0
        %2748 = vadd.xlane.f32.xlu0 %v2747
        %v2749 = vpop.xlane.xlu0 %2748
        %v2750 = vsel %vm2270, %v2606, 0.0
        %2751 = vadd.xlane.f32.xlu0 %v2750
        %v2752 = vpop.xlane.xlu0 %2751
        %v2753 = vsel %vm2270, %v2607, 0.0
        %2754 = vadd.xlane.f32.xlu0 %v2753
        %v2755 = vpop.xlane.xlu0 %2754
        %v2756 = vsel %vm2270, %v2608, 0.0
        %2757 = vadd.xlane.f32.xlu0 %v2756
        %v2758 = vpop.xlane.xlu0 %2757
        %v2759 = vsel %vm2270, %v2609, 0.0
        %2760 = vadd.xlane.f32.xlu0 %v2759
        %v2761 = vpop.xlane.xlu0 %2760
        %v2762 = vsel %vm2270, %v2610, 0.0
        %2763 = vadd.xlane.f32.xlu0 %v2762
        %v2764 = vpop.xlane.xlu0 %2763
        %v2765 = vsel %vm2270, %v2611, 0.0
        %2766 = vadd.xlane.f32.xlu0 %v2765
        %v2767 = vpop.xlane.xlu0 %2766
        %v2768 = vsel %vm2270, %v2612, 0.0
        %2769 = vadd.xlane.f32.xlu0 %v2768
        %v2770 = vpop.xlane.xlu0 %2769
        %v2771 = vsel %vm2270, %v2613, 0.0
        %2772 = vadd.xlane.f32.xlu0 %v2771
        %v2773 = vpop.xlane.xlu0 %2772
        %v2774 = vsel %vm2270, %v2614, 0.0
        %2775 = vadd.xlane.f32.xlu0 %v2774
        %v2776 = vpop.xlane.xlu0 %2775
        %v2777 = vsel %vm2270, %v2615, 0.0
        %2778 = vadd.xlane.f32.xlu0 %v2777
        %v2779 = vpop.xlane.xlu0 %2778
        %v2780 = vsel %vm2270, %v2616, 0.0
        %2781 = vadd.xlane.f32.xlu0 %v2780
        %v2782 = vpop.xlane.xlu0 %2781
        %v2783 = vsel %vm2270, %v2617, 0.0
        %2784 = vadd.xlane.f32.xlu0 %v2783
        %v2785 = vpop.xlane.xlu0 %2784
        %v2786 = vsel %vm2270, %v2618, 0.0
        %2787 = vadd.xlane.f32.xlu0 %v2786
        %v2788 = vpop.xlane.xlu0 %2787
        %v2789 = vsel %vm2270, %v2619, 0.0
        %2790 = vadd.xlane.f32.xlu0 %v2789
        %v2791 = vpop.xlane.xlu0 %2790
        %v2792 = vsel %vm2270, %v2620, 0.0
        %2793 = vadd.xlane.f32.xlu0 %v2792
        %v2794 = vpop.xlane.xlu0 %2793
        %v2795 = vsel %vm2270, %v2621, 0.0
        %2796 = vadd.xlane.f32.xlu0 %v2795
        %v2797 = vpop.xlane.xlu0 %2796
        %v2798 = vsel %vm2270, %v2622, 0.0
        %2799 = vadd.xlane.f32.xlu0 %v2798
        %v2800 = vpop.xlane.xlu0 %2799
        %v2801 = vsel %vm2270, %v2623, 0.0
        %2802 = vadd.xlane.f32.xlu0 %v2801
        %v2803 = vpop.xlane.xlu0 %2802
        %v2804 = vsel %vm2270, %v2624, 0.0
        %2805 = vadd.xlane.f32.xlu0 %v2804
        %v2806 = vpop.xlane.xlu0 %2805
        %v2807 = vsel %vm2270, %v2625, 0.0
        %2808 = vadd.xlane.f32.xlu0 %v2807
        %v2809 = vpop.xlane.xlu0 %2808
        %v2810 = vsel %vm2270, %v2626, 0.0
        %2811 = vadd.xlane.f32.xlu0 %v2810
        %v2812 = vpop.xlane.xlu0 %2811
        %v2813 = vsel %vm2270, %v2627, 0.0
        %2814 = vadd.xlane.f32.xlu0 %v2813
        %v2815 = vpop.xlane.xlu0 %2814
        %v2816 = vsel %vm2270, %v2628, 0.0
        %2817 = vadd.xlane.f32.xlu0 %v2816
        %v2818 = vpop.xlane.xlu0 %2817
        %v2819 = vsel %vm2270, %v2629, 0.0
        %2820 = vadd.xlane.f32.xlu0 %v2819
        %v2821 = vpop.xlane.xlu0 %2820
        %v2822 = vsel %vm2270, %v2630, 0.0
        %2823 = vadd.xlane.f32.xlu0 %v2822
        %v2824 = vpop.xlane.xlu0 %2823
        %v2825 = vsel %vm2270, %v2631, 0.0
        %2826 = vadd.xlane.f32.xlu0 %v2825
        %v2827 = vpop.xlane.xlu0 %2826
        %v2828 = vsel %vm2270, %v2632, 0.0
        %2829 = vadd.xlane.f32.xlu0 %v2828
        %v2830 = vpop.xlane.xlu0 %2829
        %v2831 = vsel %vm2270, %v2633, 0.0
        %2832 = vadd.xlane.f32.xlu0 %v2831
        %v2833 = vpop.xlane.xlu0 %2832
        %v2834 = vsel %vm2270, %v2634, 0.0
        %2835 = vadd.xlane.f32.xlu0 %v2834
        %v2836 = vpop.xlane.xlu0 %2835
        %v2837 = vsel %vm2270, %v2635, 0.0
        %2838 = vadd.xlane.f32.xlu0 %v2837
        %v2839 = vpop.xlane.xlu0 %2838
        %v2840 = vsel %vm2270, %v2636, 0.0
        %2841 = vadd.xlane.f32.xlu0 %v2840
        %v2842 = vpop.xlane.xlu0 %2841
        %v2843 = vsel %vm2270, %v2637, 0.0
        %2844 = vadd.xlane.f32.xlu0 %v2843
        %v2845 = vpop.xlane.xlu0 %2844
        %v2846 = vsel %vm2270, %v2638, 0.0
        %2847 = vadd.xlane.f32.xlu0 %v2846
        %v2848 = vpop.xlane.xlu0 %2847
        %v2849 = vsel %vm2270, %v2639, 0.0
        %2850 = vadd.xlane.f32.xlu0 %v2849
        %v2851 = vpop.xlane.xlu0 %2850
        %v2852 = vsel %vm2270, %v2640, 0.0
        %2853 = vadd.xlane.f32.xlu0 %v2852
        %v2854 = vpop.xlane.xlu0 %2853
        %v2855 = vsel %vm2270, %v2641, 0.0
        %2856 = vadd.xlane.f32.xlu0 %v2855
        %v2857 = vpop.xlane.xlu0 %2856
        %v2858 = vsel %vm2270, %v2642, 0.0
        %2859 = vadd.xlane.f32.xlu0 %v2858
        %v2860 = vpop.xlane.xlu0 %2859
        %v2861 = vsel %vm2270, %v2643, 0.0
        %2862 = vadd.xlane.f32.xlu0 %v2861
        %v2863 = vpop.xlane.xlu0 %2862
        %v2864 = vsel %vm2270, %v2644, 0.0
        %2865 = vadd.xlane.f32.xlu0 %v2864
        %v2866 = vpop.xlane.xlu0 %2865
        %v2867 = vsel %vm2270, %v2645, 0.0
        %2868 = vadd.xlane.f32.xlu0 %v2867
        %v2869 = vpop.xlane.xlu0 %2868
        %v2870 = vsel %vm2270, %v2646, 0.0
        %2871 = vadd.xlane.f32.xlu0 %v2870
        %v2872 = vpop.xlane.xlu0 %2871
        %v2873 = vsel %vm2270, %v2647, 0.0
        %2874 = vadd.xlane.f32.xlu0 %v2873
        %v2875 = vpop.xlane.xlu0 %2874
        %v2876 = vsel %vm2270, %v2648, 0.0
        %2877 = vadd.xlane.f32.xlu0 %v2876
        %v2878 = vpop.xlane.xlu0 %2877
        %v2879 = vsel %vm2270, %v2649, 0.0
        %2880 = vadd.xlane.f32.xlu0 %v2879
        %v2881 = vpop.xlane.xlu0 %2880
        %v2882 = vsel %vm2270, %v2650, 0.0
        %2883 = vadd.xlane.f32.xlu0 %v2882
        %v2884 = vpop.xlane.xlu0 %2883
        %v2885 = vsel %vm2270, %v2651, 0.0
        %2886 = vadd.xlane.f32.xlu0 %v2885
        %v2887 = vpop.xlane.xlu0 %2886
        %v2888 = vsel %vm2270, %v2652, 0.0
        %2889 = vadd.xlane.f32.xlu0 %v2888
        %v2890 = vpop.xlane.xlu0 %2889
        %v2891 = vsel %vm2270, %v2653, 0.0
        %2892 = vadd.xlane.f32.xlu0 %v2891
        %v2893 = vpop.xlane.xlu0 %2892
        %v2894 = vsel %vm2270, %v2654, 0.0
        %2895 = vadd.xlane.f32.xlu0 %v2894
        %v2896 = vpop.xlane.xlu0 %2895
        %v2897 = vsel %vm2270, %v2655, 0.0
        %2898 = vadd.xlane.f32.xlu0 %v2897
        %v2899 = vpop.xlane.xlu0 %2898
        %v2900 = vsel %vm2270, %v2656, 0.0
        %2901 = vadd.xlane.f32.xlu0 %v2900
        %v2902 = vpop.xlane.xlu0 %2901
        %v2903 = vsel %vm2270, %v2657, 0.0
        %2904 = vadd.xlane.f32.xlu0 %v2903
        %v2905 = vpop.xlane.xlu0 %2904
        %v2906 = vsel %vm2270, %v2658, 0.0
        %2907 = vadd.xlane.f32.xlu0 %v2906
        %v2908 = vpop.xlane.xlu0 %2907
        %v2909 = vsel %vm2270, %v2659, 0.0
        %2910 = vadd.xlane.f32.xlu0 %v2909
        %v2911 = vpop.xlane.xlu0 %2910
        %v2912 = vsel %vm2270, %v2660, 0.0
        %2913 = vadd.xlane.f32.xlu0 %v2912
        %v2914 = vpop.xlane.xlu0 %2913
        %v2915 = vsel %vm2270, %v2661, 0.0
        %2916 = vadd.xlane.f32.xlu0 %v2915
        %v2917 = vpop.xlane.xlu0 %2916
        %v2918 = vsel %vm2270, %v2662, 0.0
        %2919 = vadd.xlane.f32.xlu0 %v2918
        %v2920 = vpop.xlane.xlu0 %2919
        %v2921 = vsel %vm2270, %v2663, 0.0
        %2922 = vadd.xlane.f32.xlu0 %v2921
        %v2923 = vpop.xlane.xlu0 %2922
        %v2924 = vsel %vm2270, %v2664, 0.0
        %2925 = vadd.xlane.f32.xlu0 %v2924
        %v2926 = vpop.xlane.xlu0 %2925
        %v2927 = vsel %vm2270, %v2665, 0.0
        %2928 = vadd.xlane.f32.xlu0 %v2927
        %v2929 = vpop.xlane.xlu0 %2928
        %v2930 = vsel %vm2270, %v2666, 0.0
        %2931 = vadd.xlane.f32.xlu0 %v2930
        %v2932 = vpop.xlane.xlu0 %2931
        %v2933 = vsel %vm2270, %v2667, 0.0
        %2934 = vadd.xlane.f32.xlu0 %v2933
        %v2935 = vpop.xlane.xlu0 %2934
        %v2936 = vsel %vm2270, %v2668, 0.0
        %2937 = vadd.xlane.f32.xlu0 %v2936
        %v2938 = vpop.xlane.xlu0 %2937
        %v2939 = vsel %vm2270, %v2669, 0.0
        %2940 = vadd.xlane.f32.xlu0 %v2939
        %v2941 = vpop.xlane.xlu0 %2940
        %v2942 = vsel %vm2270, %v2670, 0.0
        %2943 = vadd.xlane.f32.xlu0 %v2942
        %v2944 = vpop.xlane.xlu0 %2943
        %v2945 = vsel %vm2270, %v2671, 0.0
        %2946 = vadd.xlane.f32.xlu0 %v2945
        %v2947 = vpop.xlane.xlu0 %2946
        %v2948 = vsel %vm2270, %v2672, 0.0
        %2949 = vadd.xlane.f32.xlu0 %v2948
        %v2950 = vpop.xlane.xlu0 %2949
        %v2951 = vsel %vm2270, %v2673, 0.0
        %2952 = vadd.xlane.f32.xlu0 %v2951
        %v2953 = vpop.xlane.xlu0 %2952
        %v2954 = vsel %vm2270, %v2674, 0.0
        %2955 = vadd.xlane.f32.xlu0 %v2954
        %v2956 = vpop.xlane.xlu0 %2955
        %v2957 = vsel %vm2270, %v2675, 0.0
        %2958 = vadd.xlane.f32.xlu0 %v2957
        %v2959 = vpop.xlane.xlu0 %2958
        %v2960 = vsel %vm2270, %v2676, 0.0
        %2961 = vadd.xlane.f32.xlu0 %v2960
        %v2962 = vpop.xlane.xlu0 %2961
        %v2963 = vsel %vm2270, %v2677, 0.0
        %2964 = vadd.xlane.f32.xlu0 %v2963
        %v2965 = vpop.xlane.xlu0 %2964
        %v2966 = vsel %vm2270, %v2678, 0.0
        %2967 = vadd.xlane.f32.xlu0 %v2966
        %v2968 = vpop.xlane.xlu0 %2967
        %v2969 = vsel %vm2270, %v2679, 0.0
        %2970 = vadd.xlane.f32.xlu0 %v2969
        %v2971 = vpop.xlane.xlu0 %2970
        %v2972 = vsel %vm2270, %v2680, 0.0
        %2973 = vadd.xlane.f32.xlu0 %v2972
        %v2974 = vpop.xlane.xlu0 %2973
        %v2975 = vsel %vm2270, %v2681, 0.0
        %2976 = vadd.xlane.f32.xlu0 %v2975
        %v2977 = vpop.xlane.xlu0 %2976
        %v2978 = vsel %vm2270, %v2682, 0.0
        %2979 = vadd.xlane.f32.xlu0 %v2978
        %v2980 = vpop.xlane.xlu0 %2979
        %v2981 = vsel %vm2270, %v2683, 0.0
        %2982 = vadd.xlane.f32.xlu0 %v2981
        %v2983 = vpop.xlane.xlu0 %2982
        %v2984 = vsel %vm2270, %v2684, 0.0
        %2985 = vadd.xlane.f32.xlu0 %v2984
        %v2986 = vpop.xlane.xlu0 %2985
        %v2987 = vsel %vm2270, %v2685, 0.0
        %2988 = vadd.xlane.f32.xlu0 %v2987
        %v2989 = vpop.xlane.xlu0 %2988
        %v2990 = vsel %vm2270, %v2686, 0.0
        %2991 = vadd.xlane.f32.xlu0 %v2990
        %v2992 = vpop.xlane.xlu0 %2991
        %v2993 = vsel %vm2270, %v2687, 0.0
        %2994 = vadd.xlane.f32.xlu0 %v2993
        %v2995 = vpop.xlane.xlu0 %2994
        %v2996 = vsel %vm2270, %v2688, 0.0
        %2997 = vadd.xlane.f32.xlu0 %v2996
        %v2998 = vpop.xlane.xlu0 %2997
        %v2999 = vsel %vm2270, %v2689, 0.0
        %3000 = vadd.xlane.f32.xlu0 %v2999
        %v3001 = vpop.xlane.xlu0 %3000
        %v3002 = vsel %vm2270, %v2690, 0.0
        %3003 = vadd.xlane.f32.xlu0 %v3002
        %v3004 = vpop.xlane.xlu0 %3003
        %v3005 = vsel %vm2270, %v2691, 0.0
        %3006 = vadd.xlane.f32.xlu0 %v3005
        %v3007 = vpop.xlane.xlu0 %3006
        %v3008 = vsel %vm2270, %v2692, 0.0
        %3009 = vadd.xlane.f32.xlu0 %v3008
        %v3010 = vpop.xlane.xlu0 %3009
        %v3011 = vsel %vm2270, %v2693, 0.0
        %3012 = vadd.xlane.f32.xlu0 %v3011
        %v3013 = vpop.xlane.xlu0 %3012
        %v3014 = vsel %vm2270, %v2694, 0.0
        %3015 = vadd.xlane.f32.xlu0 %v3014
        %v3016 = vpop.xlane.xlu0 %3015
        %v3017 = vsel %vm2270, %v2695, 0.0
        %3018 = vadd.xlane.f32.xlu0 %v3017
        %v3019 = vpop.xlane.xlu0 %3018
        %v3020 = vsel %vm2270, %v2696, 0.0
        %3021 = vadd.xlane.f32.xlu0 %v3020
        %v3022 = vpop.xlane.xlu0 %3021
        %v3023 = vsel %vm2270, %v2697, 0.0
        %3024 = vadd.xlane.f32.xlu0 %v3023
        %v3025 = vpop.xlane.xlu0 %3024
        %v3026 = vsel %vm2270, %v2698, 0.0
        %3027 = vadd.xlane.f32.xlu0 %v3026
        %v3028 = vpop.xlane.xlu0 %3027
        %v3029 = vsel %vm2270, %v2699, 0.0
        %3030 = vadd.xlane.f32.xlu0 %v3029
        %v3031 = vpop.xlane.xlu0 %3030
        %v3032 = vsel %vm2270, %v2700, 0.0
        %3033 = vadd.xlane.f32.xlu0 %v3032
        %v3034 = vpop.xlane.xlu0 %3033
        %v3035 = vsel %vm2270, %v2701, 0.0
        %3036 = vadd.xlane.f32.xlu0 %v3035
        %v3037 = vpop.xlane.xlu0 %3036
        %v3038 = vsel %vm2270, %v2702, 0.0
        %3039 = vadd.xlane.f32.xlu0 %v3038
        %v3040 = vpop.xlane.xlu0 %3039
        %v3041 = vsel %vm2270, %v2703, 0.0
        %3042 = vadd.xlane.f32.xlu0 %v3041
        %v3043 = vpop.xlane.xlu0 %3042
        %v3044 = vsel %vm2270, %v2704, 0.0
        %3045 = vadd.xlane.f32.xlu0 %v3044
        %v3046 = vpop.xlane.xlu0 %3045
        %v3047 = vsel %vm2270, %v2705, 0.0
        %3048 = vadd.xlane.f32.xlu0 %v3047
        %v3049 = vpop.xlane.xlu0 %3048
        %v3050 = vsel %vm2270, %v2706, 0.0
        %3051 = vadd.xlane.f32.xlu0 %v3050
        %v3052 = vpop.xlane.xlu0 %3051
        %v3053 = vsel %vm2270, %v2707, 0.0
        %3054 = vadd.xlane.f32.xlu0 %v3053
        %v3055 = vpop.xlane.xlu0 %3054
        %v3056 = vsel %vm2270, %v2708, 0.0
        %3057 = vadd.xlane.f32.xlu0 %v3056
        %v3058 = vpop.xlane.xlu0 %3057
        %v3059 = vsel %vm2270, %v2709, 0.0
        %3060 = vadd.xlane.f32.xlu0 %v3059
        %v3061 = vpop.xlane.xlu0 %3060
        %v3062 = vsel %vm2270, %v2710, 0.0
        %3063 = vadd.xlane.f32.xlu0 %v3062
        %v3064 = vpop.xlane.xlu0 %3063
        %v3065 = vsel %vm2270, %v2711, 0.0
        %3066 = vadd.xlane.f32.xlu0 %v3065
        %v3067 = vpop.xlane.xlu0 %3066
        %v3068 = vsel %vm2270, %v2712, 0.0
        %3069 = vadd.xlane.f32.xlu0 %v3068
        %v3070 = vpop.xlane.xlu0 %3069
        %v3071 = vsel %vm2270, %v2713, 0.0
        %3072 = vadd.xlane.f32.xlu0 %v3071
        %v3073 = vpop.xlane.xlu0 %3072
        %v3074 = vsel %vm2270, %v2714, 0.0
        %3075 = vadd.xlane.f32.xlu0 %v3074
        %v3076 = vpop.xlane.xlu0 %3075
        %v3077 = vsel %vm2270, %v2715, 0.0
        %3078 = vadd.xlane.f32.xlu0 %v3077
        %v3079 = vpop.xlane.xlu0 %3078
        %v3080 = vsel %vm2270, %v2716, 0.0
        %3081 = vadd.xlane.f32.xlu0 %v3080
        %v3082 = vpop.xlane.xlu0 %3081
        %v3083 = vsel %vm2270, %v2717, 0.0
        %3084 = vadd.xlane.f32.xlu0 %v3083
        %v3085 = vpop.xlane.xlu0 %3084
        %v3086 = vsel %vm2270, %v2718, 0.0
        %3087 = vadd.xlane.f32.xlu0 %v3086
        %v3088 = vpop.xlane.xlu0 %3087
        %v3089 = vsel %vm2270, %v2719, 0.0
        %3090 = vadd.xlane.f32.xlu0 %v3089
        %v3091 = vpop.xlane.xlu0 %3090
        %v3092 = vsel %vm2270, %v2720, 0.0
        %3093 = vadd.xlane.f32.xlu0 %v3092
        %v3094 = vpop.xlane.xlu0 %3093
        %v3095 = vsel %vm2270, %v2721, 0.0
        %3096 = vadd.xlane.f32.xlu0 %v3095
        %v3097 = vpop.xlane.xlu0 %3096
        %v3098 = vsel %vm2270, %v2722, 0.0
        %3099 = vadd.xlane.f32.xlu0 %v3098
        %v3100 = vpop.xlane.xlu0 %3099
        %v3101 = vsel %vm2270, %v2723, 0.0
        %3102 = vadd.xlane.f32.xlu0 %v3101
        %v3103 = vpop.xlane.xlu0 %3102
        %v3104 = vsel %vm2270, %v2724, 0.0
        %3105 = vadd.xlane.f32.xlu0 %v3104
        %v3106 = vpop.xlane.xlu0 %3105
        %v3107 = vsel %vm2270, %v2725, 0.0
        %3108 = vadd.xlane.f32.xlu0 %v3107
        %v3109 = vpop.xlane.xlu0 %3108
        %v3110 = vlaneseq
        %v3111 = vand.u32 %v3110, 127
        %vm3112 = vcmp.lt.s32.totalorder %v3111, 16
        %v3241 = vperm.slane %v2728, %v3111
        %v3242 = vadd.s32 %v3111, 4294967288
        %v3243 = vperm.slane %v2731, %v3242
        %vm3244 = vcmask 130112
        %v3245 = vsel %vm3244, %v3243, %v3241
        %v3246 = vadd.s32 %v3111, 4294967280
        %v3247 = vperm.slane %v2734, %v3246
        %vm3248 = vcmask 195712
        %v3249 = vsel %vm3248, %v3247, %v3245
        %v3250 = vadd.s32 %v3111, 4294967272
        %v3251 = vperm.slane %v2737, %v3250
        %vm3252 = vcmask 261312
        %v3253 = vsel %vm3252, %v3251, %v3249
        %v3254 = vadd.s32 %v3111, 4294967264
        %v3255 = vperm.slane %v2740, %v3254
        %vm3256 = vcmask 326912
        %v3257 = vsel %vm3256, %v3255, %v3253
        %v3258 = vadd.s32 %v3111, 4294967256
        %v3259 = vperm.slane %v2743, %v3258
        %vm3260 = vcmask 392512
        %v3261 = vsel %vm3260, %v3259, %v3257
        %v3262 = vadd.s32 %v3111, 4294967248
        %v3263 = vperm.slane %v2746, %v3262
        %vm3264 = vcmask 458112
        %v3265 = vsel %vm3264, %v3263, %v3261
        %v3266 = vadd.s32 %v3111, 4294967240
        %v3267 = vperm.slane %v2749, %v3266
        %vm3268 = vcmask 523712
        %v3269 = vsel %vm3268, %v3267, %v3265
        %v3270 = vadd.s32 %v3111, 4294967232
        %v3271 = vperm.slane %v2752, %v3270
        %vm3272 = vcmask 589312
        %v3273 = vsel %vm3272, %v3271, %v3269
        %v3274 = vadd.s32 %v3111, 4294967224
        %v3275 = vperm.slane %v2755, %v3274
        %vm3276 = vcmask 654912
        %v3277 = vsel %vm3276, %v3275, %v3273
        %v3278 = vadd.s32 %v3111, 4294967216
        %v3279 = vperm.slane %v2758, %v3278
        %vm3280 = vcmask 720512
        %v3281 = vsel %vm3280, %v3279, %v3277
        %v3282 = vadd.s32 %v3111, 4294967208
        %v3283 = vperm.slane %v2761, %v3282
        %vm3284 = vcmask 786112
        %v3285 = vsel %vm3284, %v3283, %v3281
        %v3286 = vadd.s32 %v3111, 4294967200
        %v3287 = vperm.slane %v2764, %v3286
        %vm3288 = vcmask 851712
        %v3289 = vsel %vm3288, %v3287, %v3285
        %v3290 = vadd.s32 %v3111, 4294967192
        %v3291 = vperm.slane %v2767, %v3290
        %vm3292 = vcmask 917312
        %v3293 = vsel %vm3292, %v3291, %v3289
        %v3294 = vadd.s32 %v3111, 4294967184
        %v3295 = vperm.slane %v2770, %v3294
        %vm3296 = vcmask 982912
        %v3297 = vsel %vm3296, %v3295, %v3293
        %v3298 = vadd.s32 %v3111, 4294967176
        %v3299 = vperm.slane %v2773, %v3298
        %vm3300 = vcmask 1048512
        %v3301 = vsel %vm3300, %v3299, %v3297
        %v3302 = vperm.slane %v2776, %v3111
        %v3303 = vperm.slane %v2779, %v3242
        %v3304 = vsel %vm3244, %v3303, %v3302
        %v3305 = vperm.slane %v2782, %v3246
        %v3306 = vsel %vm3248, %v3305, %v3304
        %v3307 = vperm.slane %v2785, %v3250
        %v3308 = vsel %vm3252, %v3307, %v3306
        %v3309 = vperm.slane %v2788, %v3254
        %v3310 = vsel %vm3256, %v3309, %v3308
        %v3311 = vperm.slane %v2791, %v3258
        %v3312 = vsel %vm3260, %v3311, %v3310
        %v3313 = vperm.slane %v2794, %v3262
        %v3314 = vsel %vm3264, %v3313, %v3312
        %v3315 = vperm.slane %v2797, %v3266
        %v3316 = vsel %vm3268, %v3315, %v3314
        %v3317 = vperm.slane %v2800, %v3270
        %v3318 = vsel %vm3272, %v3317, %v3316
        %v3319 = vperm.slane %v2803, %v3274
        %v3320 = vsel %vm3276, %v3319, %v3318
        %v3321 = vperm.slane %v2806, %v3278
        %v3322 = vsel %vm3280, %v3321, %v3320
        %v3323 = vperm.slane %v2809, %v3282
        %v3324 = vsel %vm3284, %v3323, %v3322
        %v3325 = vperm.slane %v2812, %v3286
        %v3326 = vsel %vm3288, %v3325, %v3324
        %v3327 = vperm.slane %v2815, %v3290
        %v3328 = vsel %vm3292, %v3327, %v3326
        %v3329 = vperm.slane %v2818, %v3294
        %v3330 = vsel %vm3296, %v3329, %v3328
        %v3331 = vperm.slane %v2821, %v3298
        %v3332 = vsel %vm3300, %v3331, %v3330
        %v3333 = vperm.slane %v2824, %v3111
        %v3334 = vperm.slane %v2827, %v3242
        %v3335 = vsel %vm3244, %v3334, %v3333
        %v3336 = vperm.slane %v2830, %v3246
        %v3337 = vsel %vm3248, %v3336, %v3335
        %v3338 = vperm.slane %v2833, %v3250
        %v3339 = vsel %vm3252, %v3338, %v3337
        %v3340 = vperm.slane %v2836, %v3254
        %v3341 = vsel %vm3256, %v3340, %v3339
        %v3342 = vperm.slane %v2839, %v3258
        %v3343 = vsel %vm3260, %v3342, %v3341
        %v3344 = vperm.slane %v2842, %v3262
        %v3345 = vsel %vm3264, %v3344, %v3343
        %v3346 = vperm.slane %v2845, %v3266
        %v3347 = vsel %vm3268, %v3346, %v3345
        %v3348 = vperm.slane %v2848, %v3270
        %v3349 = vsel %vm3272, %v3348, %v3347
        %v3350 = vperm.slane %v2851, %v3274
        %v3351 = vsel %vm3276, %v3350, %v3349
        %v3352 = vperm.slane %v2854, %v3278
        %v3353 = vsel %vm3280, %v3352, %v3351
        %v3354 = vperm.slane %v2857, %v3282
        %v3355 = vsel %vm3284, %v3354, %v3353
        %v3356 = vperm.slane %v2860, %v3286
        %v3357 = vsel %vm3288, %v3356, %v3355
        %v3358 = vperm.slane %v2863, %v3290
        %v3359 = vsel %vm3292, %v3358, %v3357
        %v3360 = vperm.slane %v2866, %v3294
        %v3361 = vsel %vm3296, %v3360, %v3359
        %v3362 = vperm.slane %v2869, %v3298
        %v3363 = vsel %vm3300, %v3362, %v3361
        %v3364 = vperm.slane %v2872, %v3111
        %v3365 = vperm.slane %v2875, %v3242
        %v3366 = vsel %vm3244, %v3365, %v3364
        %v3367 = vperm.slane %v2878, %v3246
        %v3368 = vsel %vm3248, %v3367, %v3366
        %v3369 = vperm.slane %v2881, %v3250
        %v3370 = vsel %vm3252, %v3369, %v3368
        %v3371 = vperm.slane %v2884, %v3254
        %v3372 = vsel %vm3256, %v3371, %v3370
        %v3373 = vperm.slane %v2887, %v3258
        %v3374 = vsel %vm3260, %v3373, %v3372
        %v3375 = vperm.slane %v2890, %v3262
        %v3376 = vsel %vm3264, %v3375, %v3374
        %v3377 = vperm.slane %v2893, %v3266
        %v3378 = vsel %vm3268, %v3377, %v3376
        %v3379 = vperm.slane %v2896, %v3270
        %v3380 = vsel %vm3272, %v3379, %v3378
        %v3381 = vperm.slane %v2899, %v3274
        %v3382 = vsel %vm3276, %v3381, %v3380
        %v3383 = vperm.slane %v2902, %v3278
        %v3384 = vsel %vm3280, %v3383, %v3382
        %v3385 = vperm.slane %v2905, %v3282
        %v3386 = vsel %vm3284, %v3385, %v3384
        %v3387 = vperm.slane %v2908, %v3286
        %v3388 = vsel %vm3288, %v3387, %v3386
        %v3389 = vperm.slane %v2911, %v3290
        %v3390 = vsel %vm3292, %v3389, %v3388
        %v3391 = vperm.slane %v2914, %v3294
        %v3392 = vsel %vm3296, %v3391, %v3390
        %v3393 = vperm.slane %v2917, %v3298
        %v3394 = vsel %vm3300, %v3393, %v3392
        %v3395 = vperm.slane %v2920, %v3111
        %v3396 = vperm.slane %v2923, %v3242
        %v3397 = vsel %vm3244, %v3396, %v3395
        %v3398 = vperm.slane %v2926, %v3246
        %v3399 = vsel %vm3248, %v3398, %v3397
        %v3400 = vperm.slane %v2929, %v3250
        %v3401 = vsel %vm3252, %v3400, %v3399
        %v3402 = vperm.slane %v2932, %v3254
        %v3403 = vsel %vm3256, %v3402, %v3401
        %v3404 = vperm.slane %v2935, %v3258
        %v3405 = vsel %vm3260, %v3404, %v3403
        %v3406 = vperm.slane %v2938, %v3262
        %v3407 = vsel %vm3264, %v3406, %v3405
        %v3408 = vperm.slane %v2941, %v3266
        %v3409 = vsel %vm3268, %v3408, %v3407
        %v3410 = vperm.slane %v2944, %v3270
        %v3411 = vsel %vm3272, %v3410, %v3409
        %v3412 = vperm.slane %v2947, %v3274
        %v3413 = vsel %vm3276, %v3412, %v3411
        %v3414 = vperm.slane %v2950, %v3278
        %v3415 = vsel %vm3280, %v3414, %v3413
        %v3416 = vperm.slane %v2953, %v3282
        %v3417 = vsel %vm3284, %v3416, %v3415
        %v3418 = vperm.slane %v2956, %v3286
        %v3419 = vsel %vm3288, %v3418, %v3417
        %v3420 = vperm.slane %v2959, %v3290
        %v3421 = vsel %vm3292, %v3420, %v3419
        %v3422 = vperm.slane %v2962, %v3294
        %v3423 = vsel %vm3296, %v3422, %v3421
        %v3424 = vperm.slane %v2965, %v3298
        %v3425 = vsel %vm3300, %v3424, %v3423
        %v3426 = vperm.slane %v2968, %v3111
        %v3427 = vperm.slane %v2971, %v3242
        %v3428 = vsel %vm3244, %v3427, %v3426
        %v3429 = vperm.slane %v2974, %v3246
        %v3430 = vsel %vm3248, %v3429, %v3428
        %v3431 = vperm.slane %v2977, %v3250
        %v3432 = vsel %vm3252, %v3431, %v3430
        %v3433 = vperm.slane %v2980, %v3254
        %v3434 = vsel %vm3256, %v3433, %v3432
        %v3435 = vperm.slane %v2983, %v3258
        %v3436 = vsel %vm3260, %v3435, %v3434
        %v3437 = vperm.slane %v2986, %v3262
        %v3438 = vsel %vm3264, %v3437, %v3436
        %v3439 = vperm.slane %v2989, %v3266
        %v3440 = vsel %vm3268, %v3439, %v3438
        %v3441 = vperm.slane %v2992, %v3270
        %v3442 = vsel %vm3272, %v3441, %v3440
        %v3443 = vperm.slane %v2995, %v3274
        %v3444 = vsel %vm3276, %v3443, %v3442
        %v3445 = vperm.slane %v2998, %v3278
        %v3446 = vsel %vm3280, %v3445, %v3444
        %v3447 = vperm.slane %v3001, %v3282
        %v3448 = vsel %vm3284, %v3447, %v3446
        %v3449 = vperm.slane %v3004, %v3286
        %v3450 = vsel %vm3288, %v3449, %v3448
        %v3451 = vperm.slane %v3007, %v3290
        %v3452 = vsel %vm3292, %v3451, %v3450
        %v3453 = vperm.slane %v3010, %v3294
        %v3454 = vsel %vm3296, %v3453, %v3452
        %v3455 = vperm.slane %v3013, %v3298
        %v3456 = vsel %vm3300, %v3455, %v3454
        %v3457 = vperm.slane %v3016, %v3111
        %v3458 = vperm.slane %v3019, %v3242
        %v3459 = vsel %vm3244, %v3458, %v3457
        %v3460 = vperm.slane %v3022, %v3246
        %v3461 = vsel %vm3248, %v3460, %v3459
        %v3462 = vperm.slane %v3025, %v3250
        %v3463 = vsel %vm3252, %v3462, %v3461
        %v3464 = vperm.slane %v3028, %v3254
        %v3465 = vsel %vm3256, %v3464, %v3463
        %v3466 = vperm.slane %v3031, %v3258
        %v3467 = vsel %vm3260, %v3466, %v3465
        %v3468 = vperm.slane %v3034, %v3262
        %v3469 = vsel %vm3264, %v3468, %v3467
        %v3470 = vperm.slane %v3037, %v3266
        %v3471 = vsel %vm3268, %v3470, %v3469
        %v3472 = vperm.slane %v3040, %v3270
        %v3473 = vsel %vm3272, %v3472, %v3471
        %v3474 = vperm.slane %v3043, %v3274
        %v3475 = vsel %vm3276, %v3474, %v3473
        %v3476 = vperm.slane %v3046, %v3278
        %v3477 = vsel %vm3280, %v3476, %v3475
        %v3478 = vperm.slane %v3049, %v3282
        %v3479 = vsel %vm3284, %v3478, %v3477
        %v3480 = vperm.slane %v3052, %v3286
        %v3481 = vsel %vm3288, %v3480, %v3479
        %v3482 = vperm.slane %v3055, %v3290
        %v3483 = vsel %vm3292, %v3482, %v3481
        %v3484 = vperm.slane %v3058, %v3294
        %v3485 = vsel %vm3296, %v3484, %v3483
        %v3486 = vperm.slane %v3061, %v3298
        %v3487 = vsel %vm3300, %v3486, %v3485
        %v3488 = vperm.slane %v3064, %v3111
        %v3489 = vperm.slane %v3067, %v3242
        %v3490 = vsel %vm3244, %v3489, %v3488
        %v3491 = vperm.slane %v3070, %v3246
        %v3492 = vsel %vm3248, %v3491, %v3490
        %v3493 = vperm.slane %v3073, %v3250
        %v3494 = vsel %vm3252, %v3493, %v3492
        %v3495 = vperm.slane %v3076, %v3254
        %v3496 = vsel %vm3256, %v3495, %v3494
        %v3497 = vperm.slane %v3079, %v3258
        %v3498 = vsel %vm3260, %v3497, %v3496
        %v3499 = vperm.slane %v3082, %v3262
        %v3500 = vsel %vm3264, %v3499, %v3498
        %v3501 = vperm.slane %v3085, %v3266
        %v3502 = vsel %vm3268, %v3501, %v3500
        %v3503 = vperm.slane %v3088, %v3270
        %v3504 = vsel %vm3272, %v3503, %v3502
        %v3505 = vperm.slane %v3091, %v3274
        %v3506 = vsel %vm3276, %v3505, %v3504
        %v3507 = vperm.slane %v3094, %v3278
        %v3508 = vsel %vm3280, %v3507, %v3506
        %v3509 = vperm.slane %v3097, %v3282
        %v3510 = vsel %vm3284, %v3509, %v3508
        %v3511 = vperm.slane %v3100, %v3286
        %v3512 = vsel %vm3288, %v3511, %v3510
        %v3513 = vperm.slane %v3103, %v3290
        %v3514 = vsel %vm3292, %v3513, %v3512
        %v3515 = vperm.slane %v3106, %v3294
        %v3516 = vsel %vm3296, %v3515, %v3514
        %v3517 = vperm.slane %v3109, %v3298
        %v3518 = vsel %vm3300, %v3517, %v3516
        %vm3519 = vcmask 1041409
        %v3520 = vsel %vm3519, %v3332, %v3301
        %vm3521 = vcmask 1042434
        %v3522 = vsel %vm3521, %v3363, %v3520
        %vm3523 = vcmask 1043459
        %v3524 = vsel %vm3523, %v3394, %v3522
        %vm3525 = vcmask 1044484
        %v3526 = vsel %vm3525, %v3425, %v3524
        %vm3527 = vcmask 1045509
        %v3528 = vsel %vm3527, %v3456, %v3526
        %vm3529 = vcmask 1046534
        %v3530 = vsel %vm3529, %v3487, %v3528
        %vm3531 = vcmask 1047559
        %v3532 = vsel %vm3531, %v3518, %v3530
        %v3534 = vsel %vm3112, %v3532, -1e+30
        %3535 = vmax.xlane.f32.xlu0 %v3534
        %v3536 = vpop.xlane.xlu0 %3535
        %v3537 = vsub.f32 %v3534, %v3536
        %v3538 = vmul.f32 %v3537, 1.442695
        %v3539 = vpow.pop %v3538
        %3540 = vadd.xlane.f32.xlu0 %v3539
        %v3541 = vpop.xlane.xlu0 %3540
        %v3542 = vrcp.pop %v3541
        %v3543 = vmul.f32 %v3539, %v3542
        %v3544 = vperm.slane %v3543, 0
        %v3545 = vlaneseq
        %v3546 = vshrl.u32 %v3545, 7
        %3548 = vset.pattern.permute.xlu0 %v3546
        %3549 = vperm.xlu0 %3548, %v3544
        %v3550 = vpop.permute.xlu0 %3549
        %v3551 = vlaneseq
        %v3552 = vshrl.u32 %v3551, 7
        %v3553 = vadd.s32 %v3552, 8
        %3554 = vset.pattern.permute.xlu0 %v3553
        %3555 = vperm.xlu0 %3554, %v3544
        %v3556 = vpop.permute.xlu0 %3555
        %v3557 = vlaneseq
        %v3558 = vshrl.u32 %v3557, 7
        %v3559 = vadd.s32 %v3558, 16
        %3560 = vset.pattern.permute.xlu0 %v3559
        %3561 = vperm.xlu0 %3560, %v3544
        %v3562 = vpop.permute.xlu0 %3561
        %v3563 = vlaneseq
        %v3564 = vshrl.u32 %v3563, 7
        %v3565 = vadd.s32 %v3564, 24
        %3566 = vset.pattern.permute.xlu0 %v3565
        %3567 = vperm.xlu0 %3566, %v3544
        %v3568 = vpop.permute.xlu0 %3567
        %v3569 = vlaneseq
        %v3570 = vshrl.u32 %v3569, 7
        %v3571 = vadd.s32 %v3570, 32
        %3572 = vset.pattern.permute.xlu0 %v3571
        %3573 = vperm.xlu0 %3572, %v3544
        %v3574 = vpop.permute.xlu0 %3573
        %v3575 = vlaneseq
        %v3576 = vshrl.u32 %v3575, 7
        %v3577 = vadd.s32 %v3576, 40
        %3578 = vset.pattern.permute.xlu0 %v3577
        %3579 = vperm.xlu0 %3578, %v3544
        %v3580 = vpop.permute.xlu0 %3579
        %v3581 = vlaneseq
        %v3582 = vshrl.u32 %v3581, 7
        %v3583 = vadd.s32 %v3582, 48
        %3584 = vset.pattern.permute.xlu0 %v3583
        %3585 = vperm.xlu0 %3584, %v3544
        %v3586 = vpop.permute.xlu0 %3585
        %v3587 = vlaneseq
        %v3588 = vshrl.u32 %v3587, 7
        %v3589 = vadd.s32 %v3588, 56
        %3590 = vset.pattern.permute.xlu0 %v3589
        %3591 = vperm.xlu0 %3590, %v3544
        %v3592 = vpop.permute.xlu0 %3591
        %v3593 = vlaneseq
        %v3594 = vshrl.u32 %v3593, 7
        %v3595 = vadd.s32 %v3594, 64
        %3596 = vset.pattern.permute.xlu0 %v3595
        %3597 = vperm.xlu0 %3596, %v3544
        %v3598 = vpop.permute.xlu0 %3597
        %v3599 = vlaneseq
        %v3600 = vshrl.u32 %v3599, 7
        %v3601 = vadd.s32 %v3600, 72
        %3602 = vset.pattern.permute.xlu0 %v3601
        %3603 = vperm.xlu0 %3602, %v3544
        %v3604 = vpop.permute.xlu0 %3603
        %v3605 = vlaneseq
        %v3606 = vshrl.u32 %v3605, 7
        %v3607 = vadd.s32 %v3606, 80
        %3608 = vset.pattern.permute.xlu0 %v3607
        %3609 = vperm.xlu0 %3608, %v3544
        %v3610 = vpop.permute.xlu0 %3609
        %v3611 = vlaneseq
        %v3612 = vshrl.u32 %v3611, 7
        %v3613 = vadd.s32 %v3612, 88
        %3614 = vset.pattern.permute.xlu0 %v3613
        %3615 = vperm.xlu0 %3614, %v3544
        %v3616 = vpop.permute.xlu0 %3615
        %v3617 = vlaneseq
        %v3618 = vshrl.u32 %v3617, 7
        %v3619 = vadd.s32 %v3618, 96
        %3620 = vset.pattern.permute.xlu0 %v3619
        %3621 = vperm.xlu0 %3620, %v3544
        %v3622 = vpop.permute.xlu0 %3621
        %v3623 = vlaneseq
        %v3624 = vshrl.u32 %v3623, 7
        %v3625 = vadd.s32 %v3624, 104
        %3626 = vset.pattern.permute.xlu0 %v3625
        %3627 = vperm.xlu0 %3626, %v3544
        %v3628 = vpop.permute.xlu0 %3627
        %v3629 = vlaneseq
        %v3630 = vshrl.u32 %v3629, 7
        %v3631 = vadd.s32 %v3630, 112
        %3632 = vset.pattern.permute.xlu0 %v3631
        %3633 = vperm.xlu0 %3632, %v3544
        %v3634 = vpop.permute.xlu0 %3633
        %v3635 = vlaneseq
        %v3636 = vshrl.u32 %v3635, 7
        %v3637 = vadd.s32 %v3636, 120
        %3638 = vset.pattern.permute.xlu0 %v3637
        %3639 = vperm.xlu0 %3638, %v3544
        %v3640 = vpop.permute.xlu0 %3639
        %v3641 = vperm.slane %v3543, 1
        %v3642 = vlaneseq
        %v3643 = vshrl.u32 %v3642, 7
        %3645 = vset.pattern.permute.xlu0 %v3643
        %3646 = vperm.xlu0 %3645, %v3641
        %v3647 = vpop.permute.xlu0 %3646
        %v3648 = vlaneseq
        %v3649 = vshrl.u32 %v3648, 7
        %v3650 = vadd.s32 %v3649, 8
        %3651 = vset.pattern.permute.xlu0 %v3650
        %3652 = vperm.xlu0 %3651, %v3641
        %v3653 = vpop.permute.xlu0 %3652
        %v3654 = vlaneseq
        %v3655 = vshrl.u32 %v3654, 7
        %v3656 = vadd.s32 %v3655, 16
        %3657 = vset.pattern.permute.xlu0 %v3656
        %3658 = vperm.xlu0 %3657, %v3641
        %v3659 = vpop.permute.xlu0 %3658
        %v3660 = vlaneseq
        %v3661 = vshrl.u32 %v3660, 7
        %v3662 = vadd.s32 %v3661, 24
        %3663 = vset.pattern.permute.xlu0 %v3662
        %3664 = vperm.xlu0 %3663, %v3641
        %v3665 = vpop.permute.xlu0 %3664
        %v3666 = vlaneseq
        %v3667 = vshrl.u32 %v3666, 7
        %v3668 = vadd.s32 %v3667, 32
        %3669 = vset.pattern.permute.xlu0 %v3668
        %3670 = vperm.xlu0 %3669, %v3641
        %v3671 = vpop.permute.xlu0 %3670
        %v3672 = vlaneseq
        %v3673 = vshrl.u32 %v3672, 7
        %v3674 = vadd.s32 %v3673, 40
        %3675 = vset.pattern.permute.xlu0 %v3674
        %3676 = vperm.xlu0 %3675, %v3641
        %v3677 = vpop.permute.xlu0 %3676
        %v3678 = vlaneseq
        %v3679 = vshrl.u32 %v3678, 7
        %v3680 = vadd.s32 %v3679, 48
        %3681 = vset.pattern.permute.xlu0 %v3680
        %3682 = vperm.xlu0 %3681, %v3641
        %v3683 = vpop.permute.xlu0 %3682
        %v3684 = vlaneseq
        %v3685 = vshrl.u32 %v3684, 7
        %v3686 = vadd.s32 %v3685, 56
        %3687 = vset.pattern.permute.xlu0 %v3686
        %3688 = vperm.xlu0 %3687, %v3641
        %v3689 = vpop.permute.xlu0 %3688
        %v3690 = vlaneseq
        %v3691 = vshrl.u32 %v3690, 7
        %v3692 = vadd.s32 %v3691, 64
        %3693 = vset.pattern.permute.xlu0 %v3692
        %3694 = vperm.xlu0 %3693, %v3641
        %v3695 = vpop.permute.xlu0 %3694
        %v3696 = vlaneseq
        %v3697 = vshrl.u32 %v3696, 7
        %v3698 = vadd.s32 %v3697, 72
        %3699 = vset.pattern.permute.xlu0 %v3698
        %3700 = vperm.xlu0 %3699, %v3641
        %v3701 = vpop.permute.xlu0 %3700
        %v3702 = vlaneseq
        %v3703 = vshrl.u32 %v3702, 7
        %v3704 = vadd.s32 %v3703, 80
        %3705 = vset.pattern.permute.xlu0 %v3704
        %3706 = vperm.xlu0 %3705, %v3641
        %v3707 = vpop.permute.xlu0 %3706
        %v3708 = vlaneseq
        %v3709 = vshrl.u32 %v3708, 7
        %v3710 = vadd.s32 %v3709, 88
        %3711 = vset.pattern.permute.xlu0 %v3710
        %3712 = vperm.xlu0 %3711, %v3641
        %v3713 = vpop.permute.xlu0 %3712
        %v3714 = vlaneseq
        %v3715 = vshrl.u32 %v3714, 7
        %v3716 = vadd.s32 %v3715, 96
        %3717 = vset.pattern.permute.xlu0 %v3716
        %3718 = vperm.xlu0 %3717, %v3641
        %v3719 = vpop.permute.xlu0 %3718
        %v3720 = vlaneseq
        %v3721 = vshrl.u32 %v3720, 7
        %v3722 = vadd.s32 %v3721, 104
        %3723 = vset.pattern.permute.xlu0 %v3722
        %3724 = vperm.xlu0 %3723, %v3641
        %v3725 = vpop.permute.xlu0 %3724
        %v3726 = vlaneseq
        %v3727 = vshrl.u32 %v3726, 7
        %v3728 = vadd.s32 %v3727, 112
        %3729 = vset.pattern.permute.xlu0 %v3728
        %3730 = vperm.xlu0 %3729, %v3641
        %v3731 = vpop.permute.xlu0 %3730
        %v3732 = vlaneseq
        %v3733 = vshrl.u32 %v3732, 7
        %v3734 = vadd.s32 %v3733, 120
        %3735 = vset.pattern.permute.xlu0 %v3734
        %3736 = vperm.xlu0 %3735, %v3641
        %v3737 = vpop.permute.xlu0 %3736
        %v3738 = vperm.slane %v3543, 2
        %v3739 = vlaneseq
        %v3740 = vshrl.u32 %v3739, 7
        %3742 = vset.pattern.permute.xlu0 %v3740
        %3743 = vperm.xlu0 %3742, %v3738
        %v3744 = vpop.permute.xlu0 %3743
        %v3745 = vlaneseq
        %v3746 = vshrl.u32 %v3745, 7
        %v3747 = vadd.s32 %v3746, 8
        %3748 = vset.pattern.permute.xlu0 %v3747
        %3749 = vperm.xlu0 %3748, %v3738
        %v3750 = vpop.permute.xlu0 %3749
        %v3751 = vlaneseq
        %v3752 = vshrl.u32 %v3751, 7
        %v3753 = vadd.s32 %v3752, 16
        %3754 = vset.pattern.permute.xlu0 %v3753
        %3755 = vperm.xlu0 %3754, %v3738
        %v3756 = vpop.permute.xlu0 %3755
        %v3757 = vlaneseq
        %v3758 = vshrl.u32 %v3757, 7
        %v3759 = vadd.s32 %v3758, 24
        %3760 = vset.pattern.permute.xlu0 %v3759
        %3761 = vperm.xlu0 %3760, %v3738
        %v3762 = vpop.permute.xlu0 %3761
        %v3763 = vlaneseq
        %v3764 = vshrl.u32 %v3763, 7
        %v3765 = vadd.s32 %v3764, 32
        %3766 = vset.pattern.permute.xlu0 %v3765
        %3767 = vperm.xlu0 %3766, %v3738
        %v3768 = vpop.permute.xlu0 %3767
        %v3769 = vlaneseq
        %v3770 = vshrl.u32 %v3769, 7
        %v3771 = vadd.s32 %v3770, 40
        %3772 = vset.pattern.permute.xlu0 %v3771
        %3773 = vperm.xlu0 %3772, %v3738
        %v3774 = vpop.permute.xlu0 %3773
        %v3775 = vlaneseq
        %v3776 = vshrl.u32 %v3775, 7
        %v3777 = vadd.s32 %v3776, 48
        %3778 = vset.pattern.permute.xlu0 %v3777
        %3779 = vperm.xlu0 %3778, %v3738
        %v3780 = vpop.permute.xlu0 %3779
        %v3781 = vlaneseq
        %v3782 = vshrl.u32 %v3781, 7
        %v3783 = vadd.s32 %v3782, 56
        %3784 = vset.pattern.permute.xlu0 %v3783
        %3785 = vperm.xlu0 %3784, %v3738
        %v3786 = vpop.permute.xlu0 %3785
        %v3787 = vlaneseq
        %v3788 = vshrl.u32 %v3787, 7
        %v3789 = vadd.s32 %v3788, 64
        %3790 = vset.pattern.permute.xlu0 %v3789
        %3791 = vperm.xlu0 %3790, %v3738
        %v3792 = vpop.permute.xlu0 %3791
        %v3793 = vlaneseq
        %v3794 = vshrl.u32 %v3793, 7
        %v3795 = vadd.s32 %v3794, 72
        %3796 = vset.pattern.permute.xlu0 %v3795
        %3797 = vperm.xlu0 %3796, %v3738
        %v3798 = vpop.permute.xlu0 %3797
        %v3799 = vlaneseq
        %v3800 = vshrl.u32 %v3799, 7
        %v3801 = vadd.s32 %v3800, 80
        %3802 = vset.pattern.permute.xlu0 %v3801
        %3803 = vperm.xlu0 %3802, %v3738
        %v3804 = vpop.permute.xlu0 %3803
        %v3805 = vlaneseq
        %v3806 = vshrl.u32 %v3805, 7
        %v3807 = vadd.s32 %v3806, 88
        %3808 = vset.pattern.permute.xlu0 %v3807
        %3809 = vperm.xlu0 %3808, %v3738
        %v3810 = vpop.permute.xlu0 %3809
        %v3811 = vlaneseq
        %v3812 = vshrl.u32 %v3811, 7
        %v3813 = vadd.s32 %v3812, 96
        %3814 = vset.pattern.permute.xlu0 %v3813
        %3815 = vperm.xlu0 %3814, %v3738
        %v3816 = vpop.permute.xlu0 %3815
        %v3817 = vlaneseq
        %v3818 = vshrl.u32 %v3817, 7
        %v3819 = vadd.s32 %v3818, 104
        %3820 = vset.pattern.permute.xlu0 %v3819
        %3821 = vperm.xlu0 %3820, %v3738
        %v3822 = vpop.permute.xlu0 %3821
        %v3823 = vlaneseq
        %v3824 = vshrl.u32 %v3823, 7
        %v3825 = vadd.s32 %v3824, 112
        %3826 = vset.pattern.permute.xlu0 %v3825
        %3827 = vperm.xlu0 %3826, %v3738
        %v3828 = vpop.permute.xlu0 %3827
        %v3829 = vlaneseq
        %v3830 = vshrl.u32 %v3829, 7
        %v3831 = vadd.s32 %v3830, 120
        %3832 = vset.pattern.permute.xlu0 %v3831
        %3833 = vperm.xlu0 %3832, %v3738
        %v3834 = vpop.permute.xlu0 %3833
        %v3835 = vperm.slane %v3543, 3
        %v3836 = vlaneseq
        %v3837 = vshrl.u32 %v3836, 7
        %3839 = vset.pattern.permute.xlu0 %v3837
        %3840 = vperm.xlu0 %3839, %v3835
        %v3841 = vpop.permute.xlu0 %3840
        %v3842 = vlaneseq
        %v3843 = vshrl.u32 %v3842, 7
        %v3844 = vadd.s32 %v3843, 8
        %3845 = vset.pattern.permute.xlu0 %v3844
        %3846 = vperm.xlu0 %3845, %v3835
        %v3847 = vpop.permute.xlu0 %3846
        %v3848 = vlaneseq
        %v3849 = vshrl.u32 %v3848, 7
        %v3850 = vadd.s32 %v3849, 16
        %3851 = vset.pattern.permute.xlu0 %v3850
        %3852 = vperm.xlu0 %3851, %v3835
        %v3853 = vpop.permute.xlu0 %3852
        %v3854 = vlaneseq
        %v3855 = vshrl.u32 %v3854, 7
        %v3856 = vadd.s32 %v3855, 24
        %3857 = vset.pattern.permute.xlu0 %v3856
        %3858 = vperm.xlu0 %3857, %v3835
        %v3859 = vpop.permute.xlu0 %3858
        %v3860 = vlaneseq
        %v3861 = vshrl.u32 %v3860, 7
        %v3862 = vadd.s32 %v3861, 32
        %3863 = vset.pattern.permute.xlu0 %v3862
        %3864 = vperm.xlu0 %3863, %v3835
        %v3865 = vpop.permute.xlu0 %3864
        %v3866 = vlaneseq
        %v3867 = vshrl.u32 %v3866, 7
        %v3868 = vadd.s32 %v3867, 40
        %3869 = vset.pattern.permute.xlu0 %v3868
        %3870 = vperm.xlu0 %3869, %v3835
        %v3871 = vpop.permute.xlu0 %3870
        %v3872 = vlaneseq
        %v3873 = vshrl.u32 %v3872, 7
        %v3874 = vadd.s32 %v3873, 48
        %3875 = vset.pattern.permute.xlu0 %v3874
        %3876 = vperm.xlu0 %3875, %v3835
        %v3877 = vpop.permute.xlu0 %3876
        %v3878 = vlaneseq
        %v3879 = vshrl.u32 %v3878, 7
        %v3880 = vadd.s32 %v3879, 56
        %3881 = vset.pattern.permute.xlu0 %v3880
        %3882 = vperm.xlu0 %3881, %v3835
        %v3883 = vpop.permute.xlu0 %3882
        %v3884 = vlaneseq
        %v3885 = vshrl.u32 %v3884, 7
        %v3886 = vadd.s32 %v3885, 64
        %3887 = vset.pattern.permute.xlu0 %v3886
        %3888 = vperm.xlu0 %3887, %v3835
        %v3889 = vpop.permute.xlu0 %3888
        %v3890 = vlaneseq
        %v3891 = vshrl.u32 %v3890, 7
        %v3892 = vadd.s32 %v3891, 72
        %3893 = vset.pattern.permute.xlu0 %v3892
        %3894 = vperm.xlu0 %3893, %v3835
        %v3895 = vpop.permute.xlu0 %3894
        %v3896 = vlaneseq
        %v3897 = vshrl.u32 %v3896, 7
        %v3898 = vadd.s32 %v3897, 80
        %3899 = vset.pattern.permute.xlu0 %v3898
        %3900 = vperm.xlu0 %3899, %v3835
        %v3901 = vpop.permute.xlu0 %3900
        %v3902 = vlaneseq
        %v3903 = vshrl.u32 %v3902, 7
        %v3904 = vadd.s32 %v3903, 88
        %3905 = vset.pattern.permute.xlu0 %v3904
        %3906 = vperm.xlu0 %3905, %v3835
        %v3907 = vpop.permute.xlu0 %3906
        %v3908 = vlaneseq
        %v3909 = vshrl.u32 %v3908, 7
        %v3910 = vadd.s32 %v3909, 96
        %3911 = vset.pattern.permute.xlu0 %v3910
        %3912 = vperm.xlu0 %3911, %v3835
        %v3913 = vpop.permute.xlu0 %3912
        %v3914 = vlaneseq
        %v3915 = vshrl.u32 %v3914, 7
        %v3916 = vadd.s32 %v3915, 104
        %3917 = vset.pattern.permute.xlu0 %v3916
        %3918 = vperm.xlu0 %3917, %v3835
        %v3919 = vpop.permute.xlu0 %3918
        %v3920 = vlaneseq
        %v3921 = vshrl.u32 %v3920, 7
        %v3922 = vadd.s32 %v3921, 112
        %3923 = vset.pattern.permute.xlu0 %v3922
        %3924 = vperm.xlu0 %3923, %v3835
        %v3925 = vpop.permute.xlu0 %3924
        %v3926 = vlaneseq
        %v3927 = vshrl.u32 %v3926, 7
        %v3928 = vadd.s32 %v3927, 120
        %3929 = vset.pattern.permute.xlu0 %v3928
        %3930 = vperm.xlu0 %3929, %v3835
        %v3931 = vpop.permute.xlu0 %3930
        %v3932 = vperm.slane %v3543, 4
        %v3933 = vlaneseq
        %v3934 = vshrl.u32 %v3933, 7
        %3936 = vset.pattern.permute.xlu0 %v3934
        %3937 = vperm.xlu0 %3936, %v3932
        %v3938 = vpop.permute.xlu0 %3937
        %v3939 = vlaneseq
        %v3940 = vshrl.u32 %v3939, 7
        %v3941 = vadd.s32 %v3940, 8
        %3942 = vset.pattern.permute.xlu0 %v3941
        %3943 = vperm.xlu0 %3942, %v3932
        %v3944 = vpop.permute.xlu0 %3943
        %v3945 = vlaneseq
        %v3946 = vshrl.u32 %v3945, 7
        %v3947 = vadd.s32 %v3946, 16
        %3948 = vset.pattern.permute.xlu0 %v3947
        %3949 = vperm.xlu0 %3948, %v3932
        %v3950 = vpop.permute.xlu0 %3949
        %v3951 = vlaneseq
        %v3952 = vshrl.u32 %v3951, 7
        %v3953 = vadd.s32 %v3952, 24
        %3954 = vset.pattern.permute.xlu0 %v3953
        %3955 = vperm.xlu0 %3954, %v3932
        %v3956 = vpop.permute.xlu0 %3955
        %v3957 = vlaneseq
        %v3958 = vshrl.u32 %v3957, 7
        %v3959 = vadd.s32 %v3958, 32
        %3960 = vset.pattern.permute.xlu0 %v3959
        %3961 = vperm.xlu0 %3960, %v3932
        %v3962 = vpop.permute.xlu0 %3961
        %v3963 = vlaneseq
        %v3964 = vshrl.u32 %v3963, 7
        %v3965 = vadd.s32 %v3964, 40
        %3966 = vset.pattern.permute.xlu0 %v3965
        %3967 = vperm.xlu0 %3966, %v3932
        %v3968 = vpop.permute.xlu0 %3967
        %v3969 = vlaneseq
        %v3970 = vshrl.u32 %v3969, 7
        %v3971 = vadd.s32 %v3970, 48
        %3972 = vset.pattern.permute.xlu0 %v3971
        %3973 = vperm.xlu0 %3972, %v3932
        %v3974 = vpop.permute.xlu0 %3973
        %v3975 = vlaneseq
        %v3976 = vshrl.u32 %v3975, 7
        %v3977 = vadd.s32 %v3976, 56
        %3978 = vset.pattern.permute.xlu0 %v3977
        %3979 = vperm.xlu0 %3978, %v3932
        %v3980 = vpop.permute.xlu0 %3979
        %v3981 = vlaneseq
        %v3982 = vshrl.u32 %v3981, 7
        %v3983 = vadd.s32 %v3982, 64
        %3984 = vset.pattern.permute.xlu0 %v3983
        %3985 = vperm.xlu0 %3984, %v3932
        %v3986 = vpop.permute.xlu0 %3985
        %v3987 = vlaneseq
        %v3988 = vshrl.u32 %v3987, 7
        %v3989 = vadd.s32 %v3988, 72
        %3990 = vset.pattern.permute.xlu0 %v3989
        %3991 = vperm.xlu0 %3990, %v3932
        %v3992 = vpop.permute.xlu0 %3991
        %v3993 = vlaneseq
        %v3994 = vshrl.u32 %v3993, 7
        %v3995 = vadd.s32 %v3994, 80
        %3996 = vset.pattern.permute.xlu0 %v3995
        %3997 = vperm.xlu0 %3996, %v3932
        %v3998 = vpop.permute.xlu0 %3997
        %v3999 = vlaneseq
        %v4000 = vshrl.u32 %v3999, 7
        %v4001 = vadd.s32 %v4000, 88
        %4002 = vset.pattern.permute.xlu0 %v4001
        %4003 = vperm.xlu0 %4002, %v3932
        %v4004 = vpop.permute.xlu0 %4003
        %v4005 = vlaneseq
        %v4006 = vshrl.u32 %v4005, 7
        %v4007 = vadd.s32 %v4006, 96
        %4008 = vset.pattern.permute.xlu0 %v4007
        %4009 = vperm.xlu0 %4008, %v3932
        %v4010 = vpop.permute.xlu0 %4009
        %v4011 = vlaneseq
        %v4012 = vshrl.u32 %v4011, 7
        %v4013 = vadd.s32 %v4012, 104
        %4014 = vset.pattern.permute.xlu0 %v4013
        %4015 = vperm.xlu0 %4014, %v3932
        %v4016 = vpop.permute.xlu0 %4015
        %v4017 = vlaneseq
        %v4018 = vshrl.u32 %v4017, 7
        %v4019 = vadd.s32 %v4018, 112
        %4020 = vset.pattern.permute.xlu0 %v4019
        %4021 = vperm.xlu0 %4020, %v3932
        %v4022 = vpop.permute.xlu0 %4021
        %v4023 = vlaneseq
        %v4024 = vshrl.u32 %v4023, 7
        %v4025 = vadd.s32 %v4024, 120
        %4026 = vset.pattern.permute.xlu0 %v4025
        %4027 = vperm.xlu0 %4026, %v3932
        %v4028 = vpop.permute.xlu0 %4027
        %v4029 = vperm.slane %v3543, 5
        %v4030 = vlaneseq
        %v4031 = vshrl.u32 %v4030, 7
        %4033 = vset.pattern.permute.xlu0 %v4031
        %4034 = vperm.xlu0 %4033, %v4029
        %v4035 = vpop.permute.xlu0 %4034
        %v4036 = vlaneseq
        %v4037 = vshrl.u32 %v4036, 7
        %v4038 = vadd.s32 %v4037, 8
        %4039 = vset.pattern.permute.xlu0 %v4038
        %4040 = vperm.xlu0 %4039, %v4029
        %v4041 = vpop.permute.xlu0 %4040
        %v4042 = vlaneseq
        %v4043 = vshrl.u32 %v4042, 7
        %v4044 = vadd.s32 %v4043, 16
        %4045 = vset.pattern.permute.xlu0 %v4044
        %4046 = vperm.xlu0 %4045, %v4029
        %v4047 = vpop.permute.xlu0 %4046
        %v4048 = vlaneseq
        %v4049 = vshrl.u32 %v4048, 7
        %v4050 = vadd.s32 %v4049, 24
        %4051 = vset.pattern.permute.xlu0 %v4050
        %4052 = vperm.xlu0 %4051, %v4029
        %v4053 = vpop.permute.xlu0 %4052
        %v4054 = vlaneseq
        %v4055 = vshrl.u32 %v4054, 7
        %v4056 = vadd.s32 %v4055, 32
        %4057 = vset.pattern.permute.xlu0 %v4056
        %4058 = vperm.xlu0 %4057, %v4029
        %v4059 = vpop.permute.xlu0 %4058
        %v4060 = vlaneseq
        %v4061 = vshrl.u32 %v4060, 7
        %v4062 = vadd.s32 %v4061, 40
        %4063 = vset.pattern.permute.xlu0 %v4062
        %4064 = vperm.xlu0 %4063, %v4029
        %v4065 = vpop.permute.xlu0 %4064
        %v4066 = vlaneseq
        %v4067 = vshrl.u32 %v4066, 7
        %v4068 = vadd.s32 %v4067, 48
        %4069 = vset.pattern.permute.xlu0 %v4068
        %4070 = vperm.xlu0 %4069, %v4029
        %v4071 = vpop.permute.xlu0 %4070
        %v4072 = vlaneseq
        %v4073 = vshrl.u32 %v4072, 7
        %v4074 = vadd.s32 %v4073, 56
        %4075 = vset.pattern.permute.xlu0 %v4074
        %4076 = vperm.xlu0 %4075, %v4029
        %v4077 = vpop.permute.xlu0 %4076
        %v4078 = vlaneseq
        %v4079 = vshrl.u32 %v4078, 7
        %v4080 = vadd.s32 %v4079, 64
        %4081 = vset.pattern.permute.xlu0 %v4080
        %4082 = vperm.xlu0 %4081, %v4029
        %v4083 = vpop.permute.xlu0 %4082
        %v4084 = vlaneseq
        %v4085 = vshrl.u32 %v4084, 7
        %v4086 = vadd.s32 %v4085, 72
        %4087 = vset.pattern.permute.xlu0 %v4086
        %4088 = vperm.xlu0 %4087, %v4029
        %v4089 = vpop.permute.xlu0 %4088
        %v4090 = vlaneseq
        %v4091 = vshrl.u32 %v4090, 7
        %v4092 = vadd.s32 %v4091, 80
        %4093 = vset.pattern.permute.xlu0 %v4092
        %4094 = vperm.xlu0 %4093, %v4029
        %v4095 = vpop.permute.xlu0 %4094
        %v4096 = vlaneseq
        %v4097 = vshrl.u32 %v4096, 7
        %v4098 = vadd.s32 %v4097, 88
        %4099 = vset.pattern.permute.xlu0 %v4098
        %4100 = vperm.xlu0 %4099, %v4029
        %v4101 = vpop.permute.xlu0 %4100
        %v4102 = vlaneseq
        %v4103 = vshrl.u32 %v4102, 7
        %v4104 = vadd.s32 %v4103, 96
        %4105 = vset.pattern.permute.xlu0 %v4104
        %4106 = vperm.xlu0 %4105, %v4029
        %v4107 = vpop.permute.xlu0 %4106
        %v4108 = vlaneseq
        %v4109 = vshrl.u32 %v4108, 7
        %v4110 = vadd.s32 %v4109, 104
        %4111 = vset.pattern.permute.xlu0 %v4110
        %4112 = vperm.xlu0 %4111, %v4029
        %v4113 = vpop.permute.xlu0 %4112
        %v4114 = vlaneseq
        %v4115 = vshrl.u32 %v4114, 7
        %v4116 = vadd.s32 %v4115, 112
        %4117 = vset.pattern.permute.xlu0 %v4116
        %4118 = vperm.xlu0 %4117, %v4029
        %v4119 = vpop.permute.xlu0 %4118
        %v4120 = vlaneseq
        %v4121 = vshrl.u32 %v4120, 7
        %v4122 = vadd.s32 %v4121, 120
        %4123 = vset.pattern.permute.xlu0 %v4122
        %4124 = vperm.xlu0 %4123, %v4029
        %v4125 = vpop.permute.xlu0 %4124
        %v4126 = vperm.slane %v3543, 6
        %v4127 = vlaneseq
        %v4128 = vshrl.u32 %v4127, 7
        %4130 = vset.pattern.permute.xlu0 %v4128
        %4131 = vperm.xlu0 %4130, %v4126
        %v4132 = vpop.permute.xlu0 %4131
        %v4133 = vlaneseq
        %v4134 = vshrl.u32 %v4133, 7
        %v4135 = vadd.s32 %v4134, 8
        %4136 = vset.pattern.permute.xlu0 %v4135
        %4137 = vperm.xlu0 %4136, %v4126
        %v4138 = vpop.permute.xlu0 %4137
        %v4139 = vlaneseq
        %v4140 = vshrl.u32 %v4139, 7
        %v4141 = vadd.s32 %v4140, 16
        %4142 = vset.pattern.permute.xlu0 %v4141
        %4143 = vperm.xlu0 %4142, %v4126
        %v4144 = vpop.permute.xlu0 %4143
        %v4145 = vlaneseq
        %v4146 = vshrl.u32 %v4145, 7
        %v4147 = vadd.s32 %v4146, 24
        %4148 = vset.pattern.permute.xlu0 %v4147
        %4149 = vperm.xlu0 %4148, %v4126
        %v4150 = vpop.permute.xlu0 %4149
        %v4151 = vlaneseq
        %v4152 = vshrl.u32 %v4151, 7
        %v4153 = vadd.s32 %v4152, 32
        %4154 = vset.pattern.permute.xlu0 %v4153
        %4155 = vperm.xlu0 %4154, %v4126
        %v4156 = vpop.permute.xlu0 %4155
        %v4157 = vlaneseq
        %v4158 = vshrl.u32 %v4157, 7
        %v4159 = vadd.s32 %v4158, 40
        %4160 = vset.pattern.permute.xlu0 %v4159
        %4161 = vperm.xlu0 %4160, %v4126
        %v4162 = vpop.permute.xlu0 %4161
        %v4163 = vlaneseq
        %v4164 = vshrl.u32 %v4163, 7
        %v4165 = vadd.s32 %v4164, 48
        %4166 = vset.pattern.permute.xlu0 %v4165
        %4167 = vperm.xlu0 %4166, %v4126
        %v4168 = vpop.permute.xlu0 %4167
        %v4169 = vlaneseq
        %v4170 = vshrl.u32 %v4169, 7
        %v4171 = vadd.s32 %v4170, 56
        %4172 = vset.pattern.permute.xlu0 %v4171
        %4173 = vperm.xlu0 %4172, %v4126
        %v4174 = vpop.permute.xlu0 %4173
        %v4175 = vlaneseq
        %v4176 = vshrl.u32 %v4175, 7
        %v4177 = vadd.s32 %v4176, 64
        %4178 = vset.pattern.permute.xlu0 %v4177
        %4179 = vperm.xlu0 %4178, %v4126
        %v4180 = vpop.permute.xlu0 %4179
        %v4181 = vlaneseq
        %v4182 = vshrl.u32 %v4181, 7
        %v4183 = vadd.s32 %v4182, 72
        %4184 = vset.pattern.permute.xlu0 %v4183
        %4185 = vperm.xlu0 %4184, %v4126
        %v4186 = vpop.permute.xlu0 %4185
        %v4187 = vlaneseq
        %v4188 = vshrl.u32 %v4187, 7
        %v4189 = vadd.s32 %v4188, 80
        %4190 = vset.pattern.permute.xlu0 %v4189
        %4191 = vperm.xlu0 %4190, %v4126
        %v4192 = vpop.permute.xlu0 %4191
        %v4193 = vlaneseq
        %v4194 = vshrl.u32 %v4193, 7
        %v4195 = vadd.s32 %v4194, 88
        %4196 = vset.pattern.permute.xlu0 %v4195
        %4197 = vperm.xlu0 %4196, %v4126
        %v4198 = vpop.permute.xlu0 %4197
        %v4199 = vlaneseq
        %v4200 = vshrl.u32 %v4199, 7
        %v4201 = vadd.s32 %v4200, 96
        %4202 = vset.pattern.permute.xlu0 %v4201
        %4203 = vperm.xlu0 %4202, %v4126
        %v4204 = vpop.permute.xlu0 %4203
        %v4205 = vlaneseq
        %v4206 = vshrl.u32 %v4205, 7
        %v4207 = vadd.s32 %v4206, 104
        %4208 = vset.pattern.permute.xlu0 %v4207
        %4209 = vperm.xlu0 %4208, %v4126
        %v4210 = vpop.permute.xlu0 %4209
        %v4211 = vlaneseq
        %v4212 = vshrl.u32 %v4211, 7
        %v4213 = vadd.s32 %v4212, 112
        %4214 = vset.pattern.permute.xlu0 %v4213
        %4215 = vperm.xlu0 %4214, %v4126
        %v4216 = vpop.permute.xlu0 %4215
        %v4217 = vlaneseq
        %v4218 = vshrl.u32 %v4217, 7
        %v4219 = vadd.s32 %v4218, 120
        %4220 = vset.pattern.permute.xlu0 %v4219
        %4221 = vperm.xlu0 %4220, %v4126
        %v4222 = vpop.permute.xlu0 %4221
        %v4223 = vperm.slane %v3543, 7
        %v4224 = vlaneseq
        %v4225 = vshrl.u32 %v4224, 7
        %4227 = vset.pattern.permute.xlu0 %v4225
        %4228 = vperm.xlu0 %4227, %v4223
        %v4229 = vpop.permute.xlu0 %4228
        %v4230 = vlaneseq
        %v4231 = vshrl.u32 %v4230, 7
        %v4232 = vadd.s32 %v4231, 8
        %4233 = vset.pattern.permute.xlu0 %v4232
        %4234 = vperm.xlu0 %4233, %v4223
        %v4235 = vpop.permute.xlu0 %4234
        %v4236 = vlaneseq
        %v4237 = vshrl.u32 %v4236, 7
        %v4238 = vadd.s32 %v4237, 16
        %4239 = vset.pattern.permute.xlu0 %v4238
        %4240 = vperm.xlu0 %4239, %v4223
        %v4241 = vpop.permute.xlu0 %4240
        %v4242 = vlaneseq
        %v4243 = vshrl.u32 %v4242, 7
        %v4244 = vadd.s32 %v4243, 24
        %4245 = vset.pattern.permute.xlu0 %v4244
        %4246 = vperm.xlu0 %4245, %v4223
        %v4247 = vpop.permute.xlu0 %4246
        %v4248 = vlaneseq
        %v4249 = vshrl.u32 %v4248, 7
        %v4250 = vadd.s32 %v4249, 32
        %4251 = vset.pattern.permute.xlu0 %v4250
        %4252 = vperm.xlu0 %4251, %v4223
        %v4253 = vpop.permute.xlu0 %4252
        %v4254 = vlaneseq
        %v4255 = vshrl.u32 %v4254, 7
        %v4256 = vadd.s32 %v4255, 40
        %4257 = vset.pattern.permute.xlu0 %v4256
        %4258 = vperm.xlu0 %4257, %v4223
        %v4259 = vpop.permute.xlu0 %4258
        %v4260 = vlaneseq
        %v4261 = vshrl.u32 %v4260, 7
        %v4262 = vadd.s32 %v4261, 48
        %4263 = vset.pattern.permute.xlu0 %v4262
        %4264 = vperm.xlu0 %4263, %v4223
        %v4265 = vpop.permute.xlu0 %4264
        %v4266 = vlaneseq
        %v4267 = vshrl.u32 %v4266, 7
        %v4268 = vadd.s32 %v4267, 56
        %4269 = vset.pattern.permute.xlu0 %v4268
        %4270 = vperm.xlu0 %4269, %v4223
        %v4271 = vpop.permute.xlu0 %4270
        %v4272 = vlaneseq
        %v4273 = vshrl.u32 %v4272, 7
        %v4274 = vadd.s32 %v4273, 64
        %4275 = vset.pattern.permute.xlu0 %v4274
        %4276 = vperm.xlu0 %4275, %v4223
        %v4277 = vpop.permute.xlu0 %4276
        %v4278 = vlaneseq
        %v4279 = vshrl.u32 %v4278, 7
        %v4280 = vadd.s32 %v4279, 72
        %4281 = vset.pattern.permute.xlu0 %v4280
        %4282 = vperm.xlu0 %4281, %v4223
        %v4283 = vpop.permute.xlu0 %4282
        %v4284 = vlaneseq
        %v4285 = vshrl.u32 %v4284, 7
        %v4286 = vadd.s32 %v4285, 80
        %4287 = vset.pattern.permute.xlu0 %v4286
        %4288 = vperm.xlu0 %4287, %v4223
        %v4289 = vpop.permute.xlu0 %4288
        %v4290 = vlaneseq
        %v4291 = vshrl.u32 %v4290, 7
        %v4292 = vadd.s32 %v4291, 88
        %4293 = vset.pattern.permute.xlu0 %v4292
        %4294 = vperm.xlu0 %4293, %v4223
        %v4295 = vpop.permute.xlu0 %4294
        %v4296 = vlaneseq
        %v4297 = vshrl.u32 %v4296, 7
        %v4298 = vadd.s32 %v4297, 96
        %4299 = vset.pattern.permute.xlu0 %v4298
        %4300 = vperm.xlu0 %4299, %v4223
        %v4301 = vpop.permute.xlu0 %4300
        %v4302 = vlaneseq
        %v4303 = vshrl.u32 %v4302, 7
        %v4304 = vadd.s32 %v4303, 104
        %4305 = vset.pattern.permute.xlu0 %v4304
        %4306 = vperm.xlu0 %4305, %v4223
        %v4307 = vpop.permute.xlu0 %4306
        %v4308 = vlaneseq
        %v4309 = vshrl.u32 %v4308, 7
        %v4310 = vadd.s32 %v4309, 112
        %4311 = vset.pattern.permute.xlu0 %v4310
        %4312 = vperm.xlu0 %4311, %v4223
        %v4313 = vpop.permute.xlu0 %4312
        %v4314 = vlaneseq
        %v4315 = vshrl.u32 %v4314, 7
        %v4316 = vadd.s32 %v4315, 120
        %4317 = vset.pattern.permute.xlu0 %v4316
        %4318 = vperm.xlu0 %4317, %v4223
        %v4319 = vpop.permute.xlu0 %4318
        %v4320 = vmul.f32 %v2000, %v3550
        %v4321 = vmul.f32 %v2001, %v3556
        %v4322 = vmul.f32 %v2002, %v3562
        %v4323 = vmul.f32 %v2003, %v3568
        %v4324 = vmul.f32 %v2004, %v3574
        %v4325 = vmul.f32 %v2005, %v3580
        %v4326 = vmul.f32 %v2006, %v3586
        %v4327 = vmul.f32 %v2007, %v3592
        %v4328 = vmul.f32 %v2008, %v3598
        %v4329 = vmul.f32 %v2009, %v3604
        %v4330 = vmul.f32 %v2010, %v3610
        %v4331 = vmul.f32 %v2011, %v3616
        %v4332 = vmul.f32 %v2012, %v3622
        %v4333 = vmul.f32 %v2013, %v3628
        %v4334 = vmul.f32 %v2014, %v3634
        %v4335 = vmul.f32 %v2015, %v3640
        %v4336 = vmul.f32 %v2016, %v3647
        %v4337 = vmul.f32 %v2017, %v3653
        %v4338 = vmul.f32 %v2018, %v3659
        %v4339 = vmul.f32 %v2019, %v3665
        %v4340 = vmul.f32 %v2020, %v3671
        %v4341 = vmul.f32 %v2021, %v3677
        %v4342 = vmul.f32 %v2022, %v3683
        %v4343 = vmul.f32 %v2023, %v3689
        %v4344 = vmul.f32 %v2024, %v3695
        %v4345 = vmul.f32 %v2025, %v3701
        %v4346 = vmul.f32 %v2026, %v3707
        %v4347 = vmul.f32 %v2027, %v3713
        %v4348 = vmul.f32 %v2028, %v3719
        %v4349 = vmul.f32 %v2029, %v3725
        %v4350 = vmul.f32 %v2030, %v3731
        %v4351 = vmul.f32 %v2031, %v3737
        %v4352 = vmul.f32 %v2032, %v3744
        %v4353 = vmul.f32 %v2033, %v3750
        %v4354 = vmul.f32 %v2034, %v3756
        %v4355 = vmul.f32 %v2035, %v3762
        %v4356 = vmul.f32 %v2036, %v3768
        %v4357 = vmul.f32 %v2037, %v3774
        %v4358 = vmul.f32 %v2038, %v3780
        %v4359 = vmul.f32 %v2039, %v3786
        %v4360 = vmul.f32 %v2040, %v3792
        %v4361 = vmul.f32 %v2041, %v3798
        %v4362 = vmul.f32 %v2042, %v3804
        %v4363 = vmul.f32 %v2043, %v3810
        %v4364 = vmul.f32 %v2044, %v3816
        %v4365 = vmul.f32 %v2045, %v3822
        %v4366 = vmul.f32 %v2046, %v3828
        %v4367 = vmul.f32 %v2047, %v3834
        %v4368 = vmul.f32 %v2048, %v3841
        %v4369 = vmul.f32 %v2049, %v3847
        %v4370 = vmul.f32 %v2050, %v3853
        %v4371 = vmul.f32 %v2051, %v3859
        %v4372 = vmul.f32 %v2052, %v3865
        %v4373 = vmul.f32 %v2053, %v3871
        %v4374 = vmul.f32 %v2054, %v3877
        %v4375 = vmul.f32 %v2055, %v3883
        %v4376 = vmul.f32 %v2056, %v3889
        %v4377 = vmul.f32 %v2057, %v3895
        %v4378 = vmul.f32 %v2058, %v3901
        %v4379 = vmul.f32 %v2059, %v3907
        %v4380 = vmul.f32 %v2060, %v3913
        %v4381 = vmul.f32 %v2061, %v3919
        %v4382 = vmul.f32 %v2062, %v3925
        %v4383 = vmul.f32 %v2063, %v3931
        %v4384 = vmul.f32 %v2064, %v3938
        %v4385 = vmul.f32 %v2065, %v3944
        %v4386 = vmul.f32 %v2066, %v3950
        %v4387 = vmul.f32 %v2067, %v3956
        %v4388 = vmul.f32 %v2068, %v3962
        %v4389 = vmul.f32 %v2069, %v3968
        %v4390 = vmul.f32 %v2070, %v3974
        %v4391 = vmul.f32 %v2071, %v3980
        %v4392 = vmul.f32 %v2072, %v3986
        %v4393 = vmul.f32 %v2073, %v3992
        %v4394 = vmul.f32 %v2074, %v3998
        %v4395 = vmul.f32 %v2075, %v4004
        %v4396 = vmul.f32 %v2076, %v4010
        %v4397 = vmul.f32 %v2077, %v4016
        %v4398 = vmul.f32 %v2078, %v4022
        %v4399 = vmul.f32 %v2079, %v4028
        %v4400 = vmul.f32 %v2080, %v4035
        %v4401 = vmul.f32 %v2081, %v4041
        %v4402 = vmul.f32 %v2082, %v4047
        %v4403 = vmul.f32 %v2083, %v4053
        %v4404 = vmul.f32 %v2084, %v4059
        %v4405 = vmul.f32 %v2085, %v4065
        %v4406 = vmul.f32 %v2086, %v4071
        %v4407 = vmul.f32 %v2087, %v4077
        %v4408 = vmul.f32 %v2088, %v4083
        %v4409 = vmul.f32 %v2089, %v4089
        %v4410 = vmul.f32 %v2090, %v4095
        %v4411 = vmul.f32 %v2091, %v4101
        %v4412 = vmul.f32 %v2092, %v4107
        %v4413 = vmul.f32 %v2093, %v4113
        %v4414 = vmul.f32 %v2094, %v4119
        %v4415 = vmul.f32 %v2095, %v4125
        %v4416 = vmul.f32 %v2096, %v4132
        %v4417 = vmul.f32 %v2097, %v4138
        %v4418 = vmul.f32 %v2098, %v4144
        %v4419 = vmul.f32 %v2099, %v4150
        %v4420 = vmul.f32 %v2100, %v4156
        %v4421 = vmul.f32 %v2101, %v4162
        %v4422 = vmul.f32 %v2102, %v4168
        %v4423 = vmul.f32 %v2103, %v4174
        %v4424 = vmul.f32 %v2104, %v4180
        %v4425 = vmul.f32 %v2105, %v4186
        %v4426 = vmul.f32 %v2106, %v4192
        %v4427 = vmul.f32 %v2107, %v4198
        %v4428 = vmul.f32 %v2108, %v4204
        %v4429 = vmul.f32 %v2109, %v4210
        %v4430 = vmul.f32 %v2110, %v4216
        %v4431 = vmul.f32 %v2111, %v4222
        %v4432 = vmul.f32 %v2112, %v4229
        %v4433 = vmul.f32 %v2113, %v4235
        %v4434 = vmul.f32 %v2114, %v4241
        %v4435 = vmul.f32 %v2115, %v4247
        %v4436 = vmul.f32 %v2116, %v4253
        %v4437 = vmul.f32 %v2117, %v4259
        %v4438 = vmul.f32 %v2118, %v4265
        %v4439 = vmul.f32 %v2119, %v4271
        %v4440 = vmul.f32 %v2120, %v4277
        %v4441 = vmul.f32 %v2121, %v4283
        %v4442 = vmul.f32 %v2122, %v4289
        %v4443 = vmul.f32 %v2123, %v4295
        %v4444 = vmul.f32 %v2124, %v4301
        %v4445 = vmul.f32 %v2125, %v4307
        %v4446 = vmul.f32 %v2126, %v4313
        %v4447 = vmul.f32 %v2127, %v4319
        %v4448 = vsel %vm2270, %v4320, 0.0
        %v4449 = vsel %vm2270, %v4321, 0.0
        %v4450 = vadd.f32 %v4448, %v4449
        %v4451 = vsel %vm2270, %v4322, 0.0
        %v4452 = vadd.f32 %v4450, %v4451
        %v4453 = vsel %vm2270, %v4323, 0.0
        %v4454 = vadd.f32 %v4452, %v4453
        %v4455 = vsel %vm2270, %v4324, 0.0
        %v4456 = vadd.f32 %v4454, %v4455
        %v4457 = vsel %vm2270, %v4325, 0.0
        %v4458 = vadd.f32 %v4456, %v4457
        %v4459 = vsel %vm2270, %v4326, 0.0
        %v4460 = vadd.f32 %v4458, %v4459
        %v4461 = vsel %vm2270, %v4327, 0.0
        %v4462 = vadd.f32 %v4460, %v4461
        %v4463 = vsel %vm2270, %v4328, 0.0
        %v4464 = vadd.f32 %v4462, %v4463
        %v4465 = vsel %vm2270, %v4329, 0.0
        %v4466 = vadd.f32 %v4464, %v4465
        %v4467 = vsel %vm2270, %v4330, 0.0
        %v4468 = vadd.f32 %v4466, %v4467
        %v4469 = vsel %vm2270, %v4331, 0.0
        %v4470 = vadd.f32 %v4468, %v4469
        %v4471 = vsel %vm2270, %v4332, 0.0
        %v4472 = vadd.f32 %v4470, %v4471
        %v4473 = vsel %vm2270, %v4333, 0.0
        %v4474 = vadd.f32 %v4472, %v4473
        %v4475 = vsel %vm2270, %v4334, 0.0
        %v4476 = vadd.f32 %v4474, %v4475
        %v4477 = vsel %vm2270, %v4335, 0.0
        %v4478 = vadd.f32 %v4476, %v4477
        %v4479 = vrot.slane %v4478, 4
        %v4480 = vadd.f32 %v4478, %v4479
        %v4481 = vrot.slane %v4480, 2
        %v4482 = vadd.f32 %v4480, %v4481
        %v4483 = vrot.slane %v4482, 1
        %v4484 = vadd.f32 %v4482, %v4483
        %v4485 = vsel %vm2270, %v4336, 0.0
        %v4486 = vsel %vm2270, %v4337, 0.0
        %v4487 = vadd.f32 %v4485, %v4486
        %v4488 = vsel %vm2270, %v4338, 0.0
        %v4489 = vadd.f32 %v4487, %v4488
        %v4490 = vsel %vm2270, %v4339, 0.0
        %v4491 = vadd.f32 %v4489, %v4490
        %v4492 = vsel %vm2270, %v4340, 0.0
        %v4493 = vadd.f32 %v4491, %v4492
        %v4494 = vsel %vm2270, %v4341, 0.0
        %v4495 = vadd.f32 %v4493, %v4494
        %v4496 = vsel %vm2270, %v4342, 0.0
        %v4497 = vadd.f32 %v4495, %v4496
        %v4498 = vsel %vm2270, %v4343, 0.0
        %v4499 = vadd.f32 %v4497, %v4498
        %v4500 = vsel %vm2270, %v4344, 0.0
        %v4501 = vadd.f32 %v4499, %v4500
        %v4502 = vsel %vm2270, %v4345, 0.0
        %v4503 = vadd.f32 %v4501, %v4502
        %v4504 = vsel %vm2270, %v4346, 0.0
        %v4505 = vadd.f32 %v4503, %v4504
        %v4506 = vsel %vm2270, %v4347, 0.0
        %v4507 = vadd.f32 %v4505, %v4506
        %v4508 = vsel %vm2270, %v4348, 0.0
        %v4509 = vadd.f32 %v4507, %v4508
        %v4510 = vsel %vm2270, %v4349, 0.0
        %v4511 = vadd.f32 %v4509, %v4510
        %v4512 = vsel %vm2270, %v4350, 0.0
        %v4513 = vadd.f32 %v4511, %v4512
        %v4514 = vsel %vm2270, %v4351, 0.0
        %v4515 = vadd.f32 %v4513, %v4514
        %v4516 = vrot.slane %v4515, 4
        %v4517 = vadd.f32 %v4515, %v4516
        %v4518 = vrot.slane %v4517, 2
        %v4519 = vadd.f32 %v4517, %v4518
        %v4520 = vrot.slane %v4519, 1
        %v4521 = vadd.f32 %v4519, %v4520
        %v4522 = vsel %vm2270, %v4352, 0.0
        %v4523 = vsel %vm2270, %v4353, 0.0
        %v4524 = vadd.f32 %v4522, %v4523
        %v4525 = vsel %vm2270, %v4354, 0.0
        %v4526 = vadd.f32 %v4524, %v4525
        %v4527 = vsel %vm2270, %v4355, 0.0
        %v4528 = vadd.f32 %v4526, %v4527
        %v4529 = vsel %vm2270, %v4356, 0.0
        %v4530 = vadd.f32 %v4528, %v4529
        %v4531 = vsel %vm2270, %v4357, 0.0
        %v4532 = vadd.f32 %v4530, %v4531
        %v4533 = vsel %vm2270, %v4358, 0.0
        %v4534 = vadd.f32 %v4532, %v4533
        %v4535 = vsel %vm2270, %v4359, 0.0
        %v4536 = vadd.f32 %v4534, %v4535
        %v4537 = vsel %vm2270, %v4360, 0.0
        %v4538 = vadd.f32 %v4536, %v4537
        %v4539 = vsel %vm2270, %v4361, 0.0
        %v4540 = vadd.f32 %v4538, %v4539
        %v4541 = vsel %vm2270, %v4362, 0.0
        %v4542 = vadd.f32 %v4540, %v4541
        %v4543 = vsel %vm2270, %v4363, 0.0
        %v4544 = vadd.f32 %v4542, %v4543
        %v4545 = vsel %vm2270, %v4364, 0.0
        %v4546 = vadd.f32 %v4544, %v4545
        %v4547 = vsel %vm2270, %v4365, 0.0
        %v4548 = vadd.f32 %v4546, %v4547
        %v4549 = vsel %vm2270, %v4366, 0.0
        %v4550 = vadd.f32 %v4548, %v4549
        %v4551 = vsel %vm2270, %v4367, 0.0
        %v4552 = vadd.f32 %v4550, %v4551
        %v4553 = vrot.slane %v4552, 4
        %v4554 = vadd.f32 %v4552, %v4553
        %v4555 = vrot.slane %v4554, 2
        %v4556 = vadd.f32 %v4554, %v4555
        %v4557 = vrot.slane %v4556, 1
        %v4558 = vadd.f32 %v4556, %v4557
        %v4559 = vsel %vm2270, %v4368, 0.0
        %v4560 = vsel %vm2270, %v4369, 0.0
        %v4561 = vadd.f32 %v4559, %v4560
        %v4562 = vsel %vm2270, %v4370, 0.0
        %v4563 = vadd.f32 %v4561, %v4562
        %v4564 = vsel %vm2270, %v4371, 0.0
        %v4565 = vadd.f32 %v4563, %v4564
        %v4566 = vsel %vm2270, %v4372, 0.0
        %v4567 = vadd.f32 %v4565, %v4566
        %v4568 = vsel %vm2270, %v4373, 0.0
        %v4569 = vadd.f32 %v4567, %v4568
        %v4570 = vsel %vm2270, %v4374, 0.0
        %v4571 = vadd.f32 %v4569, %v4570
        %v4572 = vsel %vm2270, %v4375, 0.0
        %v4573 = vadd.f32 %v4571, %v4572
        %v4574 = vsel %vm2270, %v4376, 0.0
        %v4575 = vadd.f32 %v4573, %v4574
        %v4576 = vsel %vm2270, %v4377, 0.0
        %v4577 = vadd.f32 %v4575, %v4576
        %v4578 = vsel %vm2270, %v4378, 0.0
        %v4579 = vadd.f32 %v4577, %v4578
        %v4580 = vsel %vm2270, %v4379, 0.0
        %v4581 = vadd.f32 %v4579, %v4580
        %v4582 = vsel %vm2270, %v4380, 0.0
        %v4583 = vadd.f32 %v4581, %v4582
        %v4584 = vsel %vm2270, %v4381, 0.0
        %v4585 = vadd.f32 %v4583, %v4584
        %v4586 = vsel %vm2270, %v4382, 0.0
        %v4587 = vadd.f32 %v4585, %v4586
        %v4588 = vsel %vm2270, %v4383, 0.0
        %v4589 = vadd.f32 %v4587, %v4588
        %v4590 = vrot.slane %v4589, 4
        %v4591 = vadd.f32 %v4589, %v4590
        %v4592 = vrot.slane %v4591, 2
        %v4593 = vadd.f32 %v4591, %v4592
        %v4594 = vrot.slane %v4593, 1
        %v4595 = vadd.f32 %v4593, %v4594
        %v4596 = vsel %vm2270, %v4384, 0.0
        %v4597 = vsel %vm2270, %v4385, 0.0
        %v4598 = vadd.f32 %v4596, %v4597
        %v4599 = vsel %vm2270, %v4386, 0.0
        %v4600 = vadd.f32 %v4598, %v4599
        %v4601 = vsel %vm2270, %v4387, 0.0
        %v4602 = vadd.f32 %v4600, %v4601
        %v4603 = vsel %vm2270, %v4388, 0.0
        %v4604 = vadd.f32 %v4602, %v4603
        %v4605 = vsel %vm2270, %v4389, 0.0
        %v4606 = vadd.f32 %v4604, %v4605
        %v4607 = vsel %vm2270, %v4390, 0.0
        %v4608 = vadd.f32 %v4606, %v4607
        %v4609 = vsel %vm2270, %v4391, 0.0
        %v4610 = vadd.f32 %v4608, %v4609
        %v4611 = vsel %vm2270, %v4392, 0.0
        %v4612 = vadd.f32 %v4610, %v4611
        %v4613 = vsel %vm2270, %v4393, 0.0
        %v4614 = vadd.f32 %v4612, %v4613
        %v4615 = vsel %vm2270, %v4394, 0.0
        %v4616 = vadd.f32 %v4614, %v4615
        %v4617 = vsel %vm2270, %v4395, 0.0
        %v4618 = vadd.f32 %v4616, %v4617
        %v4619 = vsel %vm2270, %v4396, 0.0
        %v4620 = vadd.f32 %v4618, %v4619
        %v4621 = vsel %vm2270, %v4397, 0.0
        %v4622 = vadd.f32 %v4620, %v4621
        %v4623 = vsel %vm2270, %v4398, 0.0
        %v4624 = vadd.f32 %v4622, %v4623
        %v4625 = vsel %vm2270, %v4399, 0.0
        %v4626 = vadd.f32 %v4624, %v4625
        %v4627 = vrot.slane %v4626, 4
        %v4628 = vadd.f32 %v4626, %v4627
        %v4629 = vrot.slane %v4628, 2
        %v4630 = vadd.f32 %v4628, %v4629
        %v4631 = vrot.slane %v4630, 1
        %v4632 = vadd.f32 %v4630, %v4631
        %v4633 = vsel %vm2270, %v4400, 0.0
        %v4634 = vsel %vm2270, %v4401, 0.0
        %v4635 = vadd.f32 %v4633, %v4634
        %v4636 = vsel %vm2270, %v4402, 0.0
        %v4637 = vadd.f32 %v4635, %v4636
        %v4638 = vsel %vm2270, %v4403, 0.0
        %v4639 = vadd.f32 %v4637, %v4638
        %v4640 = vsel %vm2270, %v4404, 0.0
        %v4641 = vadd.f32 %v4639, %v4640
        %v4642 = vsel %vm2270, %v4405, 0.0
        %v4643 = vadd.f32 %v4641, %v4642
        %v4644 = vsel %vm2270, %v4406, 0.0
        %v4645 = vadd.f32 %v4643, %v4644
        %v4646 = vsel %vm2270, %v4407, 0.0
        %v4647 = vadd.f32 %v4645, %v4646
        %v4648 = vsel %vm2270, %v4408, 0.0
        %v4649 = vadd.f32 %v4647, %v4648
        %v4650 = vsel %vm2270, %v4409, 0.0
        %v4651 = vadd.f32 %v4649, %v4650
        %v4652 = vsel %vm2270, %v4410, 0.0
        %v4653 = vadd.f32 %v4651, %v4652
        %v4654 = vsel %vm2270, %v4411, 0.0
        %v4655 = vadd.f32 %v4653, %v4654
        %v4656 = vsel %vm2270, %v4412, 0.0
        %v4657 = vadd.f32 %v4655, %v4656
        %v4658 = vsel %vm2270, %v4413, 0.0
        %v4659 = vadd.f32 %v4657, %v4658
        %v4660 = vsel %vm2270, %v4414, 0.0
        %v4661 = vadd.f32 %v4659, %v4660
        %v4662 = vsel %vm2270, %v4415, 0.0
        %v4663 = vadd.f32 %v4661, %v4662
        %v4664 = vrot.slane %v4663, 4
        %v4665 = vadd.f32 %v4663, %v4664
        %v4666 = vrot.slane %v4665, 2
        %v4667 = vadd.f32 %v4665, %v4666
        %v4668 = vrot.slane %v4667, 1
        %v4669 = vadd.f32 %v4667, %v4668
        %v4670 = vsel %vm2270, %v4416, 0.0
        %v4671 = vsel %vm2270, %v4417, 0.0
        %v4672 = vadd.f32 %v4670, %v4671
        %v4673 = vsel %vm2270, %v4418, 0.0
        %v4674 = vadd.f32 %v4672, %v4673
        %v4675 = vsel %vm2270, %v4419, 0.0
        %v4676 = vadd.f32 %v4674, %v4675
        %v4677 = vsel %vm2270, %v4420, 0.0
        %v4678 = vadd.f32 %v4676, %v4677
        %v4679 = vsel %vm2270, %v4421, 0.0
        %v4680 = vadd.f32 %v4678, %v4679
        %v4681 = vsel %vm2270, %v4422, 0.0
        %v4682 = vadd.f32 %v4680, %v4681
        %v4683 = vsel %vm2270, %v4423, 0.0
        %v4684 = vadd.f32 %v4682, %v4683
        %v4685 = vsel %vm2270, %v4424, 0.0
        %v4686 = vadd.f32 %v4684, %v4685
        %v4687 = vsel %vm2270, %v4425, 0.0
        %v4688 = vadd.f32 %v4686, %v4687
        %v4689 = vsel %vm2270, %v4426, 0.0
        %v4690 = vadd.f32 %v4688, %v4689
        %v4691 = vsel %vm2270, %v4427, 0.0
        %v4692 = vadd.f32 %v4690, %v4691
        %v4693 = vsel %vm2270, %v4428, 0.0
        %v4694 = vadd.f32 %v4692, %v4693
        %v4695 = vsel %vm2270, %v4429, 0.0
        %v4696 = vadd.f32 %v4694, %v4695
        %v4697 = vsel %vm2270, %v4430, 0.0
        %v4698 = vadd.f32 %v4696, %v4697
        %v4699 = vsel %vm2270, %v4431, 0.0
        %v4700 = vadd.f32 %v4698, %v4699
        %v4701 = vrot.slane %v4700, 4
        %v4702 = vadd.f32 %v4700, %v4701
        %v4703 = vrot.slane %v4702, 2
        %v4704 = vadd.f32 %v4702, %v4703
        %v4705 = vrot.slane %v4704, 1
        %v4706 = vadd.f32 %v4704, %v4705
        %v4707 = vsel %vm2270, %v4432, 0.0
        %v4708 = vsel %vm2270, %v4433, 0.0
        %v4709 = vadd.f32 %v4707, %v4708
        %v4710 = vsel %vm2270, %v4434, 0.0
        %v4711 = vadd.f32 %v4709, %v4710
        %v4712 = vsel %vm2270, %v4435, 0.0
        %v4713 = vadd.f32 %v4711, %v4712
        %v4714 = vsel %vm2270, %v4436, 0.0
        %v4715 = vadd.f32 %v4713, %v4714
        %v4716 = vsel %vm2270, %v4437, 0.0
        %v4717 = vadd.f32 %v4715, %v4716
        %v4718 = vsel %vm2270, %v4438, 0.0
        %v4719 = vadd.f32 %v4717, %v4718
        %v4720 = vsel %vm2270, %v4439, 0.0
        %v4721 = vadd.f32 %v4719, %v4720
        %v4722 = vsel %vm2270, %v4440, 0.0
        %v4723 = vadd.f32 %v4721, %v4722
        %v4724 = vsel %vm2270, %v4441, 0.0
        %v4725 = vadd.f32 %v4723, %v4724
        %v4726 = vsel %vm2270, %v4442, 0.0
        %v4727 = vadd.f32 %v4725, %v4726
        %v4728 = vsel %vm2270, %v4443, 0.0
        %v4729 = vadd.f32 %v4727, %v4728
        %v4730 = vsel %vm2270, %v4444, 0.0
        %v4731 = vadd.f32 %v4729, %v4730
        %v4732 = vsel %vm2270, %v4445, 0.0
        %v4733 = vadd.f32 %v4731, %v4732
        %v4734 = vsel %vm2270, %v4446, 0.0
        %v4735 = vadd.f32 %v4733, %v4734
        %v4736 = vsel %vm2270, %v4447, 0.0
        %v4737 = vadd.f32 %v4735, %v4736
        %v4738 = vrot.slane %v4737, 4
        %v4739 = vadd.f32 %v4737, %v4738
        %v4740 = vrot.slane %v4739, 2
        %v4741 = vadd.f32 %v4739, %v4740
        %v4742 = vrot.slane %v4741, 1
        %v4743 = vadd.f32 %v4741, %v4742
        %v4744 = vxor.u32 %v2292, 2147483648
        %v4745 = vmul.f32 %v4744, 1.442695
        %v4746 = vpow.pop %v4745
        %v4747 = vadd.f32 %v4746, 1.0
        %v4748 = vrcp.pop %v4747
        %v4749 = vmul.f32 %v4747, %v4748
        %v4750 = vsub.f32 1.0, %v4749
        %v4751 = vmul.f32 %v4748, %v4750
        %v4752 = vadd.f32 %v4748, %v4751
        %vm4753 = vweird.f32 %v4747
        %vm4754 = vweird.f32 %v4748
        %vm4755 = vmor %vm4753, %vm4754
        %v4756 = vsel %vm4755, %v4748, %v4752
        %v4757 = vand.u32 2147483647, %v4747
        %vm4758 = vcmp.eq.f32.partialorder %v4757, 8.507059e+37
        %v4759 = vand.u32 %v4747, 2147483648
        %v4760 = vor.u32 1.1754944e-38, %v4759
        %v4761 = vsel %vm4758, %v4760, %v4756
        %v4762 = vmul.f32 1.0, %v4761
        %v4771 = vsel %vm3519, %v4521, %v4484
        %v4772 = vsel %vm3521, %v4558, %v4771
        %v4773 = vsel %vm3523, %v4595, %v4772
        %v4774 = vsel %vm3525, %v4632, %v4773
        %v4775 = vsel %vm3527, %v4669, %v4774
        %v4776 = vsel %vm3529, %v4706, %v4775
        %v4777 = vsel %vm3531, %v4743, %v4776
        %4778 = vrot.lane.b32.xlu0 %v4777, 32
        %v4779 = vpop.permute.xlu0 %4778
        %v4781 = vmul.f32 %v4762, %v4779
        %v4782 = vld [vmem:[%s573] sm:$0xff]
        %v4783 = vld [vmem:[%s10] sm:$0xff]
        %v4784 = vld [vmem:[%s10 + $0x8] sm:$0xff]
        %v4785 = vld [vmem:[%s10 + $0x10] sm:$0xff]
        %v4786 = vld [vmem:[%s10 + $0x18] sm:$0xff]
        %v4787 = vld [vmem:[%s11] sm:$0xff]
        %v4788 = vld [vmem:[%s11 + $0x8] sm:$0xff]
        %v4789 = vld [vmem:[%s11 + $0x10] sm:$0xff]
        %v4790 = vld [vmem:[%s11 + $0x18] sm:$0xff]
        %4792 = vrot.lane.b32.xlu0 %v4781, 96
        %v4793 = vpop.permute.xlu0 %4792
        %v4794 = vsel %vm2270, %v4793, 0
        %4796 = vmatpush.msra.mxu0 0.0
        %4797 = vmatpush.msra.mxu0 0.0
        %4798 = vmatpush.msra.mxu0 0.0
        %4799 = vmatpush.msra.mxu0 0.0
        %4800 = vmatpush.msra.mxu0 0.0
        %4801 = vmatpush.msra.mxu0 0.0
        %4802 = vmatpush.msra.mxu0 0.0
        %4803 = vmatpush.msra.mxu0 0.0
        %4804 = vmatpush.msra.mxu0 0.0
        %4805 = vmatpush.msra.mxu0 0.0
        %4806 = vmatpush.msra.mxu0 0.0
        %4807 = vmatpush.msra.mxu0 0.0
        %4808 = vmatpush.msra.mxu0 %v4790
        %4809 = vmatpush.msra.mxu0 %v4789
        %4810 = vmatpush.msra.mxu0 %v4788
        %4811 = vmatpush.msra.mxu0 %v4787
        %4812 = vmatmul.f32.gmra.mxu0 %v4794
        %v4813 = vpop.f32.mrf.mxu0
        %v4814 = vadd.f32 0.0, %v4813
        %4815 = vdwg.mxu0
        %v4817 = vsel %vm2270, %v4782, 0
        %4819 = vmatpush.msra.mxu0 0.0
        %4820 = vmatpush.msra.mxu0 0.0
        %4821 = vmatpush.msra.mxu0 0.0
        %4822 = vmatpush.msra.mxu0 0.0
        %4823 = vmatpush.msra.mxu0 0.0
        %4824 = vmatpush.msra.mxu0 0.0
        %4825 = vmatpush.msra.mxu0 0.0
        %4826 = vmatpush.msra.mxu0 0.0
        %4827 = vmatpush.msra.mxu0 0.0
        %4828 = vmatpush.msra.mxu0 0.0
        %4829 = vmatpush.msra.mxu0 0.0
        %4830 = vmatpush.msra.mxu0 0.0
        %4831 = vmatpush.msra.mxu0 %v4786
        %4832 = vmatpush.msra.mxu0 %v4785
        %4833 = vmatpush.msra.mxu0 %v4784
        %4834 = vmatpush.msra.mxu0 %v4783
        %4835 = vmatmul.f32.gmra.mxu0 %v4817
        %v4836 = vpop.f32.mrf.mxu0
        %v4837 = vadd.f32 %v4814, %v4836
        %4838 = vdwg.mxu0
        %4840 = vrot.lane.b32.xlu0 %v2292, 64
        %v4841 = vpop.permute.xlu0 %4840
        %4842 = vrot.lane.b32.xlu0 %v2312, 64
        %v4843 = vpop.permute.xlu0 %4842
        %vm4844 = vcmask 523264
        %v4845 = vsel %vm4844, %v4841, %v4843
        %v4847 = vadd.f32 %v4837, %v4845
        %v4848 = vxor.u32 %v4847, 2147483648
        %v4849 = vmul.f32 %v4848, 1.442695
        %v4850 = vpow.pop %v4849
        %v4851 = vadd.f32 %v4850, 1.0
        %v4852 = vrcp.pop %v4851
        %v4853 = vmul.f32 %v4851, %v4852
        %v4854 = vsub.f32 1.0, %v4853
        %v4855 = vmul.f32 %v4852, %v4854
        %v4856 = vadd.f32 %v4852, %v4855
        %vm4857 = vweird.f32 %v4851
        %vm4858 = vweird.f32 %v4852
        %vm4859 = vmor %vm4857, %vm4858
        %v4860 = vsel %vm4859, %v4852, %v4856
        %v4861 = vand.u32 2147483647, %v4851
        %vm4862 = vcmp.eq.f32.partialorder %v4861, 8.507059e+37
        %v4863 = vand.u32 %v4851, 2147483648
        %v4864 = vor.u32 1.1754944e-38, %v4863
        %v4865 = vsel %vm4862, %v4864, %v4860
        %v4866 = vmul.f32 1.0, %v4865
        %v4867 = vtanh.pop %v4847
        %4869 = vrot.lane.b32.xlu0 %v1998, 32
        %v4870 = vpop.permute.xlu0 %4869
        %v4872 = vmul.f32 %v4866, %v4870
        %4874 = vrot.lane.b32.xlu0 %v4867, 64
        %v4875 = vpop.permute.xlu0 %4874
        %v4877 = vmul.f32 %v4866, %v4875
        %4879 = vrot.lane.b32.xlu0 %v4877, 32
        %v4880 = vpop.permute.xlu0 %4879
        %v4882 = vadd.f32 %v4872, %v4880
        %v4883 = vtanh.pop %v4882
        %4885 = vrot.lane.b32.xlu0 %v4883, 64
        %v4886 = vpop.permute.xlu0 %4885
        %v4888 = vmul.f32 %v4866, %v4886
        %v4889 = vld [vmem:[%s12] sm:$0xff]
        %v4890 = vld [vmem:[%s12 + $0x8] sm:$0xff]
        %v4891 = vld [vmem:[%s12 + $0x10] sm:$0xff]
        %v4892 = vld [vmem:[%s12 + $0x18] sm:$0xff]
        %v4893 = vld [vmem:[%s13] sm:$0x1]
        %v4895 = vperm.slane %v4893, 0
        %4898 = vrot.lane.b32.xlu0 %v4888, 32
        %v4899 = vpop.permute.xlu0 %4898
        %v4900 = vsel %vm2270, %v4899, 0
        %4902 = vmatpush.msra.mxu0 0.0
        %4903 = vmatpush.msra.mxu0 0.0
        %4904 = vmatpush.msra.mxu0 0.0
        %4905 = vmatpush.msra.mxu0 0.0
        %4906 = vmatpush.msra.mxu0 0.0
        %4907 = vmatpush.msra.mxu0 0.0
        %4908 = vmatpush.msra.mxu0 0.0
        %4909 = vmatpush.msra.mxu0 0.0
        %4910 = vmatpush.msra.mxu0 0.0
        %4911 = vmatpush.msra.mxu0 0.0
        %4912 = vmatpush.msra.mxu0 0.0
        %4913 = vmatpush.msra.mxu0 0.0
        %4914 = vmatpush.msra.mxu0 %v4892
        %4915 = vmatpush.msra.mxu0 %v4891
        %4916 = vmatpush.msra.mxu0 %v4890
        %4917 = vmatpush.msra.mxu0 %v4889
        %4918 = vmatmul.f32.gmra.mxu0 %v4900
        %v4919 = vpop.f32.mrf.mxu0
        %v4920 = vadd.f32 %v4895, %v4919
        %4921 = vdwg.mxu0
        %4923 = vset.pattern.permute.xlu0 0
        %4924 = vperm.xlu0 %4923, %v1999
        %v4925 = vpop.permute.xlu0 %4924
        %v4927 = vmul.f32 %v4925, %v4888
        %v4928 = vsub.f32 1.0, %v1999
        %4930 = vset.pattern.permute.xlu0 0
        %4931 = vperm.xlu0 %4930, %v4928
        %v4932 = vpop.permute.xlu0 %4931
        %v4934 = vmul.f32 %v4932, %v1997
        %4936 = vrot.lane.b32.xlu0 %v4934, 96
        %v4937 = vpop.permute.xlu0 %4936
        %v4939 = vadd.f32 %v4927, %v4937
        %4941 = vrot.lane.b32.xlu0 %v4939, 32
        %v4942 = vpop.permute.xlu0 %4941
        %4944 = vst.msk [vmem:[#allocation2] sm:$0xff] %vm2270, %v4942
        %v4945 = vmul.f32 %v4925, %v4882
        %v4946 = vmul.f32 %v4932, %v1998
        %4948 = vrot.lane.b32.xlu0 %v4946, 32
        %v4949 = vpop.permute.xlu0 %4948
        %v4951 = vadd.f32 %v4945, %v4949
        %4953 = vrot.lane.b32.xlu0 %v4951, 96
        %v4954 = vpop.permute.xlu0 %4953
        %4956 = vst.msk [vmem:[#allocation3] sm:$0xff] %vm2270, %v4954
        %v4957 = vmul.f32 %v4925, %v4920
        %4958 = vst [vmem:[%s552] sm:$0xff] %v4957
        %v4959 = vmul.f32 %v4925, %v3543
        %4960 = vst [vmem:[%s559] sm:$0xff] %v4959
        %s4961 = sand.u32 %s368, 1
        %s4962 = scalar_lea.sflag [#allocation6], %s4961
        %s4963 = sand.u32 %s368, 1
        %s4964 = smul.addr %s4963, 8
        %s4965 = scalar_lea.vmem [#allocation5], %s4964
        %s4966 = sand.u32 %s396, 1
        %s4967 = scalar_lea.sflag [#allocation8], %s4966
        %s4968 = sand.u32 %s396, 1
        %s4969 = smul.addr %s4968, 8
        %s4970 = scalar_lea.vmem [#allocation7], %s4969
        // Predicated region
        $region81: #{tpu_custom_call.1} parent=75 // pred_check
          %p4971 = pneg %p378
        $region82: #{tpu_custom_call.1} parent=75 // pred_check_branch
          %4973 = sbr.rel (%p4971) target = $region84
        $region83: #{tpu_custom_call.1} parent=75 // pred_region
          %4975 = vsyncadd %s4962, 0
          %s4976 = sadd.s32 %s37, %s38
          %s4977 = smul.addr %s4976, 8
          %s4978 = scalar_lea.hbm %s14, %s4977
          %s4980 = sshll.u32 %s4965, 4
          %s4981 = int_to_ptr.vmem [resolvable:$true] %s4980
          %s4982 = sshll.u32 %s4978, 4
          %s4983 = int_to_ptr.hbm [resolvable:$true] %s4982
          %4985 = dma.vmem_to_hbm [thread:$0]  %s4981, 128, %s4983, %s4962
        $region84: #{tpu_custom_call.1} parent=75 // pred_fallthru
          _
        // Predicated region
        $region85: #{tpu_custom_call.1} parent=75 // pred_check
          %p4986 = pneg %p406
        $region86: #{tpu_custom_call.1} parent=75 // pred_check_branch
          %4988 = sbr.rel (%p4986) target = $region88
        $region87: #{tpu_custom_call.1} parent=75 // pred_region
          %4990 = vsyncadd %s4967, 0
          %s4991 = sadd.s32 %s37, %s38
          %s4992 = smul.addr %s4991, 8
          %s4993 = scalar_lea.hbm %s15, %s4992
          %s4995 = sshll.u32 %s4970, 4
          %s4996 = int_to_ptr.vmem [resolvable:$true] %s4995
          %s4997 = sshll.u32 %s4993, 4
          %s4998 = int_to_ptr.hbm [resolvable:$true] %s4997
          %5000 = dma.vmem_to_hbm [thread:$0]  %s4996, 128, %s4998, %s4967
        $region88: #{tpu_custom_call.1} parent=75 // pred_fallthru
          _
      $region76: #{tpu_custom_call.1} parent=5 // pred_fallthru
        _
      %p5001 = scmp.le.s32.totalorder 2, %s28
      // Predicated region
      $region89: #{tpu_custom_call.1} parent=5 // pred_check
        %p5002 = pneg %p5001
      $region90: #{tpu_custom_call.1} parent=5 // pred_check_branch
        %5004 = sbr.rel (%p5002) target = $region92
      $region91: #{tpu_custom_call.1} parent=5 // pred_region
        %s5005 = ssub.s32 %s28, 2
        // Predicated region
        $region93: #{tpu_custom_call.1} parent=91 // pred_check
          %p5006 = pneg %p384
        $region94: #{tpu_custom_call.1} parent=91 // pred_check_branch
          %5008 = sbr.rel (%p5006) target = $region96
        $region95: #{tpu_custom_call.1} parent=91 // pred_region
          %s5009 = sand.u32 %s369, 1
          %s5010 = scalar_lea.sflag [#allocation6], %s5009
          %s5011 = sand.u32 %s369, 1
          %s5012 = smul.addr %s5011, 8
          %s5013 = scalar_lea.vmem [#allocation5], %s5012
          %5015 = dma.done %s5010, 128
        $region96: #{tpu_custom_call.1} parent=91 // pred_fallthru
          _
        // Predicated region
        $region97: #{tpu_custom_call.1} parent=91 // pred_check
          %p5016 = pneg %p412
        $region98: #{tpu_custom_call.1} parent=91 // pred_check_branch
          %5018 = sbr.rel (%p5016) target = $region100
        $region99: #{tpu_custom_call.1} parent=91 // pred_region
          %s5019 = sand.u32 %s397, 1
          %s5020 = scalar_lea.sflag [#allocation8], %s5019
          %s5021 = sand.u32 %s397, 1
          %s5022 = smul.addr %s5021, 8
          %s5023 = scalar_lea.vmem [#allocation7], %s5022
          %5025 = dma.done %s5020, 128
        $region100: #{tpu_custom_call.1} parent=91 // pred_fallthru
          _
      $region92: #{tpu_custom_call.1} parent=5 // pred_fallthru
        _
    $region6: #{tpu_custom_call.1} parent=1 // loop_footer
      %s32 = sadd.s32 1, %s28
    $region7: #{tpu_custom_call.1} parent=1 // loop_footer_branch
      %27 = sbr.rel target = $region3
    $region8: #{tpu_custom_call.1} parent=1 // loop_exit
      _
    %5026 = vsyncpa [#allocation6], 1
    %s5027 = scalar_lea.sflag [#allocation6], 1
    %5028 = vsyncpa %s5027, 1
    %5029 = vsyncpa [#allocation8], 1
    %s5030 = scalar_lea.sflag [#allocation8], 1
    %5031 = vsyncpa %s5030, 1

</llo_original>
